<compile_context>
chip_gen: v5e
topology: v5e:2x2
jax: 0.10.0
libtpu: 0.0.40
codegen_flags: <defaults>
</compile_context>

<pallas_src>
import numpy as np
import jax
import jax.numpy as jnp
from jax import lax
from jax.experimental import pallas as pl
from jax.experimental.pallas import tpu as pltpu

# ----------------------------- model dims ----------------------------------
VOCAB = 50      # synthetic embedding matrix (models/embedding_matrix.npy not read in-script)
EMB = 32
HID = 128       # LSTM hidden size per direction
NCLS = 10
B = 2           # logical batch
T = 8           # sequence length


# ------------------------------ Pallas kernel -------------------------------
def genre_lstm_kernel(x_ref,                 # [T*Bp, E]   bf16 (time-major, batch-padded)
                      wih_ref,               # [E, 8H]     bf16 (fwd cols 0:4H, bwd cols 4H:8H)
                      b_ref,                 # [1, 8H]     f32
                      whh_f_ref,             # [H, 4H]     bf16
                      whh_b_ref,             # [H, 4H]     bf16
                      fcw_ref,               # [2H, NCLS]  f32
                      fcb_ref,               # [1, NCLS]   f32
                      out_ref,               # [Bp, NCLS]  f32
                      pre_sc):               # VMEM scratch: [T*Bp, 8H] f32
    Bp = out_ref.shape[0]
    TB = x_ref.shape[0]
    Tn = TB // Bp
    H = whh_f_ref.shape[0]

    # ---- hoisted input projection: ONE fused matmul + ONE bias pass --------
    pre_sc[...] = (jnp.dot(x_ref[...], wih_ref[...],
                           preferred_element_type=jnp.float32)
                   + b_ref[...])

    def lstm_step(pre_x, h, c, whh_ref):
        # recurrence matmul in bf16, f32 accumulate; gate order is (i, f, o, g)
        pre = pre_x + jnp.dot(h.astype(jnp.bfloat16), whh_ref[...],
                              preferred_element_type=jnp.float32)
        ifo = jax.nn.sigmoid(pre[:, 0:3 * H])          # one contiguous sigmoid slab
        g = jnp.tanh(pre[:, 3 * H:4 * H])
        i_g = ifo[:, 0:H]
        f_g = ifo[:, H:2 * H]
        o_g = ifo[:, 2 * H:3 * H]
        c_new = f_g * c + i_g * g
        h_new = o_g * jnp.tanh(c_new)
        return h_new, c_new

    # ---- fused fwd/bwd recurrence, fully unrolled, state carried in vregs ----
    zeros = jnp.zeros((Bp, H), jnp.float32)
    h_f, c_f, acc_f = zeros, zeros, zeros
    h_b, c_b, acc_b = zeros, zeros, zeros

    for t in range(Tn):                                # static unroll (T=8)
        # Each slice is a whole-sublane-tile aligned block (Bp=8, offsets are
        # static multiples of 8; column offsets are multiples of 128).
        pre_xf = pre_sc[pl.ds(t * Bp, Bp), pl.ds(0, 4 * H)]
        pre_xb = pre_sc[pl.ds((Tn - 1 - t) * Bp, Bp), pl.ds(4 * H, 4 * H)]
        h_f, c_f = lstm_step(pre_xf, h_f, c_f, whh_f_ref)
        h_b, c_b = lstm_step(pre_xb, h_b, c_b, whh_b_ref)
        acc_f = acc_f + h_f
        acc_b = acc_b + h_b

    # ---- mean over time, then FC (split into two dots to avoid a lane concat) ----
    inv_t = 1.0 / Tn
    mean_f = acc_f * inv_t                             # [Bp, H]
    mean_b = acc_b * inv_t                             # [Bp, H]
    out_ref[...] = (jnp.dot(mean_f, fcw_ref[pl.ds(0, H), :],
                            preferred_element_type=jnp.float32)
                    + jnp.dot(mean_b, fcw_ref[pl.ds(H, H), :],
                              preferred_element_type=jnp.float32)
                    + fcb_ref[...])


def _permute_gates_ifgo_to_ifog(w):
    """Reorder the 4H gate columns from PyTorch (i, f, g, o) to (i, f, o, g)."""
    i, f, g, o = jnp.split(w, 4, axis=1)
    return jnp.concatenate([i, f, o, g], axis=1)


def genre_lstm_forward(x_ids, params):
    """x_ids: int32 [B, T] token indices."""
    Bn, Tn = x_ids.shape
    Bp = ((Bn + 7) // 8) * 8                           # pad batch to a full sublane tile

    emb_mat = params["embedding"]                      # [V, E]
    x_emb = jnp.take(emb_mat, x_ids, axis=0)           # [B, T, E]  (gather in plain JAX)
    x_tbe = jnp.transpose(x_emb, (1, 0, 2))            # [T, B, E]  time-major
    x_tbe = jnp.pad(x_tbe, ((0, 0), (0, Bp - Bn), (0, 0)))
    x_tb = x_tbe.reshape(Tn * Bp, EMB).astype(jnp.bfloat16)

    # one-time weight prep: permute gate order, fuse fwd/bwd input projections,
    # cast MXU operands to bf16
    wih_f = _permute_gates_ifgo_to_ifog(params["wih_f"])
    wih_b = _permute_gates_ifgo_to_ifog(params["wih_b"])
    wih = jnp.concatenate([wih_f, wih_b], axis=1).astype(jnp.bfloat16)   # [E, 8H]
    b_f = _permute_gates_ifgo_to_ifog(params["b_f"])
    b_b = _permute_gates_ifgo_to_ifog(params["b_b"])
    bias = jnp.concatenate([b_f, b_b], axis=1)                           # [1, 8H] f32
    whh_f = _permute_gates_ifgo_to_ifog(params["whh_f"]).astype(jnp.bfloat16)
    whh_b = _permute_gates_ifgo_to_ifog(params["whh_b"]).astype(jnp.bfloat16)

    vmem = pl.BlockSpec(memory_space=pltpu.MemorySpace.VMEM)
    out_pad = pl.pallas_call(
        genre_lstm_kernel,
        out_shape=jax.ShapeDtypeStruct((Bp, NCLS), jnp.float32),
        in_specs=[vmem] * 7,
        out_specs=vmem,
        scratch_shapes=[
            pltpu.VMEM((Tn * Bp, 8 * HID), jnp.float32),   # fused fwd||bwd pre-activations
        ],
    )(x_tb, wih, bias, whh_f, whh_b, params["fc_w"], params["fc_b"])
    return out_pad[:Bn]


# ------------------------ pure-JAX reference (f32, PyTorch gate order) ------
def reference_forward(x_ids, params):
    emb_mat = params["embedding"]
    x_emb = jnp.take(emb_mat, x_ids, axis=0)           # [B, T, E]

    def run_dir(x_bte, wih, whh, b):
        def step(carry, x_t):
            h, c = carry
            pre = x_t @ wih + h @ whh + b
            i = jax.nn.sigmoid(pre[:, 0:HID])
            f = jax.nn.sigmoid(pre[:, HID:2 * HID])
            g = jnp.tanh(pre[:, 2 * HID:3 * HID])
            o = jax.nn.sigmoid(pre[:, 3 * HID:4 * HID])
            c_new = f * c + i * g
            h_new = o * jnp.tanh(c_new)
            return (h_new, c_new), h_new
        h0 = jnp.zeros((x_bte.shape[0], HID), jnp.float32)
        c0 = jnp.zeros((x_bte.shape[0], HID), jnp.float32)
        _, hs = lax.scan(step, (h0, c0), jnp.transpose(x_bte, (1, 0, 2)))
        return jnp.transpose(hs, (1, 0, 2))             # [B, T, H]

    h_fwd = run_dir(x_emb, params["wih_f"], params["whh_f"], params["b_f"])
    h_bwd = run_dir(x_emb[:, ::-1, :], params["wih_b"], params["whh_b"], params["b_b"])
    h_bwd = h_bwd[:, ::-1, :]
    out = jnp.concatenate([h_fwd, h_bwd], axis=-1)      # [B, T, 2H]
    pooled = out.mean(axis=1)                           # [B, 2H]
    return pooled @ params["fc_w"] + params["fc_b"]


# ------------------------------ param init ----------------------------------
def init_params(key):
    ks = jax.random.split(key, 12)
    k_lstm = 1.0 / np.sqrt(HID)
    k_fc = 1.0 / np.sqrt(2 * HID)
    u = lambda k, shape, lim: jax.random.uniform(k, shape, jnp.float32, -lim, lim)
    return {
        "embedding": jax.random.normal(ks[0], (VOCAB, EMB), jnp.float32),
        # weights stored transposed: [in_dim, 4H], PyTorch gate order (i, f, g, o)
        "wih_f": u(ks[1], (EMB, 4 * HID), k_lstm),
        "whh_f": u(ks[2], (HID, 4 * HID), k_lstm),
        "b_f":   u(ks[3], (1, 4 * HID), k_lstm) + u(ks[4], (1, 4 * HID), k_lstm),
        "wih_b": u(ks[5], (EMB, 4 * HID), k_lstm),
        "whh_b": u(ks[6], (HID, 4 * HID), k_lstm),
        "b_b":   u(ks[7], (1, 4 * HID), k_lstm) + u(ks[8], (1, 4 * HID), k_lstm),
        "fc_w":  u(ks[9], (2 * HID, NCLS), k_fc),
        "fc_b":  u(ks[10], (1, NCLS), k_fc),
    }


# --------------------------------- main --------------------------------------
if __name__ == "__main__":
    key = jax.random.PRNGKey(0)
    k_params, k_ids = jax.random.split(key)
    params = init_params(k_params)
    # TODO(synk): real models/embedding_matrix.npy cannot be read in-script; a
    # synthetic [VOCAB, EMB] embedding table is used instead.
    x_ids = jax.random.randint(k_ids, (B, T), 0, VOCAB, dtype=jnp.int32)

    out = genre_lstm_forward(x_ids, params)
    out = jax.block_until_ready(out)
    assert out.shape == (B, NCLS), out.shape

    ref = jax.block_until_ready(reference_forward(x_ids, params))
    # Tolerance loosened vs the f32 reference because the kernel feeds the MXU
    # bf16 operands (with f32 accumulation).
    np.testing.assert_allclose(np.asarray(out), np.asarray(ref), rtol=2e-2, atol=2e-2)

    print("KERNEL_OK")
</pallas_src>

<mosaic_0001>
module attributes {stable_mosaic.version = 11 : i64} {
  func.func @genre_lstm_kernel(%arg0: memref<64x32xbf16, #tpu.memory_space<vmem>>, %arg1: memref<32x1024xbf16, #tpu.memory_space<vmem>>, %arg2: memref<1x1024xf32, #tpu.memory_space<vmem>>, %arg3: memref<128x512xbf16, #tpu.memory_space<vmem>>, %arg4: memref<128x512xbf16, #tpu.memory_space<vmem>>, %arg5: memref<256x10xf32, #tpu.memory_space<vmem>>, %arg6: memref<1x10xf32, #tpu.memory_space<vmem>>, %arg7: memref<8x10xf32, #tpu.memory_space<vmem>>, %arg8: memref<64x1024xf32, #tpu.memory_space<vmem>>) attributes {dimension_semantics = [], scalar_prefetch = 0 : i64, scratch_operands = 1 : i64, tpu.core_type = #tpu.core_type<tc>} {
    %c0 = arith.constant 0 : index
    %c0_0 = arith.constant 0 : index
    %0 = vector.load %arg0[%c0, %c0_0] : memref<64x32xbf16, #tpu.memory_space<vmem>>, vector<64x32xbf16>
    %c0_1 = arith.constant 0 : index
    %c0_2 = arith.constant 0 : index
    %1 = vector.load %arg1[%c0_1, %c0_2] : memref<32x1024xbf16, #tpu.memory_space<vmem>>, vector<32x1024xbf16>
    %cst = arith.constant dense<0.000000e+00> : vector<64x1024xf32>
    %2 = tpu.matmul %0, %1, %cst {dimension_numbers = #tpu.dot_dimension_numbers<[1], [0], [0], [1], [0, 0, 1, 1], [], []>} : vector<64x32xbf16>, vector<32x1024xbf16>, vector<64x1024xf32> -> vector<64x1024xf32>
    %c0_3 = arith.constant 0 : index
    %c0_4 = arith.constant 0 : index
    %3 = vector.load %arg2[%c0_3, %c0_4] : memref<1x1024xf32, #tpu.memory_space<vmem>>, vector<1x1024xf32>
    %4 = vector.broadcast %3 : vector<1x1024xf32> to vector<64x1024xf32>
    %5 = arith.addf %2, %4 : vector<64x1024xf32>
    %c0_5 = arith.constant 0 : index
    %c0_6 = arith.constant 0 : index
    %6 = vector.load %arg8[%c0_5, %c0_6] : memref<64x1024xf32, #tpu.memory_space<vmem>>, vector<64x1024xf32>
    tpu.vector_store %arg8[%c0_5, %c0_6], %5 {strides = array<i32>} : memref<64x1024xf32, #tpu.memory_space<vmem>>, vector<64x1024xf32>,
    %cst_7 = arith.constant 0.000000e+00 : f32
    %7 = vector.broadcast %cst_7 : f32 to vector<8x128xf32>
    %c0_8 = arith.constant 0 : index
    %c0_9 = arith.constant 0 : index
    %8 = vector.load %arg8[%c0_8, %c0_9] : memref<64x1024xf32, #tpu.memory_space<vmem>>, vector<8x512xf32>
    %c56 = arith.constant 56 : index
    %c512 = arith.constant 512 : index
    %9 = vector.load %arg8[%c56, %c512] : memref<64x1024xf32, #tpu.memory_space<vmem>>, vector<8x512xf32>
    %10 = arith.truncf %7 : vector<8x128xf32> to vector<8x128xbf16>
    %c0_10 = arith.constant 0 : index
    %c0_11 = arith.constant 0 : index
    %11 = vector.load %arg3[%c0_10, %c0_11] : memref<128x512xbf16, #tpu.memory_space<vmem>>, vector<128x512xbf16>
    %cst_12 = arith.constant dense<0.000000e+00> : vector<8x512xf32>
    %12 = tpu.matmul %10, %11, %cst_12 {dimension_numbers = #tpu.dot_dimension_numbers<[1], [0], [0], [1], [0, 0, 1, 1], [], []>} : vector<8x128xbf16>, vector<128x512xbf16>, vector<8x512xf32> -> vector<8x512xf32>
    %13 = arith.addf %8, %12 : vector<8x512xf32>
    %14 = vector.extract_strided_slice %13 {offsets = [0, 0], sizes = [8, 384], strides = [1, 1]} : vector<8x512xf32> to vector<8x384xf32>
    %15 = arith.negf %14 : vector<8x384xf32>
    %16 = math.exp %15 : vector<8x384xf32>
    %cst_13 = arith.constant 1.000000e+00 : f32
    %17 = vector.broadcast %cst_13 : f32 to vector<8x384xf32>
    %18 = arith.addf %17, %16 : vector<8x384xf32>
    %19 = arith.divf %17, %18 : vector<8x384xf32>
    %20 = vector.extract_strided_slice %13 {offsets = [0, 384], sizes = [8, 128], strides = [1, 1]} : vector<8x512xf32> to vector<8x128xf32>
    %21 = math.tanh %20 : vector<8x128xf32>
    %22 = vector.extract_strided_slice %19 {offsets = [0, 0], sizes = [8, 128], strides = [1, 1]} : vector<8x384xf32> to vector<8x128xf32>
    %23 = vector.extract_strided_slice %19 {offsets = [0, 128], sizes = [8, 128], strides = [1, 1]} : vector<8x384xf32> to vector<8x128xf32>
    %24 = vector.extract_strided_slice %19 {offsets = [0, 256], sizes = [8, 128], strides = [1, 1]} : vector<8x384xf32> to vector<8x128xf32>
    %25 = arith.mulf %23, %7 : vector<8x128xf32>
    %26 = arith.mulf %22, %21 : vector<8x128xf32>
    %27 = arith.addf %25, %26 : vector<8x128xf32>
    %28 = math.tanh %27 : vector<8x128xf32>
    %29 = arith.mulf %24, %28 : vector<8x128xf32>
    %30 = arith.truncf %7 : vector<8x128xf32> to vector<8x128xbf16>
    %c0_14 = arith.constant 0 : index
    %c0_15 = arith.constant 0 : index
    %31 = vector.load %arg4[%c0_14, %c0_15] : memref<128x512xbf16, #tpu.memory_space<vmem>>, vector<128x512xbf16>
    %cst_16 = arith.constant dense<0.000000e+00> : vector<8x512xf32>
    %32 = tpu.matmul %30, %31, %cst_16 {dimension_numbers = #tpu.dot_dimension_numbers<[1], [0], [0], [1], [0, 0, 1, 1], [], []>} : vector<8x128xbf16>, vector<128x512xbf16>, vector<8x512xf32> -> vector<8x512xf32>
    %33 = arith.addf %9, %32 : vector<8x512xf32>
    %34 = vector.extract_strided_slice %33 {offsets = [0, 0], sizes = [8, 384], strides = [1, 1]} : vector<8x512xf32> to vector<8x384xf32>
    %35 = arith.negf %34 : vector<8x384xf32>
    %36 = math.exp %35 : vector<8x384xf32>
    %cst_17 = arith.constant 1.000000e+00 : f32
    %37 = vector.broadcast %cst_17 : f32 to vector<8x384xf32>
    %38 = arith.addf %37, %36 : vector<8x384xf32>
    %39 = arith.divf %37, %38 : vector<8x384xf32>
    %40 = vector.extract_strided_slice %33 {offsets = [0, 384], sizes = [8, 128], strides = [1, 1]} : vector<8x512xf32> to vector<8x128xf32>
    %41 = math.tanh %40 : vector<8x128xf32>
    %42 = vector.extract_strided_slice %39 {offsets = [0, 0], sizes = [8, 128], strides = [1, 1]} : vector<8x384xf32> to vector<8x128xf32>
    %43 = vector.extract_strided_slice %39 {offsets = [0, 128], sizes = [8, 128], strides = [1, 1]} : vector<8x384xf32> to vector<8x128xf32>
    %44 = vector.extract_strided_slice %39 {offsets = [0, 256], sizes = [8, 128], strides = [1, 1]} : vector<8x384xf32> to vector<8x128xf32>
    %45 = arith.mulf %43, %7 : vector<8x128xf32>
    %46 = arith.mulf %42, %41 : vector<8x128xf32>
    %47 = arith.addf %45, %46 : vector<8x128xf32>
    %48 = math.tanh %47 : vector<8x128xf32>
    %49 = arith.mulf %44, %48 : vector<8x128xf32>
    %50 = arith.addf %7, %29 : vector<8x128xf32>
    %51 = arith.addf %7, %49 : vector<8x128xf32>
    %c8 = arith.constant 8 : index
    %c0_18 = arith.constant 0 : index
    %52 = vector.load %arg8[%c8, %c0_18] : memref<64x1024xf32, #tpu.memory_space<vmem>>, vector<8x512xf32>
    %c48 = arith.constant 48 : index
    %c512_19 = arith.constant 512 : index
    %53 = vector.load %arg8[%c48, %c512_19] : memref<64x1024xf32, #tpu.memory_space<vmem>>, vector<8x512xf32>
    %54 = arith.truncf %29 : vector<8x128xf32> to vector<8x128xbf16>
    %c0_20 = arith.constant 0 : index
    %c0_21 = arith.constant 0 : index
    %55 = vector.load %arg3[%c0_20, %c0_21] : memref<128x512xbf16, #tpu.memory_space<vmem>>, vector<128x512xbf16>
    %cst_22 = arith.constant dense<0.000000e+00> : vector<8x512xf32>
    %56 = tpu.matmul %54, %55, %cst_22 {dimension_numbers = #tpu.dot_dimension_numbers<[1], [0], [0], [1], [0, 0, 1, 1], [], []>} : vector<8x128xbf16>, vector<128x512xbf16>, vector<8x512xf32> -> vector<8x512xf32>
    %57 = arith.addf %52, %56 : vector<8x512xf32>
    %58 = vector.extract_strided_slice %57 {offsets = [0, 0], sizes = [8, 384], strides = [1, 1]} : vector<8x512xf32> to vector<8x384xf32>
    %59 = arith.negf %58 : vector<8x384xf32>
    %60 = math.exp %59 : vector<8x384xf32>
    %cst_23 = arith.constant 1.000000e+00 : f32
    %61 = vector.broadcast %cst_23 : f32 to vector<8x384xf32>
    %62 = arith.addf %61, %60 : vector<8x384xf32>
    %63 = arith.divf %61, %62 : vector<8x384xf32>
    %64 = vector.extract_strided_slice %57 {offsets = [0, 384], sizes = [8, 128], strides = [1, 1]} : vector<8x512xf32> to vector<8x128xf32>
    %65 = math.tanh %64 : vector<8x128xf32>
    %66 = vector.extract_strided_slice %63 {offsets = [0, 0], sizes = [8, 128], strides = [1, 1]} : vector<8x384xf32> to vector<8x128xf32>
    %67 = vector.extract_strided_slice %63 {offsets = [0, 128], sizes = [8, 128], strides = [1, 1]} : vector<8x384xf32> to vector<8x128xf32>
    %68 = vector.extract_strided_slice %63 {offsets = [0, 256], sizes = [8, 128], strides = [1, 1]} : vector<8x384xf32> to vector<8x128xf32>
    %69 = arith.mulf %67, %27 : vector<8x128xf32>
    %70 = arith.mulf %66, %65 : vector<8x128xf32>
    %71 = arith.addf %69, %70 : vector<8x128xf32>
    %72 = math.tanh %71 : vector<8x128xf32>
    %73 = arith.mulf %68, %72 : vector<8x128xf32>
    %74 = arith.truncf %49 : vector<8x128xf32> to vector<8x128xbf16>
    %c0_24 = arith.constant 0 : index
    %c0_25 = arith.constant 0 : index
    %75 = vector.load %arg4[%c0_24, %c0_25] : memref<128x512xbf16, #tpu.memory_space<vmem>>, vector<128x512xbf16>
    %cst_26 = arith.constant dense<0.000000e+00> : vector<8x512xf32>
    %76 = tpu.matmul %74, %75, %cst_26 {dimension_numbers = #tpu.dot_dimension_numbers<[1], [0], [0], [1], [0, 0, 1, 1], [], []>} : vector<8x128xbf16>, vector<128x512xbf16>, vector<8x512xf32> -> vector<8x512xf32>
    %77 = arith.addf %53, %76 : vector<8x512xf32>
    %78 = vector.extract_strided_slice %77 {offsets = [0, 0], sizes = [8, 384], strides = [1, 1]} : vector<8x512xf32> to vector<8x384xf32>
    %79 = arith.negf %78 : vector<8x384xf32>
    %80 = math.exp %79 : vector<8x384xf32>
    %cst_27 = arith.constant 1.000000e+00 : f32
    %81 = vector.broadcast %cst_27 : f32 to vector<8x384xf32>
    %82 = arith.addf %81, %80 : vector<8x384xf32>
    %83 = arith.divf %81, %82 : vector<8x384xf32>
    %84 = vector.extract_strided_slice %77 {offsets = [0, 384], sizes = [8, 128], strides = [1, 1]} : vector<8x512xf32> to vector<8x128xf32>
    %85 = math.tanh %84 : vector<8x128xf32>
    %86 = vector.extract_strided_slice %83 {offsets = [0, 0], sizes = [8, 128], strides = [1, 1]} : vector<8x384xf32> to vector<8x128xf32>
    %87 = vector.extract_strided_slice %83 {offsets = [0, 128], sizes = [8, 128], strides = [1, 1]} : vector<8x384xf32> to vector<8x128xf32>
    %88 = vector.extract_strided_slice %83 {offsets = [0, 256], sizes = [8, 128], strides = [1, 1]} : vector<8x384xf32> to vector<8x128xf32>
    %89 = arith.mulf %87, %47 : vector<8x128xf32>
    %90 = arith.mulf %86, %85 : vector<8x128xf32>
    %91 = arith.addf %89, %90 : vector<8x128xf32>
    %92 = math.tanh %91 : vector<8x128xf32>
    %93 = arith.mulf %88, %92 : vector<8x128xf32>
    %94 = arith.addf %50, %73 : vector<8x128xf32>
    %95 = arith.addf %51, %93 : vector<8x128xf32>
    %c16 = arith.constant 16 : index
    %c0_28 = arith.constant 0 : index
    %96 = vector.load %arg8[%c16, %c0_28] : memref<64x1024xf32, #tpu.memory_space<vmem>>, vector<8x512xf32>
    %c40 = arith.constant 40 : index
    %c512_29 = arith.constant 512 : index
    %97 = vector.load %arg8[%c40, %c512_29] : memref<64x1024xf32, #tpu.memory_space<vmem>>, vector<8x512xf32>
    %98 = arith.truncf %73 : vector<8x128xf32> to vector<8x128xbf16>
    %c0_30 = arith.constant 0 : index
    %c0_31 = arith.constant 0 : index
    %99 = vector.load %arg3[%c0_30, %c0_31] : memref<128x512xbf16, #tpu.memory_space<vmem>>, vector<128x512xbf16>
    %cst_32 = arith.constant dense<0.000000e+00> : vector<8x512xf32>
    %100 = tpu.matmul %98, %99, %cst_32 {dimension_numbers = #tpu.dot_dimension_numbers<[1], [0], [0], [1], [0, 0, 1, 1], [], []>} : vector<8x128xbf16>, vector<128x512xbf16>, vector<8x512xf32> -> vector<8x512xf32>
    %101 = arith.addf %96, %100 : vector<8x512xf32>
    %102 = vector.extract_strided_slice %101 {offsets = [0, 0], sizes = [8, 384], strides = [1, 1]} : vector<8x512xf32> to vector<8x384xf32>
    %103 = arith.negf %102 : vector<8x384xf32>
    %104 = math.exp %103 : vector<8x384xf32>
    %cst_33 = arith.constant 1.000000e+00 : f32
    %105 = vector.broadcast %cst_33 : f32 to vector<8x384xf32>
    %106 = arith.addf %105, %104 : vector<8x384xf32>
    %107 = arith.divf %105, %106 : vector<8x384xf32>
    %108 = vector.extract_strided_slice %101 {offsets = [0, 384], sizes = [8, 128], strides = [1, 1]} : vector<8x512xf32> to vector<8x128xf32>
    %109 = math.tanh %108 : vector<8x128xf32>
    %110 = vector.extract_strided_slice %107 {offsets = [0, 0], sizes = [8, 128], strides = [1, 1]} : vector<8x384xf32> to vector<8x128xf32>
    %111 = vector.extract_strided_slice %107 {offsets = [0, 128], sizes = [8, 128], strides = [1, 1]} : vector<8x384xf32> to vector<8x128xf32>
    %112 = vector.extract_strided_slice %107 {offsets = [0, 256], sizes = [8, 128], strides = [1, 1]} : vector<8x384xf32> to vector<8x128xf32>
    %113 = arith.mulf %111, %71 : vector<8x128xf32>
    %114 = arith.mulf %110, %109 : vector<8x128xf32>
    %115 = arith.addf %113, %114 : vector<8x128xf32>
    %116 = math.tanh %115 : vector<8x128xf32>
    %117 = arith.mulf %112, %116 : vector<8x128xf32>
    %118 = arith.truncf %93 : vector<8x128xf32> to vector<8x128xbf16>
    %c0_34 = arith.constant 0 : index
    %c0_35 = arith.constant 0 : index
    %119 = vector.load %arg4[%c0_34, %c0_35] : memref<128x512xbf16, #tpu.memory_space<vmem>>, vector<128x512xbf16>
    %cst_36 = arith.constant dense<0.000000e+00> : vector<8x512xf32>
    %120 = tpu.matmul %118, %119, %cst_36 {dimension_numbers = #tpu.dot_dimension_numbers<[1], [0], [0], [1], [0, 0, 1, 1], [], []>} : vector<8x128xbf16>, vector<128x512xbf16>, vector<8x512xf32> -> vector<8x512xf32>
    %121 = arith.addf %97, %120 : vector<8x512xf32>
    %122 = vector.extract_strided_slice %121 {offsets = [0, 0], sizes = [8, 384], strides = [1, 1]} : vector<8x512xf32> to vector<8x384xf32>
    %123 = arith.negf %122 : vector<8x384xf32>
    %124 = math.exp %123 : vector<8x384xf32>
    %cst_37 = arith.constant 1.000000e+00 : f32
    %125 = vector.broadcast %cst_37 : f32 to vector<8x384xf32>
    %126 = arith.addf %125, %124 : vector<8x384xf32>
    %127 = arith.divf %125, %126 : vector<8x384xf32>
    %128 = vector.extract_strided_slice %121 {offsets = [0, 384], sizes = [8, 128], strides = [1, 1]} : vector<8x512xf32> to vector<8x128xf32>
    %129 = math.tanh %128 : vector<8x128xf32>
    %130 = vector.extract_strided_slice %127 {offsets = [0, 0], sizes = [8, 128], strides = [1, 1]} : vector<8x384xf32> to vector<8x128xf32>
    %131 = vector.extract_strided_slice %127 {offsets = [0, 128], sizes = [8, 128], strides = [1, 1]} : vector<8x384xf32> to vector<8x128xf32>
    %132 = vector.extract_strided_slice %127 {offsets = [0, 256], sizes = [8, 128], strides = [1, 1]} : vector<8x384xf32> to vector<8x128xf32>
    %133 = arith.mulf %131, %91 : vector<8x128xf32>
    %134 = arith.mulf %130, %129 : vector<8x128xf32>
    %135 = arith.addf %133, %134 : vector<8x128xf32>
    %136 = math.tanh %135 : vector<8x128xf32>
    %137 = arith.mulf %132, %136 : vector<8x128xf32>
    %138 = arith.addf %94, %117 : vector<8x128xf32>
    %139 = arith.addf %95, %137 : vector<8x128xf32>
    %c24 = arith.constant 24 : index
    %c0_38 = arith.constant 0 : index
    %140 = vector.load %arg8[%c24, %c0_38] : memref<64x1024xf32, #tpu.memory_space<vmem>>, vector<8x512xf32>
    %c32 = arith.constant 32 : index
    %c512_39 = arith.constant 512 : index
    %141 = vector.load %arg8[%c32, %c512_39] : memref<64x1024xf32, #tpu.memory_space<vmem>>, vector<8x512xf32>
    %142 = arith.truncf %117 : vector<8x128xf32> to vector<8x128xbf16>
    %c0_40 = arith.constant 0 : index
    %c0_41 = arith.constant 0 : index
    %143 = vector.load %arg3[%c0_40, %c0_41] : memref<128x512xbf16, #tpu.memory_space<vmem>>, vector<128x512xbf16>
    %cst_42 = arith.constant dense<0.000000e+00> : vector<8x512xf32>
    %144 = tpu.matmul %142, %143, %cst_42 {dimension_numbers = #tpu.dot_dimension_numbers<[1], [0], [0], [1], [0, 0, 1, 1], [], []>} : vector<8x128xbf16>, vector<128x512xbf16>, vector<8x512xf32> -> vector<8x512xf32>
    %145 = arith.addf %140, %144 : vector<8x512xf32>
    %146 = vector.extract_strided_slice %145 {offsets = [0, 0], sizes = [8, 384], strides = [1, 1]} : vector<8x512xf32> to vector<8x384xf32>
    %147 = arith.negf %146 : vector<8x384xf32>
    %148 = math.exp %147 : vector<8x384xf32>
    %cst_43 = arith.constant 1.000000e+00 : f32
    %149 = vector.broadcast %cst_43 : f32 to vector<8x384xf32>
    %150 = arith.addf %149, %148 : vector<8x384xf32>
    %151 = arith.divf %149, %150 : vector<8x384xf32>
    %152 = vector.extract_strided_slice %145 {offsets = [0, 384], sizes = [8, 128], strides = [1, 1]} : vector<8x512xf32> to vector<8x128xf32>
    %153 = math.tanh %152 : vector<8x128xf32>
    %154 = vector.extract_strided_slice %151 {offsets = [0, 0], sizes = [8, 128], strides = [1, 1]} : vector<8x384xf32> to vector<8x128xf32>
    %155 = vector.extract_strided_slice %151 {offsets = [0, 128], sizes = [8, 128], strides = [1, 1]} : vector<8x384xf32> to vector<8x128xf32>
    %156 = vector.extract_strided_slice %151 {offsets = [0, 256], sizes = [8, 128], strides = [1, 1]} : vector<8x384xf32> to vector<8x128xf32>
    %157 = arith.mulf %155, %115 : vector<8x128xf32>
    %158 = arith.mulf %154, %153 : vector<8x128xf32>
    %159 = arith.addf %157, %158 : vector<8x128xf32>
    %160 = math.tanh %159 : vector<8x128xf32>
    %161 = arith.mulf %156, %160 : vector<8x128xf32>
    %162 = arith.truncf %137 : vector<8x128xf32> to vector<8x128xbf16>
    %c0_44 = arith.constant 0 : index
    %c0_45 = arith.constant 0 : index
    %163 = vector.load %arg4[%c0_44, %c0_45] : memref<128x512xbf16, #tpu.memory_space<vmem>>, vector<128x512xbf16>
    %cst_46 = arith.constant dense<0.000000e+00> : vector<8x512xf32>
    %164 = tpu.matmul %162, %163, %cst_46 {dimension_numbers = #tpu.dot_dimension_numbers<[1], [0], [0], [1], [0, 0, 1, 1], [], []>} : vector<8x128xbf16>, vector<128x512xbf16>, vector<8x512xf32> -> vector<8x512xf32>
    %165 = arith.addf %141, %164 : vector<8x512xf32>
    %166 = vector.extract_strided_slice %165 {offsets = [0, 0], sizes = [8, 384], strides = [1, 1]} : vector<8x512xf32> to vector<8x384xf32>
    %167 = arith.negf %166 : vector<8x384xf32>
    %168 = math.exp %167 : vector<8x384xf32>
    %cst_47 = arith.constant 1.000000e+00 : f32
    %169 = vector.broadcast %cst_47 : f32 to vector<8x384xf32>
    %170 = arith.addf %169, %168 : vector<8x384xf32>
    %171 = arith.divf %169, %170 : vector<8x384xf32>
    %172 = vector.extract_strided_slice %165 {offsets = [0, 384], sizes = [8, 128], strides = [1, 1]} : vector<8x512xf32> to vector<8x128xf32>
    %173 = math.tanh %172 : vector<8x128xf32>
    %174 = vector.extract_strided_slice %171 {offsets = [0, 0], sizes = [8, 128], strides = [1, 1]} : vector<8x384xf32> to vector<8x128xf32>
    %175 = vector.extract_strided_slice %171 {offsets = [0, 128], sizes = [8, 128], strides = [1, 1]} : vector<8x384xf32> to vector<8x128xf32>
    %176 = vector.extract_strided_slice %171 {offsets = [0, 256], sizes = [8, 128], strides = [1, 1]} : vector<8x384xf32> to vector<8x128xf32>
    %177 = arith.mulf %175, %135 : vector<8x128xf32>
    %178 = arith.mulf %174, %173 : vector<8x128xf32>
    %179 = arith.addf %177, %178 : vector<8x128xf32>
    %180 = math.tanh %179 : vector<8x128xf32>
    %181 = arith.mulf %176, %180 : vector<8x128xf32>
    %182 = arith.addf %138, %161 : vector<8x128xf32>
    %183 = arith.addf %139, %181 : vector<8x128xf32>
    %c32_48 = arith.constant 32 : index
    %c0_49 = arith.constant 0 : index
    %184 = vector.load %arg8[%c32_48, %c0_49] : memref<64x1024xf32, #tpu.memory_space<vmem>>, vector<8x512xf32>
    %c24_50 = arith.constant 24 : index
    %c512_51 = arith.constant 512 : index
    %185 = vector.load %arg8[%c24_50, %c512_51] : memref<64x1024xf32, #tpu.memory_space<vmem>>, vector<8x512xf32>
    %186 = arith.truncf %161 : vector<8x128xf32> to vector<8x128xbf16>
    %c0_52 = arith.constant 0 : index
    %c0_53 = arith.constant 0 : index
    %187 = vector.load %arg3[%c0_52, %c0_53] : memref<128x512xbf16, #tpu.memory_space<vmem>>, vector<128x512xbf16>
    %cst_54 = arith.constant dense<0.000000e+00> : vector<8x512xf32>
    %188 = tpu.matmul %186, %187, %cst_54 {dimension_numbers = #tpu.dot_dimension_numbers<[1], [0], [0], [1], [0, 0, 1, 1], [], []>} : vector<8x128xbf16>, vector<128x512xbf16>, vector<8x512xf32> -> vector<8x512xf32>
    %189 = arith.addf %184, %188 : vector<8x512xf32>
    %190 = vector.extract_strided_slice %189 {offsets = [0, 0], sizes = [8, 384], strides = [1, 1]} : vector<8x512xf32> to vector<8x384xf32>
    %191 = arith.negf %190 : vector<8x384xf32>
    %192 = math.exp %191 : vector<8x384xf32>
    %cst_55 = arith.constant 1.000000e+00 : f32
    %193 = vector.broadcast %cst_55 : f32 to vector<8x384xf32>
    %194 = arith.addf %193, %192 : vector<8x384xf32>
    %195 = arith.divf %193, %194 : vector<8x384xf32>
    %196 = vector.extract_strided_slice %189 {offsets = [0, 384], sizes = [8, 128], strides = [1, 1]} : vector<8x512xf32> to vector<8x128xf32>
    %197 = math.tanh %196 : vector<8x128xf32>
    %198 = vector.extract_strided_slice %195 {offsets = [0, 0], sizes = [8, 128], strides = [1, 1]} : vector<8x384xf32> to vector<8x128xf32>
    %199 = vector.extract_strided_slice %195 {offsets = [0, 128], sizes = [8, 128], strides = [1, 1]} : vector<8x384xf32> to vector<8x128xf32>
    %200 = vector.extract_strided_slice %195 {offsets = [0, 256], sizes = [8, 128], strides = [1, 1]} : vector<8x384xf32> to vector<8x128xf32>
    %201 = arith.mulf %199, %159 : vector<8x128xf32>
    %202 = arith.mulf %198, %197 : vector<8x128xf32>
    %203 = arith.addf %201, %202 : vector<8x128xf32>
    %204 = math.tanh %203 : vector<8x128xf32>
    %205 = arith.mulf %200, %204 : vector<8x128xf32>
    %206 = arith.truncf %181 : vector<8x128xf32> to vector<8x128xbf16>
    %c0_56 = arith.constant 0 : index
    %c0_57 = arith.constant 0 : index
    %207 = vector.load %arg4[%c0_56, %c0_57] : memref<128x512xbf16, #tpu.memory_space<vmem>>, vector<128x512xbf16>
    %cst_58 = arith.constant dense<0.000000e+00> : vector<8x512xf32>
    %208 = tpu.matmul %206, %207, %cst_58 {dimension_numbers = #tpu.dot_dimension_numbers<[1], [0], [0], [1], [0, 0, 1, 1], [], []>} : vector<8x128xbf16>, vector<128x512xbf16>, vector<8x512xf32> -> vector<8x512xf32>
    %209 = arith.addf %185, %208 : vector<8x512xf32>
    %210 = vector.extract_strided_slice %209 {offsets = [0, 0], sizes = [8, 384], strides = [1, 1]} : vector<8x512xf32> to vector<8x384xf32>
    %211 = arith.negf %210 : vector<8x384xf32>
    %212 = math.exp %211 : vector<8x384xf32>
    %cst_59 = arith.constant 1.000000e+00 : f32
    %213 = vector.broadcast %cst_59 : f32 to vector<8x384xf32>
    %214 = arith.addf %213, %212 : vector<8x384xf32>
    %215 = arith.divf %213, %214 : vector<8x384xf32>
    %216 = vector.extract_strided_slice %209 {offsets = [0, 384], sizes = [8, 128], strides = [1, 1]} : vector<8x512xf32> to vector<8x128xf32>
    %217 = math.tanh %216 : vector<8x128xf32>
    %218 = vector.extract_strided_slice %215 {offsets = [0, 0], sizes = [8, 128], strides = [1, 1]} : vector<8x384xf32> to vector<8x128xf32>
    %219 = vector.extract_strided_slice %215 {offsets = [0, 128], sizes = [8, 128], strides = [1, 1]} : vector<8x384xf32> to vector<8x128xf32>
    %220 = vector.extract_strided_slice %215 {offsets = [0, 256], sizes = [8, 128], strides = [1, 1]} : vector<8x384xf32> to vector<8x128xf32>
    %221 = arith.mulf %219, %179 : vector<8x128xf32>
    %222 = arith.mulf %218, %217 : vector<8x128xf32>
    %223 = arith.addf %221, %222 : vector<8x128xf32>
    %224 = math.tanh %223 : vector<8x128xf32>
    %225 = arith.mulf %220, %224 : vector<8x128xf32>
    %226 = arith.addf %182, %205 : vector<8x128xf32>
    %227 = arith.addf %183, %225 : vector<8x128xf32>
    %c40_60 = arith.constant 40 : index
    %c0_61 = arith.constant 0 : index
    %228 = vector.load %arg8[%c40_60, %c0_61] : memref<64x1024xf32, #tpu.memory_space<vmem>>, vector<8x512xf32>
    %c16_62 = arith.constant 16 : index
    %c512_63 = arith.constant 512 : index
    %229 = vector.load %arg8[%c16_62, %c512_63] : memref<64x1024xf32, #tpu.memory_space<vmem>>, vector<8x512xf32>
    %230 = arith.truncf %205 : vector<8x128xf32> to vector<8x128xbf16>
    %c0_64 = arith.constant 0 : index
    %c0_65 = arith.constant 0 : index
    %231 = vector.load %arg3[%c0_64, %c0_65] : memref<128x512xbf16, #tpu.memory_space<vmem>>, vector<128x512xbf16>
    %cst_66 = arith.constant dense<0.000000e+00> : vector<8x512xf32>
    %232 = tpu.matmul %230, %231, %cst_66 {dimension_numbers = #tpu.dot_dimension_numbers<[1], [0], [0], [1], [0, 0, 1, 1], [], []>} : vector<8x128xbf16>, vector<128x512xbf16>, vector<8x512xf32> -> vector<8x512xf32>
    %233 = arith.addf %228, %232 : vector<8x512xf32>
    %234 = vector.extract_strided_slice %233 {offsets = [0, 0], sizes = [8, 384], strides = [1, 1]} : vector<8x512xf32> to vector<8x384xf32>
    %235 = arith.negf %234 : vector<8x384xf32>
    %236 = math.exp %235 : vector<8x384xf32>
    %cst_67 = arith.constant 1.000000e+00 : f32
    %237 = vector.broadcast %cst_67 : f32 to vector<8x384xf32>
    %238 = arith.addf %237, %236 : vector<8x384xf32>
    %239 = arith.divf %237, %238 : vector<8x384xf32>
    %240 = vector.extract_strided_slice %233 {offsets = [0, 384], sizes = [8, 128], strides = [1, 1]} : vector<8x512xf32> to vector<8x128xf32>
    %241 = math.tanh %240 : vector<8x128xf32>
    %242 = vector.extract_strided_slice %239 {offsets = [0, 0], sizes = [8, 128], strides = [1, 1]} : vector<8x384xf32> to vector<8x128xf32>
    %243 = vector.extract_strided_slice %239 {offsets = [0, 128], sizes = [8, 128], strides = [1, 1]} : vector<8x384xf32> to vector<8x128xf32>
    %244 = vector.extract_strided_slice %239 {offsets = [0, 256], sizes = [8, 128], strides = [1, 1]} : vector<8x384xf32> to vector<8x128xf32>
    %245 = arith.mulf %243, %203 : vector<8x128xf32>
    %246 = arith.mulf %242, %241 : vector<8x128xf32>
    %247 = arith.addf %245, %246 : vector<8x128xf32>
    %248 = math.tanh %247 : vector<8x128xf32>
    %249 = arith.mulf %244, %248 : vector<8x128xf32>
    %250 = arith.truncf %225 : vector<8x128xf32> to vector<8x128xbf16>
    %c0_68 = arith.constant 0 : index
    %c0_69 = arith.constant 0 : index
    %251 = vector.load %arg4[%c0_68, %c0_69] : memref<128x512xbf16, #tpu.memory_space<vmem>>, vector<128x512xbf16>
    %cst_70 = arith.constant dense<0.000000e+00> : vector<8x512xf32>
    %252 = tpu.matmul %250, %251, %cst_70 {dimension_numbers = #tpu.dot_dimension_numbers<[1], [0], [0], [1], [0, 0, 1, 1], [], []>} : vector<8x128xbf16>, vector<128x512xbf16>, vector<8x512xf32> -> vector<8x512xf32>
    %253 = arith.addf %229, %252 : vector<8x512xf32>
    %254 = vector.extract_strided_slice %253 {offsets = [0, 0], sizes = [8, 384], strides = [1, 1]} : vector<8x512xf32> to vector<8x384xf32>
    %255 = arith.negf %254 : vector<8x384xf32>
    %256 = math.exp %255 : vector<8x384xf32>
    %cst_71 = arith.constant 1.000000e+00 : f32
    %257 = vector.broadcast %cst_71 : f32 to vector<8x384xf32>
    %258 = arith.addf %257, %256 : vector<8x384xf32>
    %259 = arith.divf %257, %258 : vector<8x384xf32>
    %260 = vector.extract_strided_slice %253 {offsets = [0, 384], sizes = [8, 128], strides = [1, 1]} : vector<8x512xf32> to vector<8x128xf32>
    %261 = math.tanh %260 : vector<8x128xf32>
    %262 = vector.extract_strided_slice %259 {offsets = [0, 0], sizes = [8, 128], strides = [1, 1]} : vector<8x384xf32> to vector<8x128xf32>
    %263 = vector.extract_strided_slice %259 {offsets = [0, 128], sizes = [8, 128], strides = [1, 1]} : vector<8x384xf32> to vector<8x128xf32>
    %264 = vector.extract_strided_slice %259 {offsets = [0, 256], sizes = [8, 128], strides = [1, 1]} : vector<8x384xf32> to vector<8x128xf32>
    %265 = arith.mulf %263, %223 : vector<8x128xf32>
    %266 = arith.mulf %262, %261 : vector<8x128xf32>
    %267 = arith.addf %265, %266 : vector<8x128xf32>
    %268 = math.tanh %267 : vector<8x128xf32>
    %269 = arith.mulf %264, %268 : vector<8x128xf32>
    %270 = arith.addf %226, %249 : vector<8x128xf32>
    %271 = arith.addf %227, %269 : vector<8x128xf32>
    %c48_72 = arith.constant 48 : index
    %c0_73 = arith.constant 0 : index
    %272 = vector.load %arg8[%c48_72, %c0_73] : memref<64x1024xf32, #tpu.memory_space<vmem>>, vector<8x512xf32>
    %c8_74 = arith.constant 8 : index
    %c512_75 = arith.constant 512 : index
    %273 = vector.load %arg8[%c8_74, %c512_75] : memref<64x1024xf32, #tpu.memory_space<vmem>>, vector<8x512xf32>
    %274 = arith.truncf %249 : vector<8x128xf32> to vector<8x128xbf16>
    %c0_76 = arith.constant 0 : index
    %c0_77 = arith.constant 0 : index
    %275 = vector.load %arg3[%c0_76, %c0_77] : memref<128x512xbf16, #tpu.memory_space<vmem>>, vector<128x512xbf16>
    %cst_78 = arith.constant dense<0.000000e+00> : vector<8x512xf32>
    %276 = tpu.matmul %274, %275, %cst_78 {dimension_numbers = #tpu.dot_dimension_numbers<[1], [0], [0], [1], [0, 0, 1, 1], [], []>} : vector<8x128xbf16>, vector<128x512xbf16>, vector<8x512xf32> -> vector<8x512xf32>
    %277 = arith.addf %272, %276 : vector<8x512xf32>
    %278 = vector.extract_strided_slice %277 {offsets = [0, 0], sizes = [8, 384], strides = [1, 1]} : vector<8x512xf32> to vector<8x384xf32>
    %279 = arith.negf %278 : vector<8x384xf32>
    %280 = math.exp %279 : vector<8x384xf32>
    %cst_79 = arith.constant 1.000000e+00 : f32
    %281 = vector.broadcast %cst_79 : f32 to vector<8x384xf32>
    %282 = arith.addf %281, %280 : vector<8x384xf32>
    %283 = arith.divf %281, %282 : vector<8x384xf32>
    %284 = vector.extract_strided_slice %277 {offsets = [0, 384], sizes = [8, 128], strides = [1, 1]} : vector<8x512xf32> to vector<8x128xf32>
    %285 = math.tanh %284 : vector<8x128xf32>
    %286 = vector.extract_strided_slice %283 {offsets = [0, 0], sizes = [8, 128], strides = [1, 1]} : vector<8x384xf32> to vector<8x128xf32>
    %287 = vector.extract_strided_slice %283 {offsets = [0, 128], sizes = [8, 128], strides = [1, 1]} : vector<8x384xf32> to vector<8x128xf32>
    %288 = vector.extract_strided_slice %283 {offsets = [0, 256], sizes = [8, 128], strides = [1, 1]} : vector<8x384xf32> to vector<8x128xf32>
    %289 = arith.mulf %287, %247 : vector<8x128xf32>
    %290 = arith.mulf %286, %285 : vector<8x128xf32>
    %291 = arith.addf %289, %290 : vector<8x128xf32>
    %292 = math.tanh %291 : vector<8x128xf32>
    %293 = arith.mulf %288, %292 : vector<8x128xf32>
    %294 = arith.truncf %269 : vector<8x128xf32> to vector<8x128xbf16>
    %c0_80 = arith.constant 0 : index
    %c0_81 = arith.constant 0 : index
    %295 = vector.load %arg4[%c0_80, %c0_81] : memref<128x512xbf16, #tpu.memory_space<vmem>>, vector<128x512xbf16>
    %cst_82 = arith.constant dense<0.000000e+00> : vector<8x512xf32>
    %296 = tpu.matmul %294, %295, %cst_82 {dimension_numbers = #tpu.dot_dimension_numbers<[1], [0], [0], [1], [0, 0, 1, 1], [], []>} : vector<8x128xbf16>, vector<128x512xbf16>, vector<8x512xf32> -> vector<8x512xf32>
    %297 = arith.addf %273, %296 : vector<8x512xf32>
    %298 = vector.extract_strided_slice %297 {offsets = [0, 0], sizes = [8, 384], strides = [1, 1]} : vector<8x512xf32> to vector<8x384xf32>
    %299 = arith.negf %298 : vector<8x384xf32>
    %300 = math.exp %299 : vector<8x384xf32>
    %cst_83 = arith.constant 1.000000e+00 : f32
    %301 = vector.broadcast %cst_83 : f32 to vector<8x384xf32>
    %302 = arith.addf %301, %300 : vector<8x384xf32>
    %303 = arith.divf %301, %302 : vector<8x384xf32>
    %304 = vector.extract_strided_slice %297 {offsets = [0, 384], sizes = [8, 128], strides = [1, 1]} : vector<8x512xf32> to vector<8x128xf32>
    %305 = math.tanh %304 : vector<8x128xf32>
    %306 = vector.extract_strided_slice %303 {offsets = [0, 0], sizes = [8, 128], strides = [1, 1]} : vector<8x384xf32> to vector<8x128xf32>
    %307 = vector.extract_strided_slice %303 {offsets = [0, 128], sizes = [8, 128], strides = [1, 1]} : vector<8x384xf32> to vector<8x128xf32>
    %308 = vector.extract_strided_slice %303 {offsets = [0, 256], sizes = [8, 128], strides = [1, 1]} : vector<8x384xf32> to vector<8x128xf32>
    %309 = arith.mulf %307, %267 : vector<8x128xf32>
    %310 = arith.mulf %306, %305 : vector<8x128xf32>
    %311 = arith.addf %309, %310 : vector<8x128xf32>
    %312 = math.tanh %311 : vector<8x128xf32>
    %313 = arith.mulf %308, %312 : vector<8x128xf32>
    %314 = arith.addf %270, %293 : vector<8x128xf32>
    %315 = arith.addf %271, %313 : vector<8x128xf32>
    %c56_84 = arith.constant 56 : index
    %c0_85 = arith.constant 0 : index
    %316 = vector.load %arg8[%c56_84, %c0_85] : memref<64x1024xf32, #tpu.memory_space<vmem>>, vector<8x512xf32>
    %c0_86 = arith.constant 0 : index
    %c512_87 = arith.constant 512 : index
    %317 = vector.load %arg8[%c0_86, %c512_87] : memref<64x1024xf32, #tpu.memory_space<vmem>>, vector<8x512xf32>
    %318 = arith.truncf %293 : vector<8x128xf32> to vector<8x128xbf16>
    %c0_88 = arith.constant 0 : index
    %c0_89 = arith.constant 0 : index
    %319 = vector.load %arg3[%c0_88, %c0_89] : memref<128x512xbf16, #tpu.memory_space<vmem>>, vector<128x512xbf16>
    %cst_90 = arith.constant dense<0.000000e+00> : vector<8x512xf32>
    %320 = tpu.matmul %318, %319, %cst_90 {dimension_numbers = #tpu.dot_dimension_numbers<[1], [0], [0], [1], [0, 0, 1, 1], [], []>} : vector<8x128xbf16>, vector<128x512xbf16>, vector<8x512xf32> -> vector<8x512xf32>
    %321 = arith.addf %316, %320 : vector<8x512xf32>
    %322 = vector.extract_strided_slice %321 {offsets = [0, 0], sizes = [8, 384], strides = [1, 1]} : vector<8x512xf32> to vector<8x384xf32>
    %323 = arith.negf %322 : vector<8x384xf32>
    %324 = math.exp %323 : vector<8x384xf32>
    %cst_91 = arith.constant 1.000000e+00 : f32
    %325 = vector.broadcast %cst_91 : f32 to vector<8x384xf32>
    %326 = arith.addf %325, %324 : vector<8x384xf32>
    %327 = arith.divf %325, %326 : vector<8x384xf32>
    %328 = vector.extract_strided_slice %321 {offsets = [0, 384], sizes = [8, 128], strides = [1, 1]} : vector<8x512xf32> to vector<8x128xf32>
    %329 = math.tanh %328 : vector<8x128xf32>
    %330 = vector.extract_strided_slice %327 {offsets = [0, 0], sizes = [8, 128], strides = [1, 1]} : vector<8x384xf32> to vector<8x128xf32>
    %331 = vector.extract_strided_slice %327 {offsets = [0, 128], sizes = [8, 128], strides = [1, 1]} : vector<8x384xf32> to vector<8x128xf32>
    %332 = vector.extract_strided_slice %327 {offsets = [0, 256], sizes = [8, 128], strides = [1, 1]} : vector<8x384xf32> to vector<8x128xf32>
    %333 = arith.mulf %331, %291 : vector<8x128xf32>
    %334 = arith.mulf %330, %329 : vector<8x128xf32>
    %335 = arith.addf %333, %334 : vector<8x128xf32>
    %336 = math.tanh %335 : vector<8x128xf32>
    %337 = arith.mulf %332, %336 : vector<8x128xf32>
    %338 = arith.truncf %313 : vector<8x128xf32> to vector<8x128xbf16>
    %c0_92 = arith.constant 0 : index
    %c0_93 = arith.constant 0 : index
    %339 = vector.load %arg4[%c0_92, %c0_93] : memref<128x512xbf16, #tpu.memory_space<vmem>>, vector<128x512xbf16>
    %cst_94 = arith.constant dense<0.000000e+00> : vector<8x512xf32>
    %340 = tpu.matmul %338, %339, %cst_94 {dimension_numbers = #tpu.dot_dimension_numbers<[1], [0], [0], [1], [0, 0, 1, 1], [], []>} : vector<8x128xbf16>, vector<128x512xbf16>, vector<8x512xf32> -> vector<8x512xf32>
    %341 = arith.addf %317, %340 : vector<8x512xf32>
    %342 = vector.extract_strided_slice %341 {offsets = [0, 0], sizes = [8, 384], strides = [1, 1]} : vector<8x512xf32> to vector<8x384xf32>
    %343 = arith.negf %342 : vector<8x384xf32>
    %344 = math.exp %343 : vector<8x384xf32>
    %cst_95 = arith.constant 1.000000e+00 : f32
    %345 = vector.broadcast %cst_95 : f32 to vector<8x384xf32>
    %346 = arith.addf %345, %344 : vector<8x384xf32>
    %347 = arith.divf %345, %346 : vector<8x384xf32>
    %348 = vector.extract_strided_slice %341 {offsets = [0, 384], sizes = [8, 128], strides = [1, 1]} : vector<8x512xf32> to vector<8x128xf32>
    %349 = math.tanh %348 : vector<8x128xf32>
    %350 = vector.extract_strided_slice %347 {offsets = [0, 0], sizes = [8, 128], strides = [1, 1]} : vector<8x384xf32> to vector<8x128xf32>
    %351 = vector.extract_strided_slice %347 {offsets = [0, 128], sizes = [8, 128], strides = [1, 1]} : vector<8x384xf32> to vector<8x128xf32>
    %352 = vector.extract_strided_slice %347 {offsets = [0, 256], sizes = [8, 128], strides = [1, 1]} : vector<8x384xf32> to vector<8x128xf32>
    %353 = arith.mulf %351, %311 : vector<8x128xf32>
    %354 = arith.mulf %350, %349 : vector<8x128xf32>
    %355 = arith.addf %353, %354 : vector<8x128xf32>
    %356 = math.tanh %355 : vector<8x128xf32>
    %357 = arith.mulf %352, %356 : vector<8x128xf32>
    %358 = arith.addf %314, %337 : vector<8x128xf32>
    %359 = arith.addf %315, %357 : vector<8x128xf32>
    %cst_96 = arith.constant 1.250000e-01 : f32
    %360 = vector.broadcast %cst_96 : f32 to vector<8x128xf32>
    %361 = arith.mulf %358, %360 : vector<8x128xf32>
    %cst_97 = arith.constant 1.250000e-01 : f32
    %362 = vector.broadcast %cst_97 : f32 to vector<8x128xf32>
    %363 = arith.mulf %359, %362 : vector<8x128xf32>
    %c0_98 = arith.constant 0 : index
    %c0_99 = arith.constant 0 : index
    %364 = vector.load %arg5[%c0_98, %c0_99] : memref<256x10xf32, #tpu.memory_space<vmem>>, vector<128x10xf32>
    %cst_100 = arith.constant dense<0.000000e+00> : vector<8x10xf32>
    %365 = tpu.matmul %361, %364, %cst_100 {dimension_numbers = #tpu.dot_dimension_numbers<[1], [0], [0], [1], [0, 0, 1, 1], [], []>} : vector<8x128xf32>, vector<128x10xf32>, vector<8x10xf32> -> vector<8x10xf32>
    %c128 = arith.constant 128 : index
    %c0_101 = arith.constant 0 : index
    %366 = vector.load %arg5[%c128, %c0_101] : memref<256x10xf32, #tpu.memory_space<vmem>>, vector<128x10xf32>
    %cst_102 = arith.constant dense<0.000000e+00> : vector<8x10xf32>
    %367 = tpu.matmul %363, %366, %cst_102 {dimension_numbers = #tpu.dot_dimension_numbers<[1], [0], [0], [1], [0, 0, 1, 1], [], []>} : vector<8x128xf32>, vector<128x10xf32>, vector<8x10xf32> -> vector<8x10xf32>
    %368 = arith.addf %365, %367 : vector<8x10xf32>
    %c0_103 = arith.constant 0 : index
    %c0_104 = arith.constant 0 : index
    %369 = vector.load %arg6[%c0_103, %c0_104] : memref<1x10xf32, #tpu.memory_space<vmem>>, vector<1x10xf32>
    %370 = vector.broadcast %369 : vector<1x10xf32> to vector<8x10xf32>
    %371 = arith.addf %368, %370 : vector<8x10xf32>
    %c0_105 = arith.constant 0 : index
    %c0_106 = arith.constant 0 : index
    %372 = vector.load %arg7[%c0_105, %c0_106] : memref<8x10xf32, #tpu.memory_space<vmem>>, vector<8x10xf32>
    tpu.vector_store %arg7[%c0_105, %c0_106], %371 {strides = array<i32>} : memref<8x10xf32, #tpu.memory_space<vmem>>, vector<8x10xf32>,
    return
  }
}

</mosaic_0001>

<llo_original>
// kernel: tpu_custom_call.1
$region0: #{tpu_custom_call.1}
  #allocation0 [shape = 'u32[]', space=smem, size = 0x4, offset = 0x4, fixed_abs, tag = 'smem constant byte address 0x4 - core index']
  #allocation1 [shape = 'u32[72,128]{1,0:T(1,128)}', space=vmem, size = 0x9000, scoped, tag = 'internal scratch']
  #allocation2 [shape = 'f32[64,1024]{1,0:T(8,128)}', space=vmem, size = 0x40000, scoped, tag = 'scratch operand']
  %s0 = inlined_call_operand.vmem [shape: bf16[64,32], index: 0, kind: input, shape index: {}]
  %s1 = inlined_call_operand.hbm [shape: bf16[32,1024], index: 1, kind: input, shape index: {}]
  %s2 = inlined_call_operand.vmem [shape: f32[1,1024], index: 2, kind: input, shape index: {}]
  %s3 = inlined_call_operand.vmem [shape: bf16[128,512], index: 3, kind: input, shape index: {}]
  %s4 = inlined_call_operand.hbm [shape: bf16[128,512], index: 4, kind: input, shape index: {}]
  %s5 = inlined_call_operand.vmem [shape: f32[256,10], index: 5, kind: input, shape index: {}]
  %s6 = inlined_call_operand.vmem [shape: f32[1,10], index: 6, kind: input, shape index: {}]
  %s7 = inlined_call_operand.hbm [shape: f32[8,10], index: 7, kind: output, shape index: {}]
  %s8 = sld [smem:[#allocation0]]
  $region46: #{tpu_custom_call.1} parent=0
    _
  %s10 = ssub.s32 1, %s8
  %s11 = scalar_select 0, %s10, %s8
  $region1: #{tpu_custom_call.1} parent=0
    #allocation3 [shape = 'u8[65536]{0}', space=vmem, size = 0x10000, scoped, tag = 'input window, operand 1, single buffered']
    #allocation4 [shape = 's32[1]{0}', space=sflag, size = 0x4, scoped, tag = 'scoped memory for tpu_custom_call.1']
    #allocation5 [shape = 's32[1]{0}', space=sflag, size = 0x4, scoped, tag = 'scoped memory for tpu_custom_call.1']
    #allocation6 [shape = 'u8[131072]{0}', space=vmem, size = 0x20000, scoped, tag = 'input window, operand 4, single buffered']
    #allocation7 [shape = 's32[1]{0}', space=sflag, size = 0x4, scoped, tag = 'scoped memory for tpu_custom_call.1']
    #allocation8 [shape = 'u8[4096]{0}', space=vmem, size = 0x1000, scoped, tag = 'output window, operand 0, single buffered']
    %12 = vsyncpa [#allocation4], 0
    %13 = vsyncpa [#allocation7], 0
    %14 = vsyncpa [#allocation5], 0
    // Predicated region
    $region2: #{tpu_custom_call.1} parent=1 // pred_check
      _
    $region3: #{tpu_custom_call.1} parent=1 // pred_check_branch
      %16 = sbr.rel (0) target = $region5
    $region4: #{tpu_custom_call.1} parent=1 // pred_region
      _
    $region5: #{tpu_custom_call.1} parent=1 // pred_fallthru
      _
    // Predicated region
    $region6: #{tpu_custom_call.1} parent=1 // pred_check
      _
    $region7: #{tpu_custom_call.1} parent=1 // pred_check_branch
      %18 = sbr.rel (0) target = $region9
    $region8: #{tpu_custom_call.1} parent=1 // pred_region
      %20 = vsyncadd [#allocation4], 0
      %s21 = sshll.u32 %s1, 4
      %s22 = int_to_ptr.hbm [resolvable:$true] %s21
      %s23 = sshll.u32 [#allocation3], 4
      %s24 = int_to_ptr.vmem [resolvable:$true] %s23
      %29 = dma.hbm_to_vmem [thread:$0]  %s22, 2048, %s24, [#allocation4], 512, 512, 32
    $region9: #{tpu_custom_call.1} parent=1 // pred_fallthru
      _
    // Predicated region
    $region10: #{tpu_custom_call.1} parent=1 // pred_check
      _
    $region11: #{tpu_custom_call.1} parent=1 // pred_check_branch
      %31 = sbr.rel (0) target = $region13
    $region12: #{tpu_custom_call.1} parent=1 // pred_region
      _
    $region13: #{tpu_custom_call.1} parent=1 // pred_fallthru
      _
    // Predicated region
    $region14: #{tpu_custom_call.1} parent=1 // pred_check
      _
    $region15: #{tpu_custom_call.1} parent=1 // pred_check_branch
      %33 = sbr.rel (0) target = $region17
    $region16: #{tpu_custom_call.1} parent=1 // pred_region
      _
    $region17: #{tpu_custom_call.1} parent=1 // pred_fallthru
      _
    // Predicated region
    $region18: #{tpu_custom_call.1} parent=1 // pred_check
      _
    $region19: #{tpu_custom_call.1} parent=1 // pred_check_branch
      %35 = sbr.rel (0) target = $region21
    $region20: #{tpu_custom_call.1} parent=1 // pred_region
      %37 = vsyncadd [#allocation7], 0
      %s38 = sshll.u32 %s4, 4
      %s39 = int_to_ptr.hbm [resolvable:$true] %s38
      %s40 = sshll.u32 [#allocation6], 4
      %s41 = int_to_ptr.vmem [resolvable:$true] %s40
      %46 = dma.hbm_to_vmem [thread:$0]  %s39, 4096, %s41, [#allocation7], 256, 256, 16
    $region21: #{tpu_custom_call.1} parent=1 // pred_fallthru
      _
    // Predicated region
    $region22: #{tpu_custom_call.1} parent=1 // pred_check
      _
    $region23: #{tpu_custom_call.1} parent=1 // pred_check_branch
      %48 = sbr.rel (0) target = $region25
    $region24: #{tpu_custom_call.1} parent=1 // pred_region
      _
    $region25: #{tpu_custom_call.1} parent=1 // pred_fallthru
      _
    // Predicated region
    $region26: #{tpu_custom_call.1} parent=1 // pred_check
      _
    $region27: #{tpu_custom_call.1} parent=1 // pred_check_branch
      %50 = sbr.rel (0) target = $region29
    $region28: #{tpu_custom_call.1} parent=1 // pred_region
      _
    $region29: #{tpu_custom_call.1} parent=1 // pred_fallthru
      _
    // Predicated region
    $region30: #{tpu_custom_call.1} parent=1 // pred_check
      _
    $region31: #{tpu_custom_call.1} parent=1 // pred_check_branch
      %52 = sbr.rel (0) target = $region33
    $region32: #{tpu_custom_call.1} parent=1 // pred_region
      %54 = dma.done [#allocation4], 2048
    $region33: #{tpu_custom_call.1} parent=1 // pred_fallthru
      _
    // Predicated region
    $region34: #{tpu_custom_call.1} parent=1 // pred_check
      _
    $region35: #{tpu_custom_call.1} parent=1 // pred_check_branch
      %56 = sbr.rel (0) target = $region37
    $region36: #{tpu_custom_call.1} parent=1 // pred_region
      %58 = dma.done [#allocation7], 4096
    $region37: #{tpu_custom_call.1} parent=1 // pred_fallthru
      _
    %v60 = vld [vmem:[%s0] sm:$0xf]
    %v61 = vld [vmem:[%s0 + $0x4] sm:$0xf]
    %v62 = vld [vmem:[%s0 + $0x8] sm:$0xf]
    %v63 = vld [vmem:[%s0 + $0xc] sm:$0xf]
    %v64 = vld [vmem:[%s0 + $0x10] sm:$0xf]
    %v65 = vld [vmem:[%s0 + $0x14] sm:$0xf]
    %v66 = vld [vmem:[%s0 + $0x18] sm:$0xf]
    %v67 = vld [vmem:[%s0 + $0x1c] sm:$0xf]
    %v68 = vld [vmem:[#allocation3] sm:$0xff]
    %v69 = vld [vmem:[#allocation3 + $0x8] sm:$0xff]
    %v70 = vld [vmem:[#allocation3 + $0x10] sm:$0xff]
    %v71 = vld [vmem:[#allocation3 + $0x18] sm:$0xff]
    %v72 = vld [vmem:[#allocation3 + $0x20] sm:$0xff]
    %v73 = vld [vmem:[#allocation3 + $0x28] sm:$0xff]
    %v74 = vld [vmem:[#allocation3 + $0x30] sm:$0xff]
    %v75 = vld [vmem:[#allocation3 + $0x38] sm:$0xff]
    %v76 = vld [vmem:[#allocation3 + $0x40] sm:$0xff]
    %v77 = vld [vmem:[#allocation3 + $0x48] sm:$0xff]
    %v78 = vld [vmem:[#allocation3 + $0x50] sm:$0xff]
    %v79 = vld [vmem:[#allocation3 + $0x58] sm:$0xff]
    %v80 = vld [vmem:[#allocation3 + $0x60] sm:$0xff]
    %v81 = vld [vmem:[#allocation3 + $0x68] sm:$0xff]
    %v82 = vld [vmem:[#allocation3 + $0x70] sm:$0xff]
    %v83 = vld [vmem:[#allocation3 + $0x78] sm:$0xff]
    %v84 = vld [vmem:[%s2] sm:$0xff]
    %v86 = vperm.slane %v84, 0
    %v87 = vperm.slane %v84, 1
    %v88 = vperm.slane %v84, 2
    %v89 = vperm.slane %v84, 3
    %v90 = vperm.slane %v84, 4
    %v91 = vperm.slane %v84, 5
    %v92 = vperm.slane %v84, 6
    %v93 = vperm.slane %v84, 7
    %v110 = vunpack.c.l.b16 %v60
    %v111 = vunpack.c.l.b16 %v61
    %v112 = vunpack.c.l.b16 %v62
    %v113 = vunpack.c.l.b16 %v63
    %v114 = vunpack.c.l.b16 %v64
    %v115 = vunpack.c.l.b16 %v65
    %v116 = vunpack.c.l.b16 %v66
    %v117 = vunpack.c.l.b16 %v67
    %v118 = vpack.c.b16 %v111, %v110
    %v119 = vpack.c.b16 %v113, %v112
    %v120 = vpack.c.b16 %v115, %v114
    %v121 = vpack.c.b16 %v117, %v116
    %v138 = vunpack.c.l.b16 %v68
    %v139 = vunpack.c.h.b16 %v68
    %v140 = vunpack.c.l.b16 %v69
    %v141 = vunpack.c.h.b16 %v69
    %v142 = vunpack.c.l.b16 %v70
    %v143 = vunpack.c.h.b16 %v70
    %v144 = vunpack.c.l.b16 %v71
    %v145 = vunpack.c.h.b16 %v71
    %v146 = vunpack.c.l.b16 %v72
    %v147 = vunpack.c.h.b16 %v72
    %v148 = vunpack.c.l.b16 %v73
    %v149 = vunpack.c.h.b16 %v73
    %v150 = vunpack.c.l.b16 %v74
    %v151 = vunpack.c.h.b16 %v74
    %v152 = vunpack.c.l.b16 %v75
    %v153 = vunpack.c.h.b16 %v75
    %v154 = vunpack.c.l.b16 %v76
    %v155 = vunpack.c.h.b16 %v76
    %v156 = vunpack.c.l.b16 %v77
    %v157 = vunpack.c.h.b16 %v77
    %v158 = vunpack.c.l.b16 %v78
    %v159 = vunpack.c.h.b16 %v78
    %v160 = vunpack.c.l.b16 %v79
    %v161 = vunpack.c.h.b16 %v79
    %v162 = vunpack.c.l.b16 %v80
    %v163 = vunpack.c.h.b16 %v80
    %v164 = vunpack.c.l.b16 %v81
    %v165 = vunpack.c.h.b16 %v81
    %v166 = vunpack.c.l.b16 %v82
    %v167 = vunpack.c.h.b16 %v82
    %v168 = vunpack.c.l.b16 %v83
    %v169 = vunpack.c.h.b16 %v83
    %v170 = vpack.c.b16 %v146, %v138
    %v171 = vpack.c.b16 %v147, %v139
    %v172 = vpack.c.b16 %v148, %v140
    %v173 = vpack.c.b16 %v149, %v141
    %v174 = vpack.c.b16 %v150, %v142
    %v175 = vpack.c.b16 %v151, %v143
    %v176 = vpack.c.b16 %v152, %v144
    %v177 = vpack.c.b16 %v153, %v145
    %v178 = vpack.c.b16 %v162, %v154
    %v179 = vpack.c.b16 %v163, %v155
    %v180 = vpack.c.b16 %v164, %v156
    %v181 = vpack.c.b16 %v165, %v157
    %v182 = vpack.c.b16 %v166, %v158
    %v183 = vpack.c.b16 %v167, %v159
    %v184 = vpack.c.b16 %v168, %v160
    %v185 = vpack.c.b16 %v169, %v161
    %vm202 = vcmask 261120
    %v204 = vsel %vm202, %v118, 0
    %v207 = vsel %vm202, %v119, 0
    %v210 = vsel %vm202, %v120, 0
    %v213 = vsel %vm202, %v121, 0
    %215 = vmatpush.bf16.msra.mxu0 0
    %216 = vmatpush.bf16.msra.mxu0 0
    %217 = vmatpush.bf16.msra.mxu0 0
    %218 = vmatpush.bf16.msra.mxu0 0
    %219 = vmatpush.bf16.msra.mxu0 0
    %220 = vmatpush.bf16.msra.mxu0 0
    %221 = vmatpush.bf16.msra.mxu0 %v178
    %222 = vmatpush.bf16.msra.mxu0 %v170
    %223 = vmatmul.bf16.gmra.mxu0 %v204
    %v224 = vpop.f32.mrf.mxu0
    %v225 = vadd.f32 %v86, %v224
    %v226 = vpop.f32.mrf.mxu0
    %v227 = vadd.f32 %v86, %v226
    %228 = vmatmul.bf16.gmra.mxu0 %v207
    %v229 = vpop.f32.mrf.mxu0
    %v230 = vadd.f32 %v86, %v229
    %v231 = vpop.f32.mrf.mxu0
    %v232 = vadd.f32 %v86, %v231
    %233 = vmatmul.bf16.gmra.mxu0 %v210
    %v234 = vpop.f32.mrf.mxu0
    %v235 = vadd.f32 %v86, %v234
    %v236 = vpop.f32.mrf.mxu0
    %v237 = vadd.f32 %v86, %v236
    %238 = vmatmul.bf16.gmra.mxu0 %v213
    %v239 = vpop.f32.mrf.mxu0
    %v240 = vadd.f32 %v86, %v239
    %v241 = vpop.f32.mrf.mxu0
    %v242 = vadd.f32 %v86, %v241
    %243 = vdwg.mxu0
    %244 = vmatpush.bf16.msra.mxu0 0
    %245 = vmatpush.bf16.msra.mxu0 0
    %246 = vmatpush.bf16.msra.mxu0 0
    %247 = vmatpush.bf16.msra.mxu0 0
    %248 = vmatpush.bf16.msra.mxu0 0
    %249 = vmatpush.bf16.msra.mxu0 0
    %250 = vmatpush.bf16.msra.mxu0 %v179
    %251 = vmatpush.bf16.msra.mxu0 %v171
    %252 = vmatmul.bf16.gmra.mxu0 %v204
    %v253 = vpop.f32.mrf.mxu0
    %v254 = vadd.f32 %v87, %v253
    %v255 = vpop.f32.mrf.mxu0
    %v256 = vadd.f32 %v87, %v255
    %257 = vmatmul.bf16.gmra.mxu0 %v207
    %v258 = vpop.f32.mrf.mxu0
    %v259 = vadd.f32 %v87, %v258
    %v260 = vpop.f32.mrf.mxu0
    %v261 = vadd.f32 %v87, %v260
    %262 = vmatmul.bf16.gmra.mxu0 %v210
    %v263 = vpop.f32.mrf.mxu0
    %v264 = vadd.f32 %v87, %v263
    %v265 = vpop.f32.mrf.mxu0
    %v266 = vadd.f32 %v87, %v265
    %267 = vmatmul.bf16.gmra.mxu0 %v213
    %v268 = vpop.f32.mrf.mxu0
    %v269 = vadd.f32 %v87, %v268
    %v270 = vpop.f32.mrf.mxu0
    %v271 = vadd.f32 %v87, %v270
    %272 = vdwg.mxu0
    %273 = vmatpush.bf16.msra.mxu0 0
    %274 = vmatpush.bf16.msra.mxu0 0
    %275 = vmatpush.bf16.msra.mxu0 0
    %276 = vmatpush.bf16.msra.mxu0 0
    %277 = vmatpush.bf16.msra.mxu0 0
    %278 = vmatpush.bf16.msra.mxu0 0
    %279 = vmatpush.bf16.msra.mxu0 %v180
    %280 = vmatpush.bf16.msra.mxu0 %v172
    %281 = vmatmul.bf16.gmra.mxu0 %v204
    %v282 = vpop.f32.mrf.mxu0
    %v283 = vadd.f32 %v88, %v282
    %v284 = vpop.f32.mrf.mxu0
    %v285 = vadd.f32 %v88, %v284
    %286 = vmatmul.bf16.gmra.mxu0 %v207
    %v287 = vpop.f32.mrf.mxu0
    %v288 = vadd.f32 %v88, %v287
    %v289 = vpop.f32.mrf.mxu0
    %v290 = vadd.f32 %v88, %v289
    %291 = vmatmul.bf16.gmra.mxu0 %v210
    %v292 = vpop.f32.mrf.mxu0
    %v293 = vadd.f32 %v88, %v292
    %v294 = vpop.f32.mrf.mxu0
    %v295 = vadd.f32 %v88, %v294
    %296 = vmatmul.bf16.gmra.mxu0 %v213
    %v297 = vpop.f32.mrf.mxu0
    %v298 = vadd.f32 %v88, %v297
    %v299 = vpop.f32.mrf.mxu0
    %v300 = vadd.f32 %v88, %v299
    %301 = vdwg.mxu0
    %302 = vmatpush.bf16.msra.mxu0 0
    %303 = vmatpush.bf16.msra.mxu0 0
    %304 = vmatpush.bf16.msra.mxu0 0
    %305 = vmatpush.bf16.msra.mxu0 0
    %306 = vmatpush.bf16.msra.mxu0 0
    %307 = vmatpush.bf16.msra.mxu0 0
    %308 = vmatpush.bf16.msra.mxu0 %v181
    %309 = vmatpush.bf16.msra.mxu0 %v173
    %310 = vmatmul.bf16.gmra.mxu0 %v204
    %v311 = vpop.f32.mrf.mxu0
    %v312 = vadd.f32 %v89, %v311
    %v313 = vpop.f32.mrf.mxu0
    %v314 = vadd.f32 %v89, %v313
    %315 = vmatmul.bf16.gmra.mxu0 %v207
    %v316 = vpop.f32.mrf.mxu0
    %v317 = vadd.f32 %v89, %v316
    %v318 = vpop.f32.mrf.mxu0
    %v319 = vadd.f32 %v89, %v318
    %320 = vmatmul.bf16.gmra.mxu0 %v210
    %v321 = vpop.f32.mrf.mxu0
    %v322 = vadd.f32 %v89, %v321
    %v323 = vpop.f32.mrf.mxu0
    %v324 = vadd.f32 %v89, %v323
    %325 = vmatmul.bf16.gmra.mxu0 %v213
    %v326 = vpop.f32.mrf.mxu0
    %v327 = vadd.f32 %v89, %v326
    %v328 = vpop.f32.mrf.mxu0
    %v329 = vadd.f32 %v89, %v328
    %330 = vdwg.mxu0
    %331 = vmatpush.bf16.msra.mxu0 0
    %332 = vmatpush.bf16.msra.mxu0 0
    %333 = vmatpush.bf16.msra.mxu0 0
    %334 = vmatpush.bf16.msra.mxu0 0
    %335 = vmatpush.bf16.msra.mxu0 0
    %336 = vmatpush.bf16.msra.mxu0 0
    %337 = vmatpush.bf16.msra.mxu0 %v182
    %338 = vmatpush.bf16.msra.mxu0 %v174
    %339 = vmatmul.bf16.gmra.mxu0 %v204
    %v340 = vpop.f32.mrf.mxu0
    %v341 = vadd.f32 %v90, %v340
    %v342 = vpop.f32.mrf.mxu0
    %v343 = vadd.f32 %v90, %v342
    %344 = vmatmul.bf16.gmra.mxu0 %v207
    %v345 = vpop.f32.mrf.mxu0
    %v346 = vadd.f32 %v90, %v345
    %v347 = vpop.f32.mrf.mxu0
    %v348 = vadd.f32 %v90, %v347
    %349 = vmatmul.bf16.gmra.mxu0 %v210
    %v350 = vpop.f32.mrf.mxu0
    %v351 = vadd.f32 %v90, %v350
    %v352 = vpop.f32.mrf.mxu0
    %v353 = vadd.f32 %v90, %v352
    %354 = vmatmul.bf16.gmra.mxu0 %v213
    %v355 = vpop.f32.mrf.mxu0
    %v356 = vadd.f32 %v90, %v355
    %v357 = vpop.f32.mrf.mxu0
    %v358 = vadd.f32 %v90, %v357
    %359 = vdwg.mxu0
    %360 = vmatpush.bf16.msra.mxu0 0
    %361 = vmatpush.bf16.msra.mxu0 0
    %362 = vmatpush.bf16.msra.mxu0 0
    %363 = vmatpush.bf16.msra.mxu0 0
    %364 = vmatpush.bf16.msra.mxu0 0
    %365 = vmatpush.bf16.msra.mxu0 0
    %366 = vmatpush.bf16.msra.mxu0 %v183
    %367 = vmatpush.bf16.msra.mxu0 %v175
    %368 = vmatmul.bf16.gmra.mxu0 %v204
    %v369 = vpop.f32.mrf.mxu0
    %v370 = vadd.f32 %v91, %v369
    %v371 = vpop.f32.mrf.mxu0
    %v372 = vadd.f32 %v91, %v371
    %373 = vmatmul.bf16.gmra.mxu0 %v207
    %v374 = vpop.f32.mrf.mxu0
    %v375 = vadd.f32 %v91, %v374
    %v376 = vpop.f32.mrf.mxu0
    %v377 = vadd.f32 %v91, %v376
    %378 = vmatmul.bf16.gmra.mxu0 %v210
    %v379 = vpop.f32.mrf.mxu0
    %v380 = vadd.f32 %v91, %v379
    %v381 = vpop.f32.mrf.mxu0
    %v382 = vadd.f32 %v91, %v381
    %383 = vmatmul.bf16.gmra.mxu0 %v213
    %v384 = vpop.f32.mrf.mxu0
    %v385 = vadd.f32 %v91, %v384
    %v386 = vpop.f32.mrf.mxu0
    %v387 = vadd.f32 %v91, %v386
    %388 = vdwg.mxu0
    %389 = vmatpush.bf16.msra.mxu0 0
    %390 = vmatpush.bf16.msra.mxu0 0
    %391 = vmatpush.bf16.msra.mxu0 0
    %392 = vmatpush.bf16.msra.mxu0 0
    %393 = vmatpush.bf16.msra.mxu0 0
    %394 = vmatpush.bf16.msra.mxu0 0
    %395 = vmatpush.bf16.msra.mxu0 %v184
    %396 = vmatpush.bf16.msra.mxu0 %v176
    %397 = vmatmul.bf16.gmra.mxu0 %v204
    %v398 = vpop.f32.mrf.mxu0
    %v399 = vadd.f32 %v92, %v398
    %v400 = vpop.f32.mrf.mxu0
    %v401 = vadd.f32 %v92, %v400
    %402 = vmatmul.bf16.gmra.mxu0 %v207
    %v403 = vpop.f32.mrf.mxu0
    %v404 = vadd.f32 %v92, %v403
    %v405 = vpop.f32.mrf.mxu0
    %v406 = vadd.f32 %v92, %v405
    %407 = vmatmul.bf16.gmra.mxu0 %v210
    %v408 = vpop.f32.mrf.mxu0
    %v409 = vadd.f32 %v92, %v408
    %v410 = vpop.f32.mrf.mxu0
    %v411 = vadd.f32 %v92, %v410
    %412 = vmatmul.bf16.gmra.mxu0 %v213
    %v413 = vpop.f32.mrf.mxu0
    %v414 = vadd.f32 %v92, %v413
    %v415 = vpop.f32.mrf.mxu0
    %v416 = vadd.f32 %v92, %v415
    %417 = vdwg.mxu0
    %418 = vmatpush.bf16.msra.mxu0 0
    %419 = vmatpush.bf16.msra.mxu0 0
    %420 = vmatpush.bf16.msra.mxu0 0
    %421 = vmatpush.bf16.msra.mxu0 0
    %422 = vmatpush.bf16.msra.mxu0 0
    %423 = vmatpush.bf16.msra.mxu0 0
    %424 = vmatpush.bf16.msra.mxu0 %v185
    %425 = vmatpush.bf16.msra.mxu0 %v177
    %426 = vmatmul.bf16.gmra.mxu0 %v204
    %v427 = vpop.f32.mrf.mxu0
    %v428 = vadd.f32 %v93, %v427
    %v429 = vpop.f32.mrf.mxu0
    %v430 = vadd.f32 %v93, %v429
    %431 = vmatmul.bf16.gmra.mxu0 %v207
    %v432 = vpop.f32.mrf.mxu0
    %v433 = vadd.f32 %v93, %v432
    %v434 = vpop.f32.mrf.mxu0
    %v435 = vadd.f32 %v93, %v434
    %436 = vmatmul.bf16.gmra.mxu0 %v210
    %v437 = vpop.f32.mrf.mxu0
    %v438 = vadd.f32 %v93, %v437
    %v439 = vpop.f32.mrf.mxu0
    %v440 = vadd.f32 %v93, %v439
    %441 = vmatmul.bf16.gmra.mxu0 %v213
    %v442 = vpop.f32.mrf.mxu0
    %v443 = vadd.f32 %v93, %v442
    %v444 = vpop.f32.mrf.mxu0
    %v445 = vadd.f32 %v93, %v444
    %446 = vdwg.mxu0
    %447 = vst [vmem:[#allocation2] sm:$0xff] %v225
    %448 = vst [vmem:[#allocation2 + $0x8] sm:$0xff] %v254
    %449 = vst [vmem:[#allocation2 + $0x10] sm:$0xff] %v283
    %450 = vst [vmem:[#allocation2 + $0x18] sm:$0xff] %v312
    %451 = vst [vmem:[#allocation2 + $0x20] sm:$0xff] %v341
    %452 = vst [vmem:[#allocation2 + $0x28] sm:$0xff] %v370
    %453 = vst [vmem:[#allocation2 + $0x30] sm:$0xff] %v399
    %454 = vst [vmem:[#allocation2 + $0x38] sm:$0xff] %v428
    %455 = vst [vmem:[#allocation2 + $0x40] sm:$0xff] %v227
    %456 = vst [vmem:[#allocation2 + $0x48] sm:$0xff] %v256
    %457 = vst [vmem:[#allocation2 + $0x50] sm:$0xff] %v285
    %458 = vst [vmem:[#allocation2 + $0x58] sm:$0xff] %v314
    %459 = vst [vmem:[#allocation2 + $0x60] sm:$0xff] %v343
    %460 = vst [vmem:[#allocation2 + $0x68] sm:$0xff] %v372
    %461 = vst [vmem:[#allocation2 + $0x70] sm:$0xff] %v401
    %462 = vst [vmem:[#allocation2 + $0x78] sm:$0xff] %v430
    %463 = vst [vmem:[#allocation2 + $0x80] sm:$0xff] %v230
    %464 = vst [vmem:[#allocation2 + $0x88] sm:$0xff] %v259
    %465 = vst [vmem:[#allocation2 + $0x90] sm:$0xff] %v288
    %466 = vst [vmem:[#allocation2 + $0x98] sm:$0xff] %v317
    %467 = vst [vmem:[#allocation2 + $0xa0] sm:$0xff] %v346
    %468 = vst [vmem:[#allocation2 + $0xa8] sm:$0xff] %v375
    %469 = vst [vmem:[#allocation2 + $0xb0] sm:$0xff] %v404
    %470 = vst [vmem:[#allocation2 + $0xb8] sm:$0xff] %v433
    %471 = vst [vmem:[#allocation2 + $0xc0] sm:$0xff] %v232
    %472 = vst [vmem:[#allocation2 + $0xc8] sm:$0xff] %v261
    %473 = vst [vmem:[#allocation2 + $0xd0] sm:$0xff] %v290
    %474 = vst [vmem:[#allocation2 + $0xd8] sm:$0xff] %v319
    %475 = vst [vmem:[#allocation2 + $0xe0] sm:$0xff] %v348
    %476 = vst [vmem:[#allocation2 + $0xe8] sm:$0xff] %v377
    %477 = vst [vmem:[#allocation2 + $0xf0] sm:$0xff] %v406
    %478 = vst [vmem:[#allocation2 + $0xf8] sm:$0xff] %v435
    %479 = vst [vmem:[#allocation2 + $0x100] sm:$0xff] %v235
    %480 = vst [vmem:[#allocation2 + $0x108] sm:$0xff] %v264
    %481 = vst [vmem:[#allocation2 + $0x110] sm:$0xff] %v293
    %482 = vst [vmem:[#allocation2 + $0x118] sm:$0xff] %v322
    %483 = vst [vmem:[#allocation2 + $0x120] sm:$0xff] %v351
    %484 = vst [vmem:[#allocation2 + $0x128] sm:$0xff] %v380
    %485 = vst [vmem:[#allocation2 + $0x130] sm:$0xff] %v409
    %486 = vst [vmem:[#allocation2 + $0x138] sm:$0xff] %v438
    %487 = vst [vmem:[#allocation2 + $0x140] sm:$0xff] %v237
    %488 = vst [vmem:[#allocation2 + $0x148] sm:$0xff] %v266
    %489 = vst [vmem:[#allocation2 + $0x150] sm:$0xff] %v295
    %490 = vst [vmem:[#allocation2 + $0x158] sm:$0xff] %v324
    %491 = vst [vmem:[#allocation2 + $0x160] sm:$0xff] %v353
    %492 = vst [vmem:[#allocation2 + $0x168] sm:$0xff] %v382
    %493 = vst [vmem:[#allocation2 + $0x170] sm:$0xff] %v411
    %494 = vst [vmem:[#allocation2 + $0x178] sm:$0xff] %v440
    %495 = vst [vmem:[#allocation2 + $0x180] sm:$0xff] %v240
    %496 = vst [vmem:[#allocation2 + $0x188] sm:$0xff] %v269
    %497 = vst [vmem:[#allocation2 + $0x190] sm:$0xff] %v298
    %498 = vst [vmem:[#allocation2 + $0x198] sm:$0xff] %v327
    %499 = vst [vmem:[#allocation2 + $0x1a0] sm:$0xff] %v356
    %500 = vst [vmem:[#allocation2 + $0x1a8] sm:$0xff] %v385
    %501 = vst [vmem:[#allocation2 + $0x1b0] sm:$0xff] %v414
    %502 = vst [vmem:[#allocation2 + $0x1b8] sm:$0xff] %v443
    %503 = vst [vmem:[#allocation2 + $0x1c0] sm:$0xff] %v242
    %504 = vst [vmem:[#allocation2 + $0x1c8] sm:$0xff] %v271
    %505 = vst [vmem:[#allocation2 + $0x1d0] sm:$0xff] %v300
    %506 = vst [vmem:[#allocation2 + $0x1d8] sm:$0xff] %v329
    %507 = vst [vmem:[#allocation2 + $0x1e0] sm:$0xff] %v358
    %508 = vst [vmem:[#allocation2 + $0x1e8] sm:$0xff] %v387
    %509 = vst [vmem:[#allocation2 + $0x1f0] sm:$0xff] %v416
    %510 = vst [vmem:[#allocation2 + $0x1f8] sm:$0xff] %v445
    %v511 = vld [vmem:[#allocation2] sm:$0xff]
    %v512 = vld [vmem:[#allocation2 + $0x8] sm:$0xff]
    %v513 = vld [vmem:[#allocation2 + $0x10] sm:$0xff]
    %v514 = vld [vmem:[#allocation2 + $0x18] sm:$0xff]
    %v515 = vld [vmem:[#allocation2 + $0x1e0] sm:$0xff]
    %v516 = vld [vmem:[#allocation2 + $0x1e8] sm:$0xff]
    %v517 = vld [vmem:[#allocation2 + $0x1f0] sm:$0xff]
    %v518 = vld [vmem:[#allocation2 + $0x1f8] sm:$0xff]
    %v519 = vld [vmem:[%s3] sm:$0xff]
    %v520 = vld [vmem:[%s3 + $0x8] sm:$0xff]
    %v521 = vld [vmem:[%s3 + $0x10] sm:$0xff]
    %v522 = vld [vmem:[%s3 + $0x18] sm:$0xff]
    %v523 = vld [vmem:[%s3 + $0x20] sm:$0xff]
    %v524 = vld [vmem:[%s3 + $0x28] sm:$0xff]
    %v525 = vld [vmem:[%s3 + $0x30] sm:$0xff]
    %v526 = vld [vmem:[%s3 + $0x38] sm:$0xff]
    %v527 = vld [vmem:[%s3 + $0x40] sm:$0xff]
    %v528 = vld [vmem:[%s3 + $0x48] sm:$0xff]
    %v529 = vld [vmem:[%s3 + $0x50] sm:$0xff]
    %v530 = vld [vmem:[%s3 + $0x58] sm:$0xff]
    %v531 = vld [vmem:[%s3 + $0x60] sm:$0xff]
    %v532 = vld [vmem:[%s3 + $0x68] sm:$0xff]
    %v533 = vld [vmem:[%s3 + $0x70] sm:$0xff]
    %v534 = vld [vmem:[%s3 + $0x78] sm:$0xff]
    %v535 = vld [vmem:[%s3 + $0x80] sm:$0xff]
    %v536 = vld [vmem:[%s3 + $0x88] sm:$0xff]
    %v537 = vld [vmem:[%s3 + $0x90] sm:$0xff]
    %v538 = vld [vmem:[%s3 + $0x98] sm:$0xff]
    %v539 = vld [vmem:[%s3 + $0xa0] sm:$0xff]
    %v540 = vld [vmem:[%s3 + $0xa8] sm:$0xff]
    %v541 = vld [vmem:[%s3 + $0xb0] sm:$0xff]
    %v542 = vld [vmem:[%s3 + $0xb8] sm:$0xff]
    %v543 = vld [vmem:[%s3 + $0xc0] sm:$0xff]
    %v544 = vld [vmem:[%s3 + $0xc8] sm:$0xff]
    %v545 = vld [vmem:[%s3 + $0xd0] sm:$0xff]
    %v546 = vld [vmem:[%s3 + $0xd8] sm:$0xff]
    %v547 = vld [vmem:[%s3 + $0xe0] sm:$0xff]
    %v548 = vld [vmem:[%s3 + $0xe8] sm:$0xff]
    %v549 = vld [vmem:[%s3 + $0xf0] sm:$0xff]
    %v550 = vld [vmem:[%s3 + $0xf8] sm:$0xff]
    %v583 = vunpack.c.l.b16 %v519
    %v584 = vunpack.c.h.b16 %v519
    %v585 = vunpack.c.l.b16 %v520
    %v586 = vunpack.c.h.b16 %v520
    %v587 = vunpack.c.l.b16 %v521
    %v588 = vunpack.c.h.b16 %v521
    %v589 = vunpack.c.l.b16 %v522
    %v590 = vunpack.c.h.b16 %v522
    %v591 = vunpack.c.l.b16 %v523
    %v592 = vunpack.c.h.b16 %v523
    %v593 = vunpack.c.l.b16 %v524
    %v594 = vunpack.c.h.b16 %v524
    %v595 = vunpack.c.l.b16 %v525
    %v596 = vunpack.c.h.b16 %v525
    %v597 = vunpack.c.l.b16 %v526
    %v598 = vunpack.c.h.b16 %v526
    %v599 = vunpack.c.l.b16 %v527
    %v600 = vunpack.c.h.b16 %v527
    %v601 = vunpack.c.l.b16 %v528
    %v602 = vunpack.c.h.b16 %v528
    %v603 = vunpack.c.l.b16 %v529
    %v604 = vunpack.c.h.b16 %v529
    %v605 = vunpack.c.l.b16 %v530
    %v606 = vunpack.c.h.b16 %v530
    %v607 = vunpack.c.l.b16 %v531
    %v608 = vunpack.c.h.b16 %v531
    %v609 = vunpack.c.l.b16 %v532
    %v610 = vunpack.c.h.b16 %v532
    %v611 = vunpack.c.l.b16 %v533
    %v612 = vunpack.c.h.b16 %v533
    %v613 = vunpack.c.l.b16 %v534
    %v614 = vunpack.c.h.b16 %v534
    %v615 = vunpack.c.l.b16 %v535
    %v616 = vunpack.c.h.b16 %v535
    %v617 = vunpack.c.l.b16 %v536
    %v618 = vunpack.c.h.b16 %v536
    %v619 = vunpack.c.l.b16 %v537
    %v620 = vunpack.c.h.b16 %v537
    %v621 = vunpack.c.l.b16 %v538
    %v622 = vunpack.c.h.b16 %v538
    %v623 = vunpack.c.l.b16 %v539
    %v624 = vunpack.c.h.b16 %v539
    %v625 = vunpack.c.l.b16 %v540
    %v626 = vunpack.c.h.b16 %v540
    %v627 = vunpack.c.l.b16 %v541
    %v628 = vunpack.c.h.b16 %v541
    %v629 = vunpack.c.l.b16 %v542
    %v630 = vunpack.c.h.b16 %v542
    %v631 = vunpack.c.l.b16 %v543
    %v632 = vunpack.c.h.b16 %v543
    %v633 = vunpack.c.l.b16 %v544
    %v634 = vunpack.c.h.b16 %v544
    %v635 = vunpack.c.l.b16 %v545
    %v636 = vunpack.c.h.b16 %v545
    %v637 = vunpack.c.l.b16 %v546
    %v638 = vunpack.c.h.b16 %v546
    %v639 = vunpack.c.l.b16 %v547
    %v640 = vunpack.c.h.b16 %v547
    %v641 = vunpack.c.l.b16 %v548
    %v642 = vunpack.c.h.b16 %v548
    %v643 = vunpack.c.l.b16 %v549
    %v644 = vunpack.c.h.b16 %v549
    %v645 = vunpack.c.l.b16 %v550
    %v646 = vunpack.c.h.b16 %v550
    %v647 = vpack.c.b16 %v587, %v583
    %v648 = vpack.c.b16 %v588, %v584
    %v649 = vpack.c.b16 %v589, %v585
    %v650 = vpack.c.b16 %v590, %v586
    %v651 = vpack.c.b16 %v595, %v591
    %v652 = vpack.c.b16 %v596, %v592
    %v653 = vpack.c.b16 %v597, %v593
    %v654 = vpack.c.b16 %v598, %v594
    %v655 = vpack.c.b16 %v603, %v599
    %v656 = vpack.c.b16 %v604, %v600
    %v657 = vpack.c.b16 %v605, %v601
    %v658 = vpack.c.b16 %v606, %v602
    %v659 = vpack.c.b16 %v611, %v607
    %v660 = vpack.c.b16 %v612, %v608
    %v661 = vpack.c.b16 %v613, %v609
    %v662 = vpack.c.b16 %v614, %v610
    %v663 = vpack.c.b16 %v619, %v615
    %v664 = vpack.c.b16 %v620, %v616
    %v665 = vpack.c.b16 %v621, %v617
    %v666 = vpack.c.b16 %v622, %v618
    %v667 = vpack.c.b16 %v627, %v623
    %v668 = vpack.c.b16 %v628, %v624
    %v669 = vpack.c.b16 %v629, %v625
    %v670 = vpack.c.b16 %v630, %v626
    %v671 = vpack.c.b16 %v635, %v631
    %v672 = vpack.c.b16 %v636, %v632
    %v673 = vpack.c.b16 %v637, %v633
    %v674 = vpack.c.b16 %v638, %v634
    %v675 = vpack.c.b16 %v643, %v639
    %v676 = vpack.c.b16 %v644, %v640
    %v677 = vpack.c.b16 %v645, %v641
    %v678 = vpack.c.b16 %v646, %v642
    %711 = vmatpush.bf16.msra.mxu0 %v675
    %712 = vmatpush.bf16.msra.mxu0 %v671
    %713 = vmatpush.bf16.msra.mxu0 %v667
    %714 = vmatpush.bf16.msra.mxu0 %v663
    %715 = vmatpush.bf16.msra.mxu0 %v659
    %716 = vmatpush.bf16.msra.mxu0 %v655
    %717 = vmatpush.bf16.msra.mxu0 %v651
    %718 = vmatpush.bf16.msra.mxu0 %v647
    %719 = vmatmul.bf16.gmra.mxu0 0
    %v720 = vpop.f32.mrf.mxu0
    %v721 = vadd.f32 0.0, %v720
    %v722 = vpop.f32.mrf.mxu0
    %723 = vdwg.mxu0
    %724 = vmatpush.bf16.msra.mxu0 %v676
    %725 = vmatpush.bf16.msra.mxu0 %v672
    %726 = vmatpush.bf16.msra.mxu0 %v668
    %727 = vmatpush.bf16.msra.mxu0 %v664
    %728 = vmatpush.bf16.msra.mxu0 %v660
    %729 = vmatpush.bf16.msra.mxu0 %v656
    %730 = vmatpush.bf16.msra.mxu0 %v652
    %731 = vmatpush.bf16.msra.mxu0 %v648
    %732 = vmatmul.bf16.gmra.mxu0 0
    %v733 = vpop.f32.mrf.mxu0
    %v734 = vadd.f32 0.0, %v733
    %v735 = vpop.f32.mrf.mxu0
    %736 = vdwg.mxu0
    %737 = vmatpush.bf16.msra.mxu0 %v677
    %738 = vmatpush.bf16.msra.mxu0 %v673
    %739 = vmatpush.bf16.msra.mxu0 %v669
    %740 = vmatpush.bf16.msra.mxu0 %v665
    %741 = vmatpush.bf16.msra.mxu0 %v661
    %742 = vmatpush.bf16.msra.mxu0 %v657
    %743 = vmatpush.bf16.msra.mxu0 %v653
    %744 = vmatpush.bf16.msra.mxu0 %v649
    %745 = vmatmul.bf16.gmra.mxu0 0
    %v746 = vpop.f32.mrf.mxu0
    %v747 = vadd.f32 0.0, %v746
    %v748 = vpop.f32.mrf.mxu0
    %749 = vdwg.mxu0
    %750 = vmatpush.bf16.msra.mxu0 %v678
    %751 = vmatpush.bf16.msra.mxu0 %v674
    %752 = vmatpush.bf16.msra.mxu0 %v670
    %753 = vmatpush.bf16.msra.mxu0 %v666
    %754 = vmatpush.bf16.msra.mxu0 %v662
    %755 = vmatpush.bf16.msra.mxu0 %v658
    %756 = vmatpush.bf16.msra.mxu0 %v654
    %757 = vmatpush.bf16.msra.mxu0 %v650
    %758 = vmatmul.bf16.gmra.mxu0 0
    %v759 = vpop.f32.mrf.mxu0
    %v760 = vadd.f32 0.0, %v759
    %v761 = vpop.f32.mrf.mxu0
    %762 = vdwg.mxu0
    %v763 = vadd.f32 %v511, %v721
    %v764 = vadd.f32 %v512, %v734
    %v765 = vadd.f32 %v513, %v747
    %v766 = vadd.f32 %v514, %v760
    %v767 = vxor.u32 %v763, 2147483648
    %v768 = vxor.u32 %v764, 2147483648
    %v769 = vxor.u32 %v765, 2147483648
    %v770 = vmul.f32 %v767, 1.442695
    %v771 = vpow.pop %v770
    %v772 = vmul.f32 %v768, 1.442695
    %v773 = vpow.pop %v772
    %v774 = vmul.f32 %v769, 1.442695
    %v775 = vpow.pop %v774
    %v776 = vadd.f32 %v771, 1.0
    %v777 = vadd.f32 %v773, 1.0
    %v778 = vadd.f32 %v775, 1.0
    %v779 = vrcp.pop %v776
    %v780 = vmul.f32 %v776, %v779
    %v781 = vsub.f32 1.0, %v780
    %v782 = vmul.f32 %v779, %v781
    %v783 = vadd.f32 %v779, %v782
    %vm784 = vweird.f32 %v776
    %vm785 = vweird.f32 %v779
    %vm786 = vmor %vm784, %vm785
    %v787 = vsel %vm786, %v779, %v783
    %v788 = vand.u32 2147483647, %v776
    %vm789 = vcmp.eq.f32.partialorder %v788, 8.507059e+37
    %v790 = vand.u32 %v776, 2147483648
    %v791 = vor.u32 1.1754944e-38, %v790
    %v792 = vsel %vm789, %v791, %v787
    %v793 = vmul.f32 1.0, %v792
    %v794 = vrcp.pop %v777
    %v795 = vmul.f32 %v777, %v794
    %v796 = vsub.f32 1.0, %v795
    %v797 = vmul.f32 %v794, %v796
    %v798 = vadd.f32 %v794, %v797
    %vm799 = vweird.f32 %v777
    %vm800 = vweird.f32 %v794
    %vm801 = vmor %vm799, %vm800
    %v802 = vsel %vm801, %v794, %v798
    %v803 = vand.u32 2147483647, %v777
    %vm804 = vcmp.eq.f32.partialorder %v803, 8.507059e+37
    %v805 = vand.u32 %v777, 2147483648
    %v806 = vor.u32 1.1754944e-38, %v805
    %v807 = vsel %vm804, %v806, %v802
    %v808 = vmul.f32 1.0, %v807
    %v809 = vrcp.pop %v778
    %v810 = vmul.f32 %v778, %v809
    %v811 = vsub.f32 1.0, %v810
    %v812 = vmul.f32 %v809, %v811
    %v813 = vadd.f32 %v809, %v812
    %vm814 = vweird.f32 %v778
    %vm815 = vweird.f32 %v809
    %vm816 = vmor %vm814, %vm815
    %v817 = vsel %vm816, %v809, %v813
    %v818 = vand.u32 2147483647, %v778
    %vm819 = vcmp.eq.f32.partialorder %v818, 8.507059e+37
    %v820 = vand.u32 %v778, 2147483648
    %v821 = vor.u32 1.1754944e-38, %v820
    %v822 = vsel %vm819, %v821, %v817
    %v823 = vmul.f32 1.0, %v822
    %v824 = vtanh.pop %v766
    %v825 = vmul.f32 %v808, 0.0
    %v826 = vmul.f32 %v793, %v824
    %v827 = vadd.f32 %v825, %v826
    %v828 = vtanh.pop %v827
    %v829 = vmul.f32 %v823, %v828
    %v830 = vld [vmem:[#allocation6] sm:$0xff]
    %v831 = vld [vmem:[#allocation6 + $0x8] sm:$0xff]
    %v832 = vld [vmem:[#allocation6 + $0x10] sm:$0xff]
    %v833 = vld [vmem:[#allocation6 + $0x18] sm:$0xff]
    %v834 = vld [vmem:[#allocation6 + $0x20] sm:$0xff]
    %v835 = vld [vmem:[#allocation6 + $0x28] sm:$0xff]
    %v836 = vld [vmem:[#allocation6 + $0x30] sm:$0xff]
    %v837 = vld [vmem:[#allocation6 + $0x38] sm:$0xff]
    %v838 = vld [vmem:[#allocation6 + $0x40] sm:$0xff]
    %v839 = vld [vmem:[#allocation6 + $0x48] sm:$0xff]
    %v840 = vld [vmem:[#allocation6 + $0x50] sm:$0xff]
    %v841 = vld [vmem:[#allocation6 + $0x58] sm:$0xff]
    %v842 = vld [vmem:[#allocation6 + $0x60] sm:$0xff]
    %v843 = vld [vmem:[#allocation6 + $0x68] sm:$0xff]
    %v844 = vld [vmem:[#allocation6 + $0x70] sm:$0xff]
    %v845 = vld [vmem:[#allocation6 + $0x78] sm:$0xff]
    %v846 = vld [vmem:[#allocation6 + $0x80] sm:$0xff]
    %v847 = vld [vmem:[#allocation6 + $0x88] sm:$0xff]
    %v848 = vld [vmem:[#allocation6 + $0x90] sm:$0xff]
    %v849 = vld [vmem:[#allocation6 + $0x98] sm:$0xff]
    %v850 = vld [vmem:[#allocation6 + $0xa0] sm:$0xff]
    %v851 = vld [vmem:[#allocation6 + $0xa8] sm:$0xff]
    %v852 = vld [vmem:[#allocation6 + $0xb0] sm:$0xff]
    %v853 = vld [vmem:[#allocation6 + $0xb8] sm:$0xff]
    %v854 = vld [vmem:[#allocation6 + $0xc0] sm:$0xff]
    %v855 = vld [vmem:[#allocation6 + $0xc8] sm:$0xff]
    %v856 = vld [vmem:[#allocation6 + $0xd0] sm:$0xff]
    %v857 = vld [vmem:[#allocation6 + $0xd8] sm:$0xff]
    %v858 = vld [vmem:[#allocation6 + $0xe0] sm:$0xff]
    %v859 = vld [vmem:[#allocation6 + $0xe8] sm:$0xff]
    %v860 = vld [vmem:[#allocation6 + $0xf0] sm:$0xff]
    %v861 = vld [vmem:[#allocation6 + $0xf8] sm:$0xff]
    %v894 = vunpack.c.l.b16 %v830
    %v895 = vunpack.c.h.b16 %v830
    %v896 = vunpack.c.l.b16 %v831
    %v897 = vunpack.c.h.b16 %v831
    %v898 = vunpack.c.l.b16 %v832
    %v899 = vunpack.c.h.b16 %v832
    %v900 = vunpack.c.l.b16 %v833
    %v901 = vunpack.c.h.b16 %v833
    %v902 = vunpack.c.l.b16 %v834
    %v903 = vunpack.c.h.b16 %v834
    %v904 = vunpack.c.l.b16 %v835
    %v905 = vunpack.c.h.b16 %v835
    %v906 = vunpack.c.l.b16 %v836
    %v907 = vunpack.c.h.b16 %v836
    %v908 = vunpack.c.l.b16 %v837
    %v909 = vunpack.c.h.b16 %v837
    %v910 = vunpack.c.l.b16 %v838
    %v911 = vunpack.c.h.b16 %v838
    %v912 = vunpack.c.l.b16 %v839
    %v913 = vunpack.c.h.b16 %v839
    %v914 = vunpack.c.l.b16 %v840
    %v915 = vunpack.c.h.b16 %v840
    %v916 = vunpack.c.l.b16 %v841
    %v917 = vunpack.c.h.b16 %v841
    %v918 = vunpack.c.l.b16 %v842
    %v919 = vunpack.c.h.b16 %v842
    %v920 = vunpack.c.l.b16 %v843
    %v921 = vunpack.c.h.b16 %v843
    %v922 = vunpack.c.l.b16 %v844
    %v923 = vunpack.c.h.b16 %v844
    %v924 = vunpack.c.l.b16 %v845
    %v925 = vunpack.c.h.b16 %v845
    %v926 = vunpack.c.l.b16 %v846
    %v927 = vunpack.c.h.b16 %v846
    %v928 = vunpack.c.l.b16 %v847
    %v929 = vunpack.c.h.b16 %v847
    %v930 = vunpack.c.l.b16 %v848
    %v931 = vunpack.c.h.b16 %v848
    %v932 = vunpack.c.l.b16 %v849
    %v933 = vunpack.c.h.b16 %v849
    %v934 = vunpack.c.l.b16 %v850
    %v935 = vunpack.c.h.b16 %v850
    %v936 = vunpack.c.l.b16 %v851
    %v937 = vunpack.c.h.b16 %v851
    %v938 = vunpack.c.l.b16 %v852
    %v939 = vunpack.c.h.b16 %v852
    %v940 = vunpack.c.l.b16 %v853
    %v941 = vunpack.c.h.b16 %v853
    %v942 = vunpack.c.l.b16 %v854
    %v943 = vunpack.c.h.b16 %v854
    %v944 = vunpack.c.l.b16 %v855
    %v945 = vunpack.c.h.b16 %v855
    %v946 = vunpack.c.l.b16 %v856
    %v947 = vunpack.c.h.b16 %v856
    %v948 = vunpack.c.l.b16 %v857
    %v949 = vunpack.c.h.b16 %v857
    %v950 = vunpack.c.l.b16 %v858
    %v951 = vunpack.c.h.b16 %v858
    %v952 = vunpack.c.l.b16 %v859
    %v953 = vunpack.c.h.b16 %v859
    %v954 = vunpack.c.l.b16 %v860
    %v955 = vunpack.c.h.b16 %v860
    %v956 = vunpack.c.l.b16 %v861
    %v957 = vunpack.c.h.b16 %v861
    %v958 = vpack.c.b16 %v898, %v894
    %v959 = vpack.c.b16 %v899, %v895
    %v960 = vpack.c.b16 %v900, %v896
    %v961 = vpack.c.b16 %v901, %v897
    %v962 = vpack.c.b16 %v906, %v902
    %v963 = vpack.c.b16 %v907, %v903
    %v964 = vpack.c.b16 %v908, %v904
    %v965 = vpack.c.b16 %v909, %v905
    %v966 = vpack.c.b16 %v914, %v910
    %v967 = vpack.c.b16 %v915, %v911
    %v968 = vpack.c.b16 %v916, %v912
    %v969 = vpack.c.b16 %v917, %v913
    %v970 = vpack.c.b16 %v922, %v918
    %v971 = vpack.c.b16 %v923, %v919
    %v972 = vpack.c.b16 %v924, %v920
    %v973 = vpack.c.b16 %v925, %v921
    %v974 = vpack.c.b16 %v930, %v926
    %v975 = vpack.c.b16 %v931, %v927
    %v976 = vpack.c.b16 %v932, %v928
    %v977 = vpack.c.b16 %v933, %v929
    %v978 = vpack.c.b16 %v938, %v934
    %v979 = vpack.c.b16 %v939, %v935
    %v980 = vpack.c.b16 %v940, %v936
    %v981 = vpack.c.b16 %v941, %v937
    %v982 = vpack.c.b16 %v946, %v942
    %v983 = vpack.c.b16 %v947, %v943
    %v984 = vpack.c.b16 %v948, %v944
    %v985 = vpack.c.b16 %v949, %v945
    %v986 = vpack.c.b16 %v954, %v950
    %v987 = vpack.c.b16 %v955, %v951
    %v988 = vpack.c.b16 %v956, %v952
    %v989 = vpack.c.b16 %v957, %v953
    %1022 = vmatpush.bf16.msra.mxu0 %v986
    %1023 = vmatpush.bf16.msra.mxu0 %v982
    %1024 = vmatpush.bf16.msra.mxu0 %v978
    %1025 = vmatpush.bf16.msra.mxu0 %v974
    %1026 = vmatpush.bf16.msra.mxu0 %v970
    %1027 = vmatpush.bf16.msra.mxu0 %v966
    %1028 = vmatpush.bf16.msra.mxu0 %v962
    %1029 = vmatpush.bf16.msra.mxu0 %v958
    %1030 = vmatmul.bf16.gmra.mxu0 0
    %v1031 = vpop.f32.mrf.mxu0
    %v1032 = vadd.f32 0.0, %v1031
    %v1033 = vpop.f32.mrf.mxu0
    %1034 = vdwg.mxu0
    %1035 = vmatpush.bf16.msra.mxu0 %v987
    %1036 = vmatpush.bf16.msra.mxu0 %v983
    %1037 = vmatpush.bf16.msra.mxu0 %v979
    %1038 = vmatpush.bf16.msra.mxu0 %v975
    %1039 = vmatpush.bf16.msra.mxu0 %v971
    %1040 = vmatpush.bf16.msra.mxu0 %v967
    %1041 = vmatpush.bf16.msra.mxu0 %v963
    %1042 = vmatpush.bf16.msra.mxu0 %v959
    %1043 = vmatmul.bf16.gmra.mxu0 0
    %v1044 = vpop.f32.mrf.mxu0
    %v1045 = vadd.f32 0.0, %v1044
    %v1046 = vpop.f32.mrf.mxu0
    %1047 = vdwg.mxu0
    %1048 = vmatpush.bf16.msra.mxu0 %v988
    %1049 = vmatpush.bf16.msra.mxu0 %v984
    %1050 = vmatpush.bf16.msra.mxu0 %v980
    %1051 = vmatpush.bf16.msra.mxu0 %v976
    %1052 = vmatpush.bf16.msra.mxu0 %v972
    %1053 = vmatpush.bf16.msra.mxu0 %v968
    %1054 = vmatpush.bf16.msra.mxu0 %v964
    %1055 = vmatpush.bf16.msra.mxu0 %v960
    %1056 = vmatmul.bf16.gmra.mxu0 0
    %v1057 = vpop.f32.mrf.mxu0
    %v1058 = vadd.f32 0.0, %v1057
    %v1059 = vpop.f32.mrf.mxu0
    %1060 = vdwg.mxu0
    %1061 = vmatpush.bf16.msra.mxu0 %v989
    %1062 = vmatpush.bf16.msra.mxu0 %v985
    %1063 = vmatpush.bf16.msra.mxu0 %v981
    %1064 = vmatpush.bf16.msra.mxu0 %v977
    %1065 = vmatpush.bf16.msra.mxu0 %v973
    %1066 = vmatpush.bf16.msra.mxu0 %v969
    %1067 = vmatpush.bf16.msra.mxu0 %v965
    %1068 = vmatpush.bf16.msra.mxu0 %v961
    %1069 = vmatmul.bf16.gmra.mxu0 0
    %v1070 = vpop.f32.mrf.mxu0
    %v1071 = vadd.f32 0.0, %v1070
    %v1072 = vpop.f32.mrf.mxu0
    %1073 = vdwg.mxu0
    %v1074 = vadd.f32 %v515, %v1032
    %v1075 = vadd.f32 %v516, %v1045
    %v1076 = vadd.f32 %v517, %v1058
    %v1077 = vadd.f32 %v518, %v1071
    %v1078 = vxor.u32 %v1074, 2147483648
    %v1079 = vxor.u32 %v1075, 2147483648
    %v1080 = vxor.u32 %v1076, 2147483648
    %v1081 = vmul.f32 %v1078, 1.442695
    %v1082 = vpow.pop %v1081
    %v1083 = vmul.f32 %v1079, 1.442695
    %v1084 = vpow.pop %v1083
    %v1085 = vmul.f32 %v1080, 1.442695
    %v1086 = vpow.pop %v1085
    %v1087 = vadd.f32 %v1082, 1.0
    %v1088 = vadd.f32 %v1084, 1.0
    %v1089 = vadd.f32 %v1086, 1.0
    %v1090 = vrcp.pop %v1087
    %v1091 = vmul.f32 %v1087, %v1090
    %v1092 = vsub.f32 1.0, %v1091
    %v1093 = vmul.f32 %v1090, %v1092
    %v1094 = vadd.f32 %v1090, %v1093
    %vm1095 = vweird.f32 %v1087
    %vm1096 = vweird.f32 %v1090
    %vm1097 = vmor %vm1095, %vm1096
    %v1098 = vsel %vm1097, %v1090, %v1094
    %v1099 = vand.u32 2147483647, %v1087
    %vm1100 = vcmp.eq.f32.partialorder %v1099, 8.507059e+37
    %v1101 = vand.u32 %v1087, 2147483648
    %v1102 = vor.u32 1.1754944e-38, %v1101
    %v1103 = vsel %vm1100, %v1102, %v1098
    %v1104 = vmul.f32 1.0, %v1103
    %v1105 = vrcp.pop %v1088
    %v1106 = vmul.f32 %v1088, %v1105
    %v1107 = vsub.f32 1.0, %v1106
    %v1108 = vmul.f32 %v1105, %v1107
    %v1109 = vadd.f32 %v1105, %v1108
    %vm1110 = vweird.f32 %v1088
    %vm1111 = vweird.f32 %v1105
    %vm1112 = vmor %vm1110, %vm1111
    %v1113 = vsel %vm1112, %v1105, %v1109
    %v1114 = vand.u32 2147483647, %v1088
    %vm1115 = vcmp.eq.f32.partialorder %v1114, 8.507059e+37
    %v1116 = vand.u32 %v1088, 2147483648
    %v1117 = vor.u32 1.1754944e-38, %v1116
    %v1118 = vsel %vm1115, %v1117, %v1113
    %v1119 = vmul.f32 1.0, %v1118
    %v1120 = vrcp.pop %v1089
    %v1121 = vmul.f32 %v1089, %v1120
    %v1122 = vsub.f32 1.0, %v1121
    %v1123 = vmul.f32 %v1120, %v1122
    %v1124 = vadd.f32 %v1120, %v1123
    %vm1125 = vweird.f32 %v1089
    %vm1126 = vweird.f32 %v1120
    %vm1127 = vmor %vm1125, %vm1126
    %v1128 = vsel %vm1127, %v1120, %v1124
    %v1129 = vand.u32 2147483647, %v1089
    %vm1130 = vcmp.eq.f32.partialorder %v1129, 8.507059e+37
    %v1131 = vand.u32 %v1089, 2147483648
    %v1132 = vor.u32 1.1754944e-38, %v1131
    %v1133 = vsel %vm1130, %v1132, %v1128
    %v1134 = vmul.f32 1.0, %v1133
    %v1135 = vtanh.pop %v1077
    %v1136 = vmul.f32 %v1119, 0.0
    %v1137 = vmul.f32 %v1104, %v1135
    %v1138 = vadd.f32 %v1136, %v1137
    %v1139 = vtanh.pop %v1138
    %v1140 = vmul.f32 %v1134, %v1139
    %v1141 = vadd.f32 %v829, 0.0
    %v1142 = vadd.f32 %v1140, 0.0
    %v1143 = vld [vmem:[#allocation2 + $0x40] sm:$0xff]
    %v1144 = vld [vmem:[#allocation2 + $0x48] sm:$0xff]
    %v1145 = vld [vmem:[#allocation2 + $0x50] sm:$0xff]
    %v1146 = vld [vmem:[#allocation2 + $0x58] sm:$0xff]
    %v1147 = vld [vmem:[#allocation2 + $0x1a0] sm:$0xff]
    %v1148 = vld [vmem:[#allocation2 + $0x1a8] sm:$0xff]
    %v1149 = vld [vmem:[#allocation2 + $0x1b0] sm:$0xff]
    %v1150 = vld [vmem:[#allocation2 + $0x1b8] sm:$0xff]
    %v1151 = vpack.c.bf16 %v829, %v829
    %1152 = vmatpush.bf16.msra.mxu0 %v675
    %1153 = vmatpush.bf16.msra.mxu0 %v671
    %1154 = vmatpush.bf16.msra.mxu0 %v667
    %1155 = vmatpush.bf16.msra.mxu0 %v663
    %1156 = vmatpush.bf16.msra.mxu0 %v659
    %1157 = vmatpush.bf16.msra.mxu0 %v655
    %1158 = vmatpush.bf16.msra.mxu0 %v651
    %1159 = vmatpush.bf16.msra.mxu0 %v647
    %1160 = vmatmul.bf16.gmra.mxu0 %v1151
    %v1161 = vpop.f32.mrf.mxu0
    %v1162 = vadd.f32 0.0, %v1161
    %v1163 = vpop.f32.mrf.mxu0
    %1164 = vdwg.mxu0
    %1165 = vmatpush.bf16.msra.mxu0 %v676
    %1166 = vmatpush.bf16.msra.mxu0 %v672
    %1167 = vmatpush.bf16.msra.mxu0 %v668
    %1168 = vmatpush.bf16.msra.mxu0 %v664
    %1169 = vmatpush.bf16.msra.mxu0 %v660
    %1170 = vmatpush.bf16.msra.mxu0 %v656
    %1171 = vmatpush.bf16.msra.mxu0 %v652
    %1172 = vmatpush.bf16.msra.mxu0 %v648
    %1173 = vmatmul.bf16.gmra.mxu0 %v1151
    %v1174 = vpop.f32.mrf.mxu0
    %v1175 = vadd.f32 0.0, %v1174
    %v1176 = vpop.f32.mrf.mxu0
    %1177 = vdwg.mxu0
    %1178 = vmatpush.bf16.msra.mxu0 %v677
    %1179 = vmatpush.bf16.msra.mxu0 %v673
    %1180 = vmatpush.bf16.msra.mxu0 %v669
    %1181 = vmatpush.bf16.msra.mxu0 %v665
    %1182 = vmatpush.bf16.msra.mxu0 %v661
    %1183 = vmatpush.bf16.msra.mxu0 %v657
    %1184 = vmatpush.bf16.msra.mxu0 %v653
    %1185 = vmatpush.bf16.msra.mxu0 %v649
    %1186 = vmatmul.bf16.gmra.mxu0 %v1151
    %v1187 = vpop.f32.mrf.mxu0
    %v1188 = vadd.f32 0.0, %v1187
    %v1189 = vpop.f32.mrf.mxu0
    %1190 = vdwg.mxu0
    %1191 = vmatpush.bf16.msra.mxu0 %v678
    %1192 = vmatpush.bf16.msra.mxu0 %v674
    %1193 = vmatpush.bf16.msra.mxu0 %v670
    %1194 = vmatpush.bf16.msra.mxu0 %v666
    %1195 = vmatpush.bf16.msra.mxu0 %v662
    %1196 = vmatpush.bf16.msra.mxu0 %v658
    %1197 = vmatpush.bf16.msra.mxu0 %v654
    %1198 = vmatpush.bf16.msra.mxu0 %v650
    %1199 = vmatmul.bf16.gmra.mxu0 %v1151
    %v1200 = vpop.f32.mrf.mxu0
    %v1201 = vadd.f32 0.0, %v1200
    %v1202 = vpop.f32.mrf.mxu0
    %1203 = vdwg.mxu0
    %v1204 = vadd.f32 %v1143, %v1162
    %v1205 = vadd.f32 %v1144, %v1175
    %v1206 = vadd.f32 %v1145, %v1188
    %v1207 = vadd.f32 %v1146, %v1201
    %v1208 = vxor.u32 %v1204, 2147483648
    %v1209 = vxor.u32 %v1205, 2147483648
    %v1210 = vxor.u32 %v1206, 2147483648
    %v1211 = vmul.f32 %v1208, 1.442695
    %v1212 = vpow.pop %v1211
    %v1213 = vmul.f32 %v1209, 1.442695
    %v1214 = vpow.pop %v1213
    %v1215 = vmul.f32 %v1210, 1.442695
    %v1216 = vpow.pop %v1215
    %v1217 = vadd.f32 %v1212, 1.0
    %v1218 = vadd.f32 %v1214, 1.0
    %v1219 = vadd.f32 %v1216, 1.0
    %v1220 = vrcp.pop %v1217
    %v1221 = vmul.f32 %v1217, %v1220
    %v1222 = vsub.f32 1.0, %v1221
    %v1223 = vmul.f32 %v1220, %v1222
    %v1224 = vadd.f32 %v1220, %v1223
    %vm1225 = vweird.f32 %v1217
    %vm1226 = vweird.f32 %v1220
    %vm1227 = vmor %vm1225, %vm1226
    %v1228 = vsel %vm1227, %v1220, %v1224
    %v1229 = vand.u32 2147483647, %v1217
    %vm1230 = vcmp.eq.f32.partialorder %v1229, 8.507059e+37
    %v1231 = vand.u32 %v1217, 2147483648
    %v1232 = vor.u32 1.1754944e-38, %v1231
    %v1233 = vsel %vm1230, %v1232, %v1228
    %v1234 = vmul.f32 1.0, %v1233
    %v1235 = vrcp.pop %v1218
    %v1236 = vmul.f32 %v1218, %v1235
    %v1237 = vsub.f32 1.0, %v1236
    %v1238 = vmul.f32 %v1235, %v1237
    %v1239 = vadd.f32 %v1235, %v1238
    %vm1240 = vweird.f32 %v1218
    %vm1241 = vweird.f32 %v1235
    %vm1242 = vmor %vm1240, %vm1241
    %v1243 = vsel %vm1242, %v1235, %v1239
    %v1244 = vand.u32 2147483647, %v1218
    %vm1245 = vcmp.eq.f32.partialorder %v1244, 8.507059e+37
    %v1246 = vand.u32 %v1218, 2147483648
    %v1247 = vor.u32 1.1754944e-38, %v1246
    %v1248 = vsel %vm1245, %v1247, %v1243
    %v1249 = vmul.f32 1.0, %v1248
    %v1250 = vrcp.pop %v1219
    %v1251 = vmul.f32 %v1219, %v1250
    %v1252 = vsub.f32 1.0, %v1251
    %v1253 = vmul.f32 %v1250, %v1252
    %v1254 = vadd.f32 %v1250, %v1253
    %vm1255 = vweird.f32 %v1219
    %vm1256 = vweird.f32 %v1250
    %vm1257 = vmor %vm1255, %vm1256
    %v1258 = vsel %vm1257, %v1250, %v1254
    %v1259 = vand.u32 2147483647, %v1219
    %vm1260 = vcmp.eq.f32.partialorder %v1259, 8.507059e+37
    %v1261 = vand.u32 %v1219, 2147483648
    %v1262 = vor.u32 1.1754944e-38, %v1261
    %v1263 = vsel %vm1260, %v1262, %v1258
    %v1264 = vmul.f32 1.0, %v1263
    %v1265 = vtanh.pop %v1207
    %v1266 = vmul.f32 %v1249, %v827
    %v1267 = vmul.f32 %v1234, %v1265
    %v1268 = vadd.f32 %v1266, %v1267
    %v1269 = vtanh.pop %v1268
    %v1270 = vmul.f32 %v1264, %v1269
    %v1271 = vpack.c.bf16 %v1140, %v1140
    %1272 = vmatpush.bf16.msra.mxu0 %v986
    %1273 = vmatpush.bf16.msra.mxu0 %v982
    %1274 = vmatpush.bf16.msra.mxu0 %v978
    %1275 = vmatpush.bf16.msra.mxu0 %v974
    %1276 = vmatpush.bf16.msra.mxu0 %v970
    %1277 = vmatpush.bf16.msra.mxu0 %v966
    %1278 = vmatpush.bf16.msra.mxu0 %v962
    %1279 = vmatpush.bf16.msra.mxu0 %v958
    %1280 = vmatmul.bf16.gmra.mxu0 %v1271
    %v1281 = vpop.f32.mrf.mxu0
    %v1282 = vadd.f32 0.0, %v1281
    %v1283 = vpop.f32.mrf.mxu0
    %1284 = vdwg.mxu0
    %1285 = vmatpush.bf16.msra.mxu0 %v987
    %1286 = vmatpush.bf16.msra.mxu0 %v983
    %1287 = vmatpush.bf16.msra.mxu0 %v979
    %1288 = vmatpush.bf16.msra.mxu0 %v975
    %1289 = vmatpush.bf16.msra.mxu0 %v971
    %1290 = vmatpush.bf16.msra.mxu0 %v967
    %1291 = vmatpush.bf16.msra.mxu0 %v963
    %1292 = vmatpush.bf16.msra.mxu0 %v959
    %1293 = vmatmul.bf16.gmra.mxu0 %v1271
    %v1294 = vpop.f32.mrf.mxu0
    %v1295 = vadd.f32 0.0, %v1294
    %v1296 = vpop.f32.mrf.mxu0
    %1297 = vdwg.mxu0
    %1298 = vmatpush.bf16.msra.mxu0 %v988
    %1299 = vmatpush.bf16.msra.mxu0 %v984
    %1300 = vmatpush.bf16.msra.mxu0 %v980
    %1301 = vmatpush.bf16.msra.mxu0 %v976
    %1302 = vmatpush.bf16.msra.mxu0 %v972
    %1303 = vmatpush.bf16.msra.mxu0 %v968
    %1304 = vmatpush.bf16.msra.mxu0 %v964
    %1305 = vmatpush.bf16.msra.mxu0 %v960
    %1306 = vmatmul.bf16.gmra.mxu0 %v1271
    %v1307 = vpop.f32.mrf.mxu0
    %v1308 = vadd.f32 0.0, %v1307
    %v1309 = vpop.f32.mrf.mxu0
    %1310 = vdwg.mxu0
    %1311 = vmatpush.bf16.msra.mxu0 %v989
    %1312 = vmatpush.bf16.msra.mxu0 %v985
    %1313 = vmatpush.bf16.msra.mxu0 %v981
    %1314 = vmatpush.bf16.msra.mxu0 %v977
    %1315 = vmatpush.bf16.msra.mxu0 %v973
    %1316 = vmatpush.bf16.msra.mxu0 %v969
    %1317 = vmatpush.bf16.msra.mxu0 %v965
    %1318 = vmatpush.bf16.msra.mxu0 %v961
    %1319 = vmatmul.bf16.gmra.mxu0 %v1271
    %v1320 = vpop.f32.mrf.mxu0
    %v1321 = vadd.f32 0.0, %v1320
    %v1322 = vpop.f32.mrf.mxu0
    %1323 = vdwg.mxu0
    %v1324 = vadd.f32 %v1147, %v1282
    %v1325 = vadd.f32 %v1148, %v1295
    %v1326 = vadd.f32 %v1149, %v1308
    %v1327 = vadd.f32 %v1150, %v1321
    %v1328 = vxor.u32 %v1324, 2147483648
    %v1329 = vxor.u32 %v1325, 2147483648
    %v1330 = vxor.u32 %v1326, 2147483648
    %v1331 = vmul.f32 %v1328, 1.442695
    %v1332 = vpow.pop %v1331
    %v1333 = vmul.f32 %v1329, 1.442695
    %v1334 = vpow.pop %v1333
    %v1335 = vmul.f32 %v1330, 1.442695
    %v1336 = vpow.pop %v1335
    %v1337 = vadd.f32 %v1332, 1.0
    %v1338 = vadd.f32 %v1334, 1.0
    %v1339 = vadd.f32 %v1336, 1.0
    %v1340 = vrcp.pop %v1337
    %v1341 = vmul.f32 %v1337, %v1340
    %v1342 = vsub.f32 1.0, %v1341
    %v1343 = vmul.f32 %v1340, %v1342
    %v1344 = vadd.f32 %v1340, %v1343
    %vm1345 = vweird.f32 %v1337
    %vm1346 = vweird.f32 %v1340
    %vm1347 = vmor %vm1345, %vm1346
    %v1348 = vsel %vm1347, %v1340, %v1344
    %v1349 = vand.u32 2147483647, %v1337
    %vm1350 = vcmp.eq.f32.partialorder %v1349, 8.507059e+37
    %v1351 = vand.u32 %v1337, 2147483648
    %v1352 = vor.u32 1.1754944e-38, %v1351
    %v1353 = vsel %vm1350, %v1352, %v1348
    %v1354 = vmul.f32 1.0, %v1353
    %v1355 = vrcp.pop %v1338
    %v1356 = vmul.f32 %v1338, %v1355
    %v1357 = vsub.f32 1.0, %v1356
    %v1358 = vmul.f32 %v1355, %v1357
    %v1359 = vadd.f32 %v1355, %v1358
    %vm1360 = vweird.f32 %v1338
    %vm1361 = vweird.f32 %v1355
    %vm1362 = vmor %vm1360, %vm1361
    %v1363 = vsel %vm1362, %v1355, %v1359
    %v1364 = vand.u32 2147483647, %v1338
    %vm1365 = vcmp.eq.f32.partialorder %v1364, 8.507059e+37
    %v1366 = vand.u32 %v1338, 2147483648
    %v1367 = vor.u32 1.1754944e-38, %v1366
    %v1368 = vsel %vm1365, %v1367, %v1363
    %v1369 = vmul.f32 1.0, %v1368
    %v1370 = vrcp.pop %v1339
    %v1371 = vmul.f32 %v1339, %v1370
    %v1372 = vsub.f32 1.0, %v1371
    %v1373 = vmul.f32 %v1370, %v1372
    %v1374 = vadd.f32 %v1370, %v1373
    %vm1375 = vweird.f32 %v1339
    %vm1376 = vweird.f32 %v1370
    %vm1377 = vmor %vm1375, %vm1376
    %v1378 = vsel %vm1377, %v1370, %v1374
    %v1379 = vand.u32 2147483647, %v1339
    %vm1380 = vcmp.eq.f32.partialorder %v1379, 8.507059e+37
    %v1381 = vand.u32 %v1339, 2147483648
    %v1382 = vor.u32 1.1754944e-38, %v1381
    %v1383 = vsel %vm1380, %v1382, %v1378
    %v1384 = vmul.f32 1.0, %v1383
    %v1385 = vtanh.pop %v1327
    %v1386 = vmul.f32 %v1369, %v1138
    %v1387 = vmul.f32 %v1354, %v1385
    %v1388 = vadd.f32 %v1386, %v1387
    %v1389 = vtanh.pop %v1388
    %v1390 = vmul.f32 %v1384, %v1389
    %v1391 = vadd.f32 %v1141, %v1270
    %v1392 = vadd.f32 %v1142, %v1390
    %v1393 = vld [vmem:[#allocation2 + $0x80] sm:$0xff]
    %v1394 = vld [vmem:[#allocation2 + $0x88] sm:$0xff]
    %v1395 = vld [vmem:[#allocation2 + $0x90] sm:$0xff]
    %v1396 = vld [vmem:[#allocation2 + $0x98] sm:$0xff]
    %v1397 = vld [vmem:[#allocation2 + $0x160] sm:$0xff]
    %v1398 = vld [vmem:[#allocation2 + $0x168] sm:$0xff]
    %v1399 = vld [vmem:[#allocation2 + $0x170] sm:$0xff]
    %v1400 = vld [vmem:[#allocation2 + $0x178] sm:$0xff]
    %v1401 = vpack.c.bf16 %v1270, %v1270
    %1402 = vmatpush.bf16.msra.mxu0 %v675
    %1403 = vmatpush.bf16.msra.mxu0 %v671
    %1404 = vmatpush.bf16.msra.mxu0 %v667
    %1405 = vmatpush.bf16.msra.mxu0 %v663
    %1406 = vmatpush.bf16.msra.mxu0 %v659
    %1407 = vmatpush.bf16.msra.mxu0 %v655
    %1408 = vmatpush.bf16.msra.mxu0 %v651
    %1409 = vmatpush.bf16.msra.mxu0 %v647
    %1410 = vmatmul.bf16.gmra.mxu0 %v1401
    %v1411 = vpop.f32.mrf.mxu0
    %v1412 = vadd.f32 0.0, %v1411
    %v1413 = vpop.f32.mrf.mxu0
    %1414 = vdwg.mxu0
    %1415 = vmatpush.bf16.msra.mxu0 %v676
    %1416 = vmatpush.bf16.msra.mxu0 %v672
    %1417 = vmatpush.bf16.msra.mxu0 %v668
    %1418 = vmatpush.bf16.msra.mxu0 %v664
    %1419 = vmatpush.bf16.msra.mxu0 %v660
    %1420 = vmatpush.bf16.msra.mxu0 %v656
    %1421 = vmatpush.bf16.msra.mxu0 %v652
    %1422 = vmatpush.bf16.msra.mxu0 %v648
    %1423 = vmatmul.bf16.gmra.mxu0 %v1401
    %v1424 = vpop.f32.mrf.mxu0
    %v1425 = vadd.f32 0.0, %v1424
    %v1426 = vpop.f32.mrf.mxu0
    %1427 = vdwg.mxu0
    %1428 = vmatpush.bf16.msra.mxu0 %v677
    %1429 = vmatpush.bf16.msra.mxu0 %v673
    %1430 = vmatpush.bf16.msra.mxu0 %v669
    %1431 = vmatpush.bf16.msra.mxu0 %v665
    %1432 = vmatpush.bf16.msra.mxu0 %v661
    %1433 = vmatpush.bf16.msra.mxu0 %v657
    %1434 = vmatpush.bf16.msra.mxu0 %v653
    %1435 = vmatpush.bf16.msra.mxu0 %v649
    %1436 = vmatmul.bf16.gmra.mxu0 %v1401
    %v1437 = vpop.f32.mrf.mxu0
    %v1438 = vadd.f32 0.0, %v1437
    %v1439 = vpop.f32.mrf.mxu0
    %1440 = vdwg.mxu0
    %1441 = vmatpush.bf16.msra.mxu0 %v678
    %1442 = vmatpush.bf16.msra.mxu0 %v674
    %1443 = vmatpush.bf16.msra.mxu0 %v670
    %1444 = vmatpush.bf16.msra.mxu0 %v666
    %1445 = vmatpush.bf16.msra.mxu0 %v662
    %1446 = vmatpush.bf16.msra.mxu0 %v658
    %1447 = vmatpush.bf16.msra.mxu0 %v654
    %1448 = vmatpush.bf16.msra.mxu0 %v650
    %1449 = vmatmul.bf16.gmra.mxu0 %v1401
    %v1450 = vpop.f32.mrf.mxu0
    %v1451 = vadd.f32 0.0, %v1450
    %v1452 = vpop.f32.mrf.mxu0
    %1453 = vdwg.mxu0
    %v1454 = vadd.f32 %v1393, %v1412
    %v1455 = vadd.f32 %v1394, %v1425
    %v1456 = vadd.f32 %v1395, %v1438
    %v1457 = vadd.f32 %v1396, %v1451
    %v1458 = vxor.u32 %v1454, 2147483648
    %v1459 = vxor.u32 %v1455, 2147483648
    %v1460 = vxor.u32 %v1456, 2147483648
    %v1461 = vmul.f32 %v1458, 1.442695
    %v1462 = vpow.pop %v1461
    %v1463 = vmul.f32 %v1459, 1.442695
    %v1464 = vpow.pop %v1463
    %v1465 = vmul.f32 %v1460, 1.442695
    %v1466 = vpow.pop %v1465
    %v1467 = vadd.f32 %v1462, 1.0
    %v1468 = vadd.f32 %v1464, 1.0
    %v1469 = vadd.f32 %v1466, 1.0
    %v1470 = vrcp.pop %v1467
    %v1471 = vmul.f32 %v1467, %v1470
    %v1472 = vsub.f32 1.0, %v1471
    %v1473 = vmul.f32 %v1470, %v1472
    %v1474 = vadd.f32 %v1470, %v1473
    %vm1475 = vweird.f32 %v1467
    %vm1476 = vweird.f32 %v1470
    %vm1477 = vmor %vm1475, %vm1476
    %v1478 = vsel %vm1477, %v1470, %v1474
    %v1479 = vand.u32 2147483647, %v1467
    %vm1480 = vcmp.eq.f32.partialorder %v1479, 8.507059e+37
    %v1481 = vand.u32 %v1467, 2147483648
    %v1482 = vor.u32 1.1754944e-38, %v1481
    %v1483 = vsel %vm1480, %v1482, %v1478
    %v1484 = vmul.f32 1.0, %v1483
    %v1485 = vrcp.pop %v1468
    %v1486 = vmul.f32 %v1468, %v1485
    %v1487 = vsub.f32 1.0, %v1486
    %v1488 = vmul.f32 %v1485, %v1487
    %v1489 = vadd.f32 %v1485, %v1488
    %vm1490 = vweird.f32 %v1468
    %vm1491 = vweird.f32 %v1485
    %vm1492 = vmor %vm1490, %vm1491
    %v1493 = vsel %vm1492, %v1485, %v1489
    %v1494 = vand.u32 2147483647, %v1468
    %vm1495 = vcmp.eq.f32.partialorder %v1494, 8.507059e+37
    %v1496 = vand.u32 %v1468, 2147483648
    %v1497 = vor.u32 1.1754944e-38, %v1496
    %v1498 = vsel %vm1495, %v1497, %v1493
    %v1499 = vmul.f32 1.0, %v1498
    %v1500 = vrcp.pop %v1469
    %v1501 = vmul.f32 %v1469, %v1500
    %v1502 = vsub.f32 1.0, %v1501
    %v1503 = vmul.f32 %v1500, %v1502
    %v1504 = vadd.f32 %v1500, %v1503
    %vm1505 = vweird.f32 %v1469
    %vm1506 = vweird.f32 %v1500
    %vm1507 = vmor %vm1505, %vm1506
    %v1508 = vsel %vm1507, %v1500, %v1504
    %v1509 = vand.u32 2147483647, %v1469
    %vm1510 = vcmp.eq.f32.partialorder %v1509, 8.507059e+37
    %v1511 = vand.u32 %v1469, 2147483648
    %v1512 = vor.u32 1.1754944e-38, %v1511
    %v1513 = vsel %vm1510, %v1512, %v1508
    %v1514 = vmul.f32 1.0, %v1513
    %v1515 = vtanh.pop %v1457
    %v1516 = vmul.f32 %v1499, %v1268
    %v1517 = vmul.f32 %v1484, %v1515
    %v1518 = vadd.f32 %v1516, %v1517
    %v1519 = vtanh.pop %v1518
    %v1520 = vmul.f32 %v1514, %v1519
    %v1521 = vpack.c.bf16 %v1390, %v1390
    %1522 = vmatpush.bf16.msra.mxu0 %v986
    %1523 = vmatpush.bf16.msra.mxu0 %v982
    %1524 = vmatpush.bf16.msra.mxu0 %v978
    %1525 = vmatpush.bf16.msra.mxu0 %v974
    %1526 = vmatpush.bf16.msra.mxu0 %v970
    %1527 = vmatpush.bf16.msra.mxu0 %v966
    %1528 = vmatpush.bf16.msra.mxu0 %v962
    %1529 = vmatpush.bf16.msra.mxu0 %v958
    %1530 = vmatmul.bf16.gmra.mxu0 %v1521
    %v1531 = vpop.f32.mrf.mxu0
    %v1532 = vadd.f32 0.0, %v1531
    %v1533 = vpop.f32.mrf.mxu0
    %1534 = vdwg.mxu0
    %1535 = vmatpush.bf16.msra.mxu0 %v987
    %1536 = vmatpush.bf16.msra.mxu0 %v983
    %1537 = vmatpush.bf16.msra.mxu0 %v979
    %1538 = vmatpush.bf16.msra.mxu0 %v975
    %1539 = vmatpush.bf16.msra.mxu0 %v971
    %1540 = vmatpush.bf16.msra.mxu0 %v967
    %1541 = vmatpush.bf16.msra.mxu0 %v963
    %1542 = vmatpush.bf16.msra.mxu0 %v959
    %1543 = vmatmul.bf16.gmra.mxu0 %v1521
    %v1544 = vpop.f32.mrf.mxu0
    %v1545 = vadd.f32 0.0, %v1544
    %v1546 = vpop.f32.mrf.mxu0
    %1547 = vdwg.mxu0
    %1548 = vmatpush.bf16.msra.mxu0 %v988
    %1549 = vmatpush.bf16.msra.mxu0 %v984
    %1550 = vmatpush.bf16.msra.mxu0 %v980
    %1551 = vmatpush.bf16.msra.mxu0 %v976
    %1552 = vmatpush.bf16.msra.mxu0 %v972
    %1553 = vmatpush.bf16.msra.mxu0 %v968
    %1554 = vmatpush.bf16.msra.mxu0 %v964
    %1555 = vmatpush.bf16.msra.mxu0 %v960
    %1556 = vmatmul.bf16.gmra.mxu0 %v1521
    %v1557 = vpop.f32.mrf.mxu0
    %v1558 = vadd.f32 0.0, %v1557
    %v1559 = vpop.f32.mrf.mxu0
    %1560 = vdwg.mxu0
    %1561 = vmatpush.bf16.msra.mxu0 %v989
    %1562 = vmatpush.bf16.msra.mxu0 %v985
    %1563 = vmatpush.bf16.msra.mxu0 %v981
    %1564 = vmatpush.bf16.msra.mxu0 %v977
    %1565 = vmatpush.bf16.msra.mxu0 %v973
    %1566 = vmatpush.bf16.msra.mxu0 %v969
    %1567 = vmatpush.bf16.msra.mxu0 %v965
    %1568 = vmatpush.bf16.msra.mxu0 %v961
    %1569 = vmatmul.bf16.gmra.mxu0 %v1521
    %v1570 = vpop.f32.mrf.mxu0
    %v1571 = vadd.f32 0.0, %v1570
    %v1572 = vpop.f32.mrf.mxu0
    %1573 = vdwg.mxu0
    %v1574 = vadd.f32 %v1397, %v1532
    %v1575 = vadd.f32 %v1398, %v1545
    %v1576 = vadd.f32 %v1399, %v1558
    %v1577 = vadd.f32 %v1400, %v1571
    %v1578 = vxor.u32 %v1574, 2147483648
    %v1579 = vxor.u32 %v1575, 2147483648
    %v1580 = vxor.u32 %v1576, 2147483648
    %v1581 = vmul.f32 %v1578, 1.442695
    %v1582 = vpow.pop %v1581
    %v1583 = vmul.f32 %v1579, 1.442695
    %v1584 = vpow.pop %v1583
    %v1585 = vmul.f32 %v1580, 1.442695
    %v1586 = vpow.pop %v1585
    %v1587 = vadd.f32 %v1582, 1.0
    %v1588 = vadd.f32 %v1584, 1.0
    %v1589 = vadd.f32 %v1586, 1.0
    %v1590 = vrcp.pop %v1587
    %v1591 = vmul.f32 %v1587, %v1590
    %v1592 = vsub.f32 1.0, %v1591
    %v1593 = vmul.f32 %v1590, %v1592
    %v1594 = vadd.f32 %v1590, %v1593
    %vm1595 = vweird.f32 %v1587
    %vm1596 = vweird.f32 %v1590
    %vm1597 = vmor %vm1595, %vm1596
    %v1598 = vsel %vm1597, %v1590, %v1594
    %v1599 = vand.u32 2147483647, %v1587
    %vm1600 = vcmp.eq.f32.partialorder %v1599, 8.507059e+37
    %v1601 = vand.u32 %v1587, 2147483648
    %v1602 = vor.u32 1.1754944e-38, %v1601
    %v1603 = vsel %vm1600, %v1602, %v1598
    %v1604 = vmul.f32 1.0, %v1603
    %v1605 = vrcp.pop %v1588
    %v1606 = vmul.f32 %v1588, %v1605
    %v1607 = vsub.f32 1.0, %v1606
    %v1608 = vmul.f32 %v1605, %v1607
    %v1609 = vadd.f32 %v1605, %v1608
    %vm1610 = vweird.f32 %v1588
    %vm1611 = vweird.f32 %v1605
    %vm1612 = vmor %vm1610, %vm1611
    %v1613 = vsel %vm1612, %v1605, %v1609
    %v1614 = vand.u32 2147483647, %v1588
    %vm1615 = vcmp.eq.f32.partialorder %v1614, 8.507059e+37
    %v1616 = vand.u32 %v1588, 2147483648
    %v1617 = vor.u32 1.1754944e-38, %v1616
    %v1618 = vsel %vm1615, %v1617, %v1613
    %v1619 = vmul.f32 1.0, %v1618
    %v1620 = vrcp.pop %v1589
    %v1621 = vmul.f32 %v1589, %v1620
    %v1622 = vsub.f32 1.0, %v1621
    %v1623 = vmul.f32 %v1620, %v1622
    %v1624 = vadd.f32 %v1620, %v1623
    %vm1625 = vweird.f32 %v1589
    %vm1626 = vweird.f32 %v1620
    %vm1627 = vmor %vm1625, %vm1626
    %v1628 = vsel %vm1627, %v1620, %v1624
    %v1629 = vand.u32 2147483647, %v1589
    %vm1630 = vcmp.eq.f32.partialorder %v1629, 8.507059e+37
    %v1631 = vand.u32 %v1589, 2147483648
    %v1632 = vor.u32 1.1754944e-38, %v1631
    %v1633 = vsel %vm1630, %v1632, %v1628
    %v1634 = vmul.f32 1.0, %v1633
    %v1635 = vtanh.pop %v1577
    %v1636 = vmul.f32 %v1619, %v1388
    %v1637 = vmul.f32 %v1604, %v1635
    %v1638 = vadd.f32 %v1636, %v1637
    %v1639 = vtanh.pop %v1638
    %v1640 = vmul.f32 %v1634, %v1639
    %v1641 = vadd.f32 %v1391, %v1520
    %v1642 = vadd.f32 %v1392, %v1640
    %v1643 = vld [vmem:[#allocation2 + $0xc0] sm:$0xff]
    %v1644 = vld [vmem:[#allocation2 + $0xc8] sm:$0xff]
    %v1645 = vld [vmem:[#allocation2 + $0xd0] sm:$0xff]
    %v1646 = vld [vmem:[#allocation2 + $0xd8] sm:$0xff]
    %v1647 = vld [vmem:[#allocation2 + $0x120] sm:$0xff]
    %v1648 = vld [vmem:[#allocation2 + $0x128] sm:$0xff]
    %v1649 = vld [vmem:[#allocation2 + $0x130] sm:$0xff]
    %v1650 = vld [vmem:[#allocation2 + $0x138] sm:$0xff]
    %v1651 = vpack.c.bf16 %v1520, %v1520
    %1652 = vmatpush.bf16.msra.mxu0 %v675
    %1653 = vmatpush.bf16.msra.mxu0 %v671
    %1654 = vmatpush.bf16.msra.mxu0 %v667
    %1655 = vmatpush.bf16.msra.mxu0 %v663
    %1656 = vmatpush.bf16.msra.mxu0 %v659
    %1657 = vmatpush.bf16.msra.mxu0 %v655
    %1658 = vmatpush.bf16.msra.mxu0 %v651
    %1659 = vmatpush.bf16.msra.mxu0 %v647
    %1660 = vmatmul.bf16.gmra.mxu0 %v1651
    %v1661 = vpop.f32.mrf.mxu0
    %v1662 = vadd.f32 0.0, %v1661
    %v1663 = vpop.f32.mrf.mxu0
    %1664 = vdwg.mxu0
    %1665 = vmatpush.bf16.msra.mxu0 %v676
    %1666 = vmatpush.bf16.msra.mxu0 %v672
    %1667 = vmatpush.bf16.msra.mxu0 %v668
    %1668 = vmatpush.bf16.msra.mxu0 %v664
    %1669 = vmatpush.bf16.msra.mxu0 %v660
    %1670 = vmatpush.bf16.msra.mxu0 %v656
    %1671 = vmatpush.bf16.msra.mxu0 %v652
    %1672 = vmatpush.bf16.msra.mxu0 %v648
    %1673 = vmatmul.bf16.gmra.mxu0 %v1651
    %v1674 = vpop.f32.mrf.mxu0
    %v1675 = vadd.f32 0.0, %v1674
    %v1676 = vpop.f32.mrf.mxu0
    %1677 = vdwg.mxu0
    %1678 = vmatpush.bf16.msra.mxu0 %v677
    %1679 = vmatpush.bf16.msra.mxu0 %v673
    %1680 = vmatpush.bf16.msra.mxu0 %v669
    %1681 = vmatpush.bf16.msra.mxu0 %v665
    %1682 = vmatpush.bf16.msra.mxu0 %v661
    %1683 = vmatpush.bf16.msra.mxu0 %v657
    %1684 = vmatpush.bf16.msra.mxu0 %v653
    %1685 = vmatpush.bf16.msra.mxu0 %v649
    %1686 = vmatmul.bf16.gmra.mxu0 %v1651
    %v1687 = vpop.f32.mrf.mxu0
    %v1688 = vadd.f32 0.0, %v1687
    %v1689 = vpop.f32.mrf.mxu0
    %1690 = vdwg.mxu0
    %1691 = vmatpush.bf16.msra.mxu0 %v678
    %1692 = vmatpush.bf16.msra.mxu0 %v674
    %1693 = vmatpush.bf16.msra.mxu0 %v670
    %1694 = vmatpush.bf16.msra.mxu0 %v666
    %1695 = vmatpush.bf16.msra.mxu0 %v662
    %1696 = vmatpush.bf16.msra.mxu0 %v658
    %1697 = vmatpush.bf16.msra.mxu0 %v654
    %1698 = vmatpush.bf16.msra.mxu0 %v650
    %1699 = vmatmul.bf16.gmra.mxu0 %v1651
    %v1700 = vpop.f32.mrf.mxu0
    %v1701 = vadd.f32 0.0, %v1700
    %v1702 = vpop.f32.mrf.mxu0
    %1703 = vdwg.mxu0
    %v1704 = vadd.f32 %v1643, %v1662
    %v1705 = vadd.f32 %v1644, %v1675
    %v1706 = vadd.f32 %v1645, %v1688
    %v1707 = vadd.f32 %v1646, %v1701
    %v1708 = vxor.u32 %v1704, 2147483648
    %v1709 = vxor.u32 %v1705, 2147483648
    %v1710 = vxor.u32 %v1706, 2147483648
    %v1711 = vmul.f32 %v1708, 1.442695
    %v1712 = vpow.pop %v1711
    %v1713 = vmul.f32 %v1709, 1.442695
    %v1714 = vpow.pop %v1713
    %v1715 = vmul.f32 %v1710, 1.442695
    %v1716 = vpow.pop %v1715
    %v1717 = vadd.f32 %v1712, 1.0
    %v1718 = vadd.f32 %v1714, 1.0
    %v1719 = vadd.f32 %v1716, 1.0
    %v1720 = vrcp.pop %v1717
    %v1721 = vmul.f32 %v1717, %v1720
    %v1722 = vsub.f32 1.0, %v1721
    %v1723 = vmul.f32 %v1720, %v1722
    %v1724 = vadd.f32 %v1720, %v1723
    %vm1725 = vweird.f32 %v1717
    %vm1726 = vweird.f32 %v1720
    %vm1727 = vmor %vm1725, %vm1726
    %v1728 = vsel %vm1727, %v1720, %v1724
    %v1729 = vand.u32 2147483647, %v1717
    %vm1730 = vcmp.eq.f32.partialorder %v1729, 8.507059e+37
    %v1731 = vand.u32 %v1717, 2147483648
    %v1732 = vor.u32 1.1754944e-38, %v1731
    %v1733 = vsel %vm1730, %v1732, %v1728
    %v1734 = vmul.f32 1.0, %v1733
    %v1735 = vrcp.pop %v1718
    %v1736 = vmul.f32 %v1718, %v1735
    %v1737 = vsub.f32 1.0, %v1736
    %v1738 = vmul.f32 %v1735, %v1737
    %v1739 = vadd.f32 %v1735, %v1738
    %vm1740 = vweird.f32 %v1718
    %vm1741 = vweird.f32 %v1735
    %vm1742 = vmor %vm1740, %vm1741
    %v1743 = vsel %vm1742, %v1735, %v1739
    %v1744 = vand.u32 2147483647, %v1718
    %vm1745 = vcmp.eq.f32.partialorder %v1744, 8.507059e+37
    %v1746 = vand.u32 %v1718, 2147483648
    %v1747 = vor.u32 1.1754944e-38, %v1746
    %v1748 = vsel %vm1745, %v1747, %v1743
    %v1749 = vmul.f32 1.0, %v1748
    %v1750 = vrcp.pop %v1719
    %v1751 = vmul.f32 %v1719, %v1750
    %v1752 = vsub.f32 1.0, %v1751
    %v1753 = vmul.f32 %v1750, %v1752
    %v1754 = vadd.f32 %v1750, %v1753
    %vm1755 = vweird.f32 %v1719
    %vm1756 = vweird.f32 %v1750
    %vm1757 = vmor %vm1755, %vm1756
    %v1758 = vsel %vm1757, %v1750, %v1754
    %v1759 = vand.u32 2147483647, %v1719
    %vm1760 = vcmp.eq.f32.partialorder %v1759, 8.507059e+37
    %v1761 = vand.u32 %v1719, 2147483648
    %v1762 = vor.u32 1.1754944e-38, %v1761
    %v1763 = vsel %vm1760, %v1762, %v1758
    %v1764 = vmul.f32 1.0, %v1763
    %v1765 = vtanh.pop %v1707
    %v1766 = vmul.f32 %v1749, %v1518
    %v1767 = vmul.f32 %v1734, %v1765
    %v1768 = vadd.f32 %v1766, %v1767
    %v1769 = vtanh.pop %v1768
    %v1770 = vmul.f32 %v1764, %v1769
    %v1771 = vpack.c.bf16 %v1640, %v1640
    %1772 = vmatpush.bf16.msra.mxu0 %v986
    %1773 = vmatpush.bf16.msra.mxu0 %v982
    %1774 = vmatpush.bf16.msra.mxu0 %v978
    %1775 = vmatpush.bf16.msra.mxu0 %v974
    %1776 = vmatpush.bf16.msra.mxu0 %v970
    %1777 = vmatpush.bf16.msra.mxu0 %v966
    %1778 = vmatpush.bf16.msra.mxu0 %v962
    %1779 = vmatpush.bf16.msra.mxu0 %v958
    %1780 = vmatmul.bf16.gmra.mxu0 %v1771
    %v1781 = vpop.f32.mrf.mxu0
    %v1782 = vadd.f32 0.0, %v1781
    %v1783 = vpop.f32.mrf.mxu0
    %1784 = vdwg.mxu0
    %1785 = vmatpush.bf16.msra.mxu0 %v987
    %1786 = vmatpush.bf16.msra.mxu0 %v983
    %1787 = vmatpush.bf16.msra.mxu0 %v979
    %1788 = vmatpush.bf16.msra.mxu0 %v975
    %1789 = vmatpush.bf16.msra.mxu0 %v971
    %1790 = vmatpush.bf16.msra.mxu0 %v967
    %1791 = vmatpush.bf16.msra.mxu0 %v963
    %1792 = vmatpush.bf16.msra.mxu0 %v959
    %1793 = vmatmul.bf16.gmra.mxu0 %v1771
    %v1794 = vpop.f32.mrf.mxu0
    %v1795 = vadd.f32 0.0, %v1794
    %v1796 = vpop.f32.mrf.mxu0
    %1797 = vdwg.mxu0
    %1798 = vmatpush.bf16.msra.mxu0 %v988
    %1799 = vmatpush.bf16.msra.mxu0 %v984
    %1800 = vmatpush.bf16.msra.mxu0 %v980
    %1801 = vmatpush.bf16.msra.mxu0 %v976
    %1802 = vmatpush.bf16.msra.mxu0 %v972
    %1803 = vmatpush.bf16.msra.mxu0 %v968
    %1804 = vmatpush.bf16.msra.mxu0 %v964
    %1805 = vmatpush.bf16.msra.mxu0 %v960
    %1806 = vmatmul.bf16.gmra.mxu0 %v1771
    %v1807 = vpop.f32.mrf.mxu0
    %v1808 = vadd.f32 0.0, %v1807
    %v1809 = vpop.f32.mrf.mxu0
    %1810 = vdwg.mxu0
    %1811 = vmatpush.bf16.msra.mxu0 %v989
    %1812 = vmatpush.bf16.msra.mxu0 %v985
    %1813 = vmatpush.bf16.msra.mxu0 %v981
    %1814 = vmatpush.bf16.msra.mxu0 %v977
    %1815 = vmatpush.bf16.msra.mxu0 %v973
    %1816 = vmatpush.bf16.msra.mxu0 %v969
    %1817 = vmatpush.bf16.msra.mxu0 %v965
    %1818 = vmatpush.bf16.msra.mxu0 %v961
    %1819 = vmatmul.bf16.gmra.mxu0 %v1771
    %v1820 = vpop.f32.mrf.mxu0
    %v1821 = vadd.f32 0.0, %v1820
    %v1822 = vpop.f32.mrf.mxu0
    %1823 = vdwg.mxu0
    %v1824 = vadd.f32 %v1647, %v1782
    %v1825 = vadd.f32 %v1648, %v1795
    %v1826 = vadd.f32 %v1649, %v1808
    %v1827 = vadd.f32 %v1650, %v1821
    %v1828 = vxor.u32 %v1824, 2147483648
    %v1829 = vxor.u32 %v1825, 2147483648
    %v1830 = vxor.u32 %v1826, 2147483648
    %v1831 = vmul.f32 %v1828, 1.442695
    %v1832 = vpow.pop %v1831
    %v1833 = vmul.f32 %v1829, 1.442695
    %v1834 = vpow.pop %v1833
    %v1835 = vmul.f32 %v1830, 1.442695
    %v1836 = vpow.pop %v1835
    %v1837 = vadd.f32 %v1832, 1.0
    %v1838 = vadd.f32 %v1834, 1.0
    %v1839 = vadd.f32 %v1836, 1.0
    %v1840 = vrcp.pop %v1837
    %v1841 = vmul.f32 %v1837, %v1840
    %v1842 = vsub.f32 1.0, %v1841
    %v1843 = vmul.f32 %v1840, %v1842
    %v1844 = vadd.f32 %v1840, %v1843
    %vm1845 = vweird.f32 %v1837
    %vm1846 = vweird.f32 %v1840
    %vm1847 = vmor %vm1845, %vm1846
    %v1848 = vsel %vm1847, %v1840, %v1844
    %v1849 = vand.u32 2147483647, %v1837
    %vm1850 = vcmp.eq.f32.partialorder %v1849, 8.507059e+37
    %v1851 = vand.u32 %v1837, 2147483648
    %v1852 = vor.u32 1.1754944e-38, %v1851
    %v1853 = vsel %vm1850, %v1852, %v1848
    %v1854 = vmul.f32 1.0, %v1853
    %v1855 = vrcp.pop %v1838
    %v1856 = vmul.f32 %v1838, %v1855
    %v1857 = vsub.f32 1.0, %v1856
    %v1858 = vmul.f32 %v1855, %v1857
    %v1859 = vadd.f32 %v1855, %v1858
    %vm1860 = vweird.f32 %v1838
    %vm1861 = vweird.f32 %v1855
    %vm1862 = vmor %vm1860, %vm1861
    %v1863 = vsel %vm1862, %v1855, %v1859
    %v1864 = vand.u32 2147483647, %v1838
    %vm1865 = vcmp.eq.f32.partialorder %v1864, 8.507059e+37
    %v1866 = vand.u32 %v1838, 2147483648
    %v1867 = vor.u32 1.1754944e-38, %v1866
    %v1868 = vsel %vm1865, %v1867, %v1863
    %v1869 = vmul.f32 1.0, %v1868
    %v1870 = vrcp.pop %v1839
    %v1871 = vmul.f32 %v1839, %v1870
    %v1872 = vsub.f32 1.0, %v1871
    %v1873 = vmul.f32 %v1870, %v1872
    %v1874 = vadd.f32 %v1870, %v1873
    %vm1875 = vweird.f32 %v1839
    %vm1876 = vweird.f32 %v1870
    %vm1877 = vmor %vm1875, %vm1876
    %v1878 = vsel %vm1877, %v1870, %v1874
    %v1879 = vand.u32 2147483647, %v1839
    %vm1880 = vcmp.eq.f32.partialorder %v1879, 8.507059e+37
    %v1881 = vand.u32 %v1839, 2147483648
    %v1882 = vor.u32 1.1754944e-38, %v1881
    %v1883 = vsel %vm1880, %v1882, %v1878
    %v1884 = vmul.f32 1.0, %v1883
    %v1885 = vtanh.pop %v1827
    %v1886 = vmul.f32 %v1869, %v1638
    %v1887 = vmul.f32 %v1854, %v1885
    %v1888 = vadd.f32 %v1886, %v1887
    %v1889 = vtanh.pop %v1888
    %v1890 = vmul.f32 %v1884, %v1889
    %v1891 = vadd.f32 %v1641, %v1770
    %v1892 = vadd.f32 %v1642, %v1890
    %v1893 = vld [vmem:[#allocation2 + $0x100] sm:$0xff]
    %v1894 = vld [vmem:[#allocation2 + $0x108] sm:$0xff]
    %v1895 = vld [vmem:[#allocation2 + $0x110] sm:$0xff]
    %v1896 = vld [vmem:[#allocation2 + $0x118] sm:$0xff]
    %v1897 = vld [vmem:[#allocation2 + $0xe0] sm:$0xff]
    %v1898 = vld [vmem:[#allocation2 + $0xe8] sm:$0xff]
    %v1899 = vld [vmem:[#allocation2 + $0xf0] sm:$0xff]
    %v1900 = vld [vmem:[#allocation2 + $0xf8] sm:$0xff]
    %v1901 = vpack.c.bf16 %v1770, %v1770
    %1902 = vmatpush.bf16.msra.mxu0 %v675
    %1903 = vmatpush.bf16.msra.mxu0 %v671
    %1904 = vmatpush.bf16.msra.mxu0 %v667
    %1905 = vmatpush.bf16.msra.mxu0 %v663
    %1906 = vmatpush.bf16.msra.mxu0 %v659
    %1907 = vmatpush.bf16.msra.mxu0 %v655
    %1908 = vmatpush.bf16.msra.mxu0 %v651
    %1909 = vmatpush.bf16.msra.mxu0 %v647
    %1910 = vmatmul.bf16.gmra.mxu0 %v1901
    %v1911 = vpop.f32.mrf.mxu0
    %v1912 = vadd.f32 0.0, %v1911
    %v1913 = vpop.f32.mrf.mxu0
    %1914 = vdwg.mxu0
    %1915 = vmatpush.bf16.msra.mxu0 %v676
    %1916 = vmatpush.bf16.msra.mxu0 %v672
    %1917 = vmatpush.bf16.msra.mxu0 %v668
    %1918 = vmatpush.bf16.msra.mxu0 %v664
    %1919 = vmatpush.bf16.msra.mxu0 %v660
    %1920 = vmatpush.bf16.msra.mxu0 %v656
    %1921 = vmatpush.bf16.msra.mxu0 %v652
    %1922 = vmatpush.bf16.msra.mxu0 %v648
    %1923 = vmatmul.bf16.gmra.mxu0 %v1901
    %v1924 = vpop.f32.mrf.mxu0
    %v1925 = vadd.f32 0.0, %v1924
    %v1926 = vpop.f32.mrf.mxu0
    %1927 = vdwg.mxu0
    %1928 = vmatpush.bf16.msra.mxu0 %v677
    %1929 = vmatpush.bf16.msra.mxu0 %v673
    %1930 = vmatpush.bf16.msra.mxu0 %v669
    %1931 = vmatpush.bf16.msra.mxu0 %v665
    %1932 = vmatpush.bf16.msra.mxu0 %v661
    %1933 = vmatpush.bf16.msra.mxu0 %v657
    %1934 = vmatpush.bf16.msra.mxu0 %v653
    %1935 = vmatpush.bf16.msra.mxu0 %v649
    %1936 = vmatmul.bf16.gmra.mxu0 %v1901
    %v1937 = vpop.f32.mrf.mxu0
    %v1938 = vadd.f32 0.0, %v1937
    %v1939 = vpop.f32.mrf.mxu0
    %1940 = vdwg.mxu0
    %1941 = vmatpush.bf16.msra.mxu0 %v678
    %1942 = vmatpush.bf16.msra.mxu0 %v674
    %1943 = vmatpush.bf16.msra.mxu0 %v670
    %1944 = vmatpush.bf16.msra.mxu0 %v666
    %1945 = vmatpush.bf16.msra.mxu0 %v662
    %1946 = vmatpush.bf16.msra.mxu0 %v658
    %1947 = vmatpush.bf16.msra.mxu0 %v654
    %1948 = vmatpush.bf16.msra.mxu0 %v650
    %1949 = vmatmul.bf16.gmra.mxu0 %v1901
    %v1950 = vpop.f32.mrf.mxu0
    %v1951 = vadd.f32 0.0, %v1950
    %v1952 = vpop.f32.mrf.mxu0
    %1953 = vdwg.mxu0
    %v1954 = vadd.f32 %v1893, %v1912
    %v1955 = vadd.f32 %v1894, %v1925
    %v1956 = vadd.f32 %v1895, %v1938
    %v1957 = vadd.f32 %v1896, %v1951
    %v1958 = vxor.u32 %v1954, 2147483648
    %v1959 = vxor.u32 %v1955, 2147483648
    %v1960 = vxor.u32 %v1956, 2147483648
    %v1961 = vmul.f32 %v1958, 1.442695
    %v1962 = vpow.pop %v1961
    %v1963 = vmul.f32 %v1959, 1.442695
    %v1964 = vpow.pop %v1963
    %v1965 = vmul.f32 %v1960, 1.442695
    %v1966 = vpow.pop %v1965
    %v1967 = vadd.f32 %v1962, 1.0
    %v1968 = vadd.f32 %v1964, 1.0
    %v1969 = vadd.f32 %v1966, 1.0
    %v1970 = vrcp.pop %v1967
    %v1971 = vmul.f32 %v1967, %v1970
    %v1972 = vsub.f32 1.0, %v1971
    %v1973 = vmul.f32 %v1970, %v1972
    %v1974 = vadd.f32 %v1970, %v1973
    %vm1975 = vweird.f32 %v1967
    %vm1976 = vweird.f32 %v1970
    %vm1977 = vmor %vm1975, %vm1976
    %v1978 = vsel %vm1977, %v1970, %v1974
    %v1979 = vand.u32 2147483647, %v1967
    %vm1980 = vcmp.eq.f32.partialorder %v1979, 8.507059e+37
    %v1981 = vand.u32 %v1967, 2147483648
    %v1982 = vor.u32 1.1754944e-38, %v1981
    %v1983 = vsel %vm1980, %v1982, %v1978
    %v1984 = vmul.f32 1.0, %v1983
    %v1985 = vrcp.pop %v1968
    %v1986 = vmul.f32 %v1968, %v1985
    %v1987 = vsub.f32 1.0, %v1986
    %v1988 = vmul.f32 %v1985, %v1987
    %v1989 = vadd.f32 %v1985, %v1988
    %vm1990 = vweird.f32 %v1968
    %vm1991 = vweird.f32 %v1985
    %vm1992 = vmor %vm1990, %vm1991
    %v1993 = vsel %vm1992, %v1985, %v1989
    %v1994 = vand.u32 2147483647, %v1968
    %vm1995 = vcmp.eq.f32.partialorder %v1994, 8.507059e+37
    %v1996 = vand.u32 %v1968, 2147483648
    %v1997 = vor.u32 1.1754944e-38, %v1996
    %v1998 = vsel %vm1995, %v1997, %v1993
    %v1999 = vmul.f32 1.0, %v1998
    %v2000 = vrcp.pop %v1969
    %v2001 = vmul.f32 %v1969, %v2000
    %v2002 = vsub.f32 1.0, %v2001
    %v2003 = vmul.f32 %v2000, %v2002
    %v2004 = vadd.f32 %v2000, %v2003
    %vm2005 = vweird.f32 %v1969
    %vm2006 = vweird.f32 %v2000
    %vm2007 = vmor %vm2005, %vm2006
    %v2008 = vsel %vm2007, %v2000, %v2004
    %v2009 = vand.u32 2147483647, %v1969
    %vm2010 = vcmp.eq.f32.partialorder %v2009, 8.507059e+37
    %v2011 = vand.u32 %v1969, 2147483648
    %v2012 = vor.u32 1.1754944e-38, %v2011
    %v2013 = vsel %vm2010, %v2012, %v2008
    %v2014 = vmul.f32 1.0, %v2013
    %v2015 = vtanh.pop %v1957
    %v2016 = vmul.f32 %v1999, %v1768
    %v2017 = vmul.f32 %v1984, %v2015
    %v2018 = vadd.f32 %v2016, %v2017
    %v2019 = vtanh.pop %v2018
    %v2020 = vmul.f32 %v2014, %v2019
    %v2021 = vpack.c.bf16 %v1890, %v1890
    %2022 = vmatpush.bf16.msra.mxu0 %v986
    %2023 = vmatpush.bf16.msra.mxu0 %v982
    %2024 = vmatpush.bf16.msra.mxu0 %v978
    %2025 = vmatpush.bf16.msra.mxu0 %v974
    %2026 = vmatpush.bf16.msra.mxu0 %v970
    %2027 = vmatpush.bf16.msra.mxu0 %v966
    %2028 = vmatpush.bf16.msra.mxu0 %v962
    %2029 = vmatpush.bf16.msra.mxu0 %v958
    %2030 = vmatmul.bf16.gmra.mxu0 %v2021
    %v2031 = vpop.f32.mrf.mxu0
    %v2032 = vadd.f32 0.0, %v2031
    %v2033 = vpop.f32.mrf.mxu0
    %2034 = vdwg.mxu0
    %2035 = vmatpush.bf16.msra.mxu0 %v987
    %2036 = vmatpush.bf16.msra.mxu0 %v983
    %2037 = vmatpush.bf16.msra.mxu0 %v979
    %2038 = vmatpush.bf16.msra.mxu0 %v975
    %2039 = vmatpush.bf16.msra.mxu0 %v971
    %2040 = vmatpush.bf16.msra.mxu0 %v967
    %2041 = vmatpush.bf16.msra.mxu0 %v963
    %2042 = vmatpush.bf16.msra.mxu0 %v959
    %2043 = vmatmul.bf16.gmra.mxu0 %v2021
    %v2044 = vpop.f32.mrf.mxu0
    %v2045 = vadd.f32 0.0, %v2044
    %v2046 = vpop.f32.mrf.mxu0
    %2047 = vdwg.mxu0
    %2048 = vmatpush.bf16.msra.mxu0 %v988
    %2049 = vmatpush.bf16.msra.mxu0 %v984
    %2050 = vmatpush.bf16.msra.mxu0 %v980
    %2051 = vmatpush.bf16.msra.mxu0 %v976
    %2052 = vmatpush.bf16.msra.mxu0 %v972
    %2053 = vmatpush.bf16.msra.mxu0 %v968
    %2054 = vmatpush.bf16.msra.mxu0 %v964
    %2055 = vmatpush.bf16.msra.mxu0 %v960
    %2056 = vmatmul.bf16.gmra.mxu0 %v2021
    %v2057 = vpop.f32.mrf.mxu0
    %v2058 = vadd.f32 0.0, %v2057
    %v2059 = vpop.f32.mrf.mxu0
    %2060 = vdwg.mxu0
    %2061 = vmatpush.bf16.msra.mxu0 %v989
    %2062 = vmatpush.bf16.msra.mxu0 %v985
    %2063 = vmatpush.bf16.msra.mxu0 %v981
    %2064 = vmatpush.bf16.msra.mxu0 %v977
    %2065 = vmatpush.bf16.msra.mxu0 %v973
    %2066 = vmatpush.bf16.msra.mxu0 %v969
    %2067 = vmatpush.bf16.msra.mxu0 %v965
    %2068 = vmatpush.bf16.msra.mxu0 %v961
    %2069 = vmatmul.bf16.gmra.mxu0 %v2021
    %v2070 = vpop.f32.mrf.mxu0
    %v2071 = vadd.f32 0.0, %v2070
    %v2072 = vpop.f32.mrf.mxu0
    %2073 = vdwg.mxu0
    %v2074 = vadd.f32 %v1897, %v2032
    %v2075 = vadd.f32 %v1898, %v2045
    %v2076 = vadd.f32 %v1899, %v2058
    %v2077 = vadd.f32 %v1900, %v2071
    %v2078 = vxor.u32 %v2074, 2147483648
    %v2079 = vxor.u32 %v2075, 2147483648
    %v2080 = vxor.u32 %v2076, 2147483648
    %v2081 = vmul.f32 %v2078, 1.442695
    %v2082 = vpow.pop %v2081
    %v2083 = vmul.f32 %v2079, 1.442695
    %v2084 = vpow.pop %v2083
    %v2085 = vmul.f32 %v2080, 1.442695
    %v2086 = vpow.pop %v2085
    %v2087 = vadd.f32 %v2082, 1.0
    %v2088 = vadd.f32 %v2084, 1.0
    %v2089 = vadd.f32 %v2086, 1.0
    %v2090 = vrcp.pop %v2087
    %v2091 = vmul.f32 %v2087, %v2090
    %v2092 = vsub.f32 1.0, %v2091
    %v2093 = vmul.f32 %v2090, %v2092
    %v2094 = vadd.f32 %v2090, %v2093
    %vm2095 = vweird.f32 %v2087
    %vm2096 = vweird.f32 %v2090
    %vm2097 = vmor %vm2095, %vm2096
    %v2098 = vsel %vm2097, %v2090, %v2094
    %v2099 = vand.u32 2147483647, %v2087
    %vm2100 = vcmp.eq.f32.partialorder %v2099, 8.507059e+37
    %v2101 = vand.u32 %v2087, 2147483648
    %v2102 = vor.u32 1.1754944e-38, %v2101
    %v2103 = vsel %vm2100, %v2102, %v2098
    %v2104 = vmul.f32 1.0, %v2103
    %v2105 = vrcp.pop %v2088
    %v2106 = vmul.f32 %v2088, %v2105
    %v2107 = vsub.f32 1.0, %v2106
    %v2108 = vmul.f32 %v2105, %v2107
    %v2109 = vadd.f32 %v2105, %v2108
    %vm2110 = vweird.f32 %v2088
    %vm2111 = vweird.f32 %v2105
    %vm2112 = vmor %vm2110, %vm2111
    %v2113 = vsel %vm2112, %v2105, %v2109
    %v2114 = vand.u32 2147483647, %v2088
    %vm2115 = vcmp.eq.f32.partialorder %v2114, 8.507059e+37
    %v2116 = vand.u32 %v2088, 2147483648
    %v2117 = vor.u32 1.1754944e-38, %v2116
    %v2118 = vsel %vm2115, %v2117, %v2113
    %v2119 = vmul.f32 1.0, %v2118
    %v2120 = vrcp.pop %v2089
    %v2121 = vmul.f32 %v2089, %v2120
    %v2122 = vsub.f32 1.0, %v2121
    %v2123 = vmul.f32 %v2120, %v2122
    %v2124 = vadd.f32 %v2120, %v2123
    %vm2125 = vweird.f32 %v2089
    %vm2126 = vweird.f32 %v2120
    %vm2127 = vmor %vm2125, %vm2126
    %v2128 = vsel %vm2127, %v2120, %v2124
    %v2129 = vand.u32 2147483647, %v2089
    %vm2130 = vcmp.eq.f32.partialorder %v2129, 8.507059e+37
    %v2131 = vand.u32 %v2089, 2147483648
    %v2132 = vor.u32 1.1754944e-38, %v2131
    %v2133 = vsel %vm2130, %v2132, %v2128
    %v2134 = vmul.f32 1.0, %v2133
    %v2135 = vtanh.pop %v2077
    %v2136 = vmul.f32 %v2119, %v1888
    %v2137 = vmul.f32 %v2104, %v2135
    %v2138 = vadd.f32 %v2136, %v2137
    %v2139 = vtanh.pop %v2138
    %v2140 = vmul.f32 %v2134, %v2139
    %v2141 = vadd.f32 %v1891, %v2020
    %v2142 = vadd.f32 %v1892, %v2140
    %v2143 = vld [vmem:[#allocation2 + $0x140] sm:$0xff]
    %v2144 = vld [vmem:[#allocation2 + $0x148] sm:$0xff]
    %v2145 = vld [vmem:[#allocation2 + $0x150] sm:$0xff]
    %v2146 = vld [vmem:[#allocation2 + $0x158] sm:$0xff]
    %v2147 = vld [vmem:[#allocation2 + $0xa0] sm:$0xff]
    %v2148 = vld [vmem:[#allocation2 + $0xa8] sm:$0xff]
    %v2149 = vld [vmem:[#allocation2 + $0xb0] sm:$0xff]
    %v2150 = vld [vmem:[#allocation2 + $0xb8] sm:$0xff]
    %v2151 = vpack.c.bf16 %v2020, %v2020
    %2152 = vmatpush.bf16.msra.mxu0 %v675
    %2153 = vmatpush.bf16.msra.mxu0 %v671
    %2154 = vmatpush.bf16.msra.mxu0 %v667
    %2155 = vmatpush.bf16.msra.mxu0 %v663
    %2156 = vmatpush.bf16.msra.mxu0 %v659
    %2157 = vmatpush.bf16.msra.mxu0 %v655
    %2158 = vmatpush.bf16.msra.mxu0 %v651
    %2159 = vmatpush.bf16.msra.mxu0 %v647
    %2160 = vmatmul.bf16.gmra.mxu0 %v2151
    %v2161 = vpop.f32.mrf.mxu0
    %v2162 = vadd.f32 0.0, %v2161
    %v2163 = vpop.f32.mrf.mxu0
    %2164 = vdwg.mxu0
    %2165 = vmatpush.bf16.msra.mxu0 %v676
    %2166 = vmatpush.bf16.msra.mxu0 %v672
    %2167 = vmatpush.bf16.msra.mxu0 %v668
    %2168 = vmatpush.bf16.msra.mxu0 %v664
    %2169 = vmatpush.bf16.msra.mxu0 %v660
    %2170 = vmatpush.bf16.msra.mxu0 %v656
    %2171 = vmatpush.bf16.msra.mxu0 %v652
    %2172 = vmatpush.bf16.msra.mxu0 %v648
    %2173 = vmatmul.bf16.gmra.mxu0 %v2151
    %v2174 = vpop.f32.mrf.mxu0
    %v2175 = vadd.f32 0.0, %v2174
    %v2176 = vpop.f32.mrf.mxu0
    %2177 = vdwg.mxu0
    %2178 = vmatpush.bf16.msra.mxu0 %v677
    %2179 = vmatpush.bf16.msra.mxu0 %v673
    %2180 = vmatpush.bf16.msra.mxu0 %v669
    %2181 = vmatpush.bf16.msra.mxu0 %v665
    %2182 = vmatpush.bf16.msra.mxu0 %v661
    %2183 = vmatpush.bf16.msra.mxu0 %v657
    %2184 = vmatpush.bf16.msra.mxu0 %v653
    %2185 = vmatpush.bf16.msra.mxu0 %v649
    %2186 = vmatmul.bf16.gmra.mxu0 %v2151
    %v2187 = vpop.f32.mrf.mxu0
    %v2188 = vadd.f32 0.0, %v2187
    %v2189 = vpop.f32.mrf.mxu0
    %2190 = vdwg.mxu0
    %2191 = vmatpush.bf16.msra.mxu0 %v678
    %2192 = vmatpush.bf16.msra.mxu0 %v674
    %2193 = vmatpush.bf16.msra.mxu0 %v670
    %2194 = vmatpush.bf16.msra.mxu0 %v666
    %2195 = vmatpush.bf16.msra.mxu0 %v662
    %2196 = vmatpush.bf16.msra.mxu0 %v658
    %2197 = vmatpush.bf16.msra.mxu0 %v654
    %2198 = vmatpush.bf16.msra.mxu0 %v650
    %2199 = vmatmul.bf16.gmra.mxu0 %v2151
    %v2200 = vpop.f32.mrf.mxu0
    %v2201 = vadd.f32 0.0, %v2200
    %v2202 = vpop.f32.mrf.mxu0
    %2203 = vdwg.mxu0
    %v2204 = vadd.f32 %v2143, %v2162
    %v2205 = vadd.f32 %v2144, %v2175
    %v2206 = vadd.f32 %v2145, %v2188
    %v2207 = vadd.f32 %v2146, %v2201
    %v2208 = vxor.u32 %v2204, 2147483648
    %v2209 = vxor.u32 %v2205, 2147483648
    %v2210 = vxor.u32 %v2206, 2147483648
    %v2211 = vmul.f32 %v2208, 1.442695
    %v2212 = vpow.pop %v2211
    %v2213 = vmul.f32 %v2209, 1.442695
    %v2214 = vpow.pop %v2213
    %v2215 = vmul.f32 %v2210, 1.442695
    %v2216 = vpow.pop %v2215
    %v2217 = vadd.f32 %v2212, 1.0
    %v2218 = vadd.f32 %v2214, 1.0
    %v2219 = vadd.f32 %v2216, 1.0
    %v2220 = vrcp.pop %v2217
    %v2221 = vmul.f32 %v2217, %v2220
    %v2222 = vsub.f32 1.0, %v2221
    %v2223 = vmul.f32 %v2220, %v2222
    %v2224 = vadd.f32 %v2220, %v2223
    %vm2225 = vweird.f32 %v2217
    %vm2226 = vweird.f32 %v2220
    %vm2227 = vmor %vm2225, %vm2226
    %v2228 = vsel %vm2227, %v2220, %v2224
    %v2229 = vand.u32 2147483647, %v2217
    %vm2230 = vcmp.eq.f32.partialorder %v2229, 8.507059e+37
    %v2231 = vand.u32 %v2217, 2147483648
    %v2232 = vor.u32 1.1754944e-38, %v2231
    %v2233 = vsel %vm2230, %v2232, %v2228
    %v2234 = vmul.f32 1.0, %v2233
    %v2235 = vrcp.pop %v2218
    %v2236 = vmul.f32 %v2218, %v2235
    %v2237 = vsub.f32 1.0, %v2236
    %v2238 = vmul.f32 %v2235, %v2237
    %v2239 = vadd.f32 %v2235, %v2238
    %vm2240 = vweird.f32 %v2218
    %vm2241 = vweird.f32 %v2235
    %vm2242 = vmor %vm2240, %vm2241
    %v2243 = vsel %vm2242, %v2235, %v2239
    %v2244 = vand.u32 2147483647, %v2218
    %vm2245 = vcmp.eq.f32.partialorder %v2244, 8.507059e+37
    %v2246 = vand.u32 %v2218, 2147483648
    %v2247 = vor.u32 1.1754944e-38, %v2246
    %v2248 = vsel %vm2245, %v2247, %v2243
    %v2249 = vmul.f32 1.0, %v2248
    %v2250 = vrcp.pop %v2219
    %v2251 = vmul.f32 %v2219, %v2250
    %v2252 = vsub.f32 1.0, %v2251
    %v2253 = vmul.f32 %v2250, %v2252
    %v2254 = vadd.f32 %v2250, %v2253
    %vm2255 = vweird.f32 %v2219
    %vm2256 = vweird.f32 %v2250
    %vm2257 = vmor %vm2255, %vm2256
    %v2258 = vsel %vm2257, %v2250, %v2254
    %v2259 = vand.u32 2147483647, %v2219
    %vm2260 = vcmp.eq.f32.partialorder %v2259, 8.507059e+37
    %v2261 = vand.u32 %v2219, 2147483648
    %v2262 = vor.u32 1.1754944e-38, %v2261
    %v2263 = vsel %vm2260, %v2262, %v2258
    %v2264 = vmul.f32 1.0, %v2263
    %v2265 = vtanh.pop %v2207
    %v2266 = vmul.f32 %v2249, %v2018
    %v2267 = vmul.f32 %v2234, %v2265
    %v2268 = vadd.f32 %v2266, %v2267
    %v2269 = vtanh.pop %v2268
    %v2270 = vmul.f32 %v2264, %v2269
    %v2271 = vpack.c.bf16 %v2140, %v2140
    %2272 = vmatpush.bf16.msra.mxu0 %v986
    %2273 = vmatpush.bf16.msra.mxu0 %v982
    %2274 = vmatpush.bf16.msra.mxu0 %v978
    %2275 = vmatpush.bf16.msra.mxu0 %v974
    %2276 = vmatpush.bf16.msra.mxu0 %v970
    %2277 = vmatpush.bf16.msra.mxu0 %v966
    %2278 = vmatpush.bf16.msra.mxu0 %v962
    %2279 = vmatpush.bf16.msra.mxu0 %v958
    %2280 = vmatmul.bf16.gmra.mxu0 %v2271
    %v2281 = vpop.f32.mrf.mxu0
    %v2282 = vadd.f32 0.0, %v2281
    %v2283 = vpop.f32.mrf.mxu0
    %2284 = vdwg.mxu0
    %2285 = vmatpush.bf16.msra.mxu0 %v987
    %2286 = vmatpush.bf16.msra.mxu0 %v983
    %2287 = vmatpush.bf16.msra.mxu0 %v979
    %2288 = vmatpush.bf16.msra.mxu0 %v975
    %2289 = vmatpush.bf16.msra.mxu0 %v971
    %2290 = vmatpush.bf16.msra.mxu0 %v967
    %2291 = vmatpush.bf16.msra.mxu0 %v963
    %2292 = vmatpush.bf16.msra.mxu0 %v959
    %2293 = vmatmul.bf16.gmra.mxu0 %v2271
    %v2294 = vpop.f32.mrf.mxu0
    %v2295 = vadd.f32 0.0, %v2294
    %v2296 = vpop.f32.mrf.mxu0
    %2297 = vdwg.mxu0
    %2298 = vmatpush.bf16.msra.mxu0 %v988
    %2299 = vmatpush.bf16.msra.mxu0 %v984
    %2300 = vmatpush.bf16.msra.mxu0 %v980
    %2301 = vmatpush.bf16.msra.mxu0 %v976
    %2302 = vmatpush.bf16.msra.mxu0 %v972
    %2303 = vmatpush.bf16.msra.mxu0 %v968
    %2304 = vmatpush.bf16.msra.mxu0 %v964
    %2305 = vmatpush.bf16.msra.mxu0 %v960
    %2306 = vmatmul.bf16.gmra.mxu0 %v2271
    %v2307 = vpop.f32.mrf.mxu0
    %v2308 = vadd.f32 0.0, %v2307
    %v2309 = vpop.f32.mrf.mxu0
    %2310 = vdwg.mxu0
    %2311 = vmatpush.bf16.msra.mxu0 %v989
    %2312 = vmatpush.bf16.msra.mxu0 %v985
    %2313 = vmatpush.bf16.msra.mxu0 %v981
    %2314 = vmatpush.bf16.msra.mxu0 %v977
    %2315 = vmatpush.bf16.msra.mxu0 %v973
    %2316 = vmatpush.bf16.msra.mxu0 %v969
    %2317 = vmatpush.bf16.msra.mxu0 %v965
    %2318 = vmatpush.bf16.msra.mxu0 %v961
    %2319 = vmatmul.bf16.gmra.mxu0 %v2271
    %v2320 = vpop.f32.mrf.mxu0
    %v2321 = vadd.f32 0.0, %v2320
    %v2322 = vpop.f32.mrf.mxu0
    %2323 = vdwg.mxu0
    %v2324 = vadd.f32 %v2147, %v2282
    %v2325 = vadd.f32 %v2148, %v2295
    %v2326 = vadd.f32 %v2149, %v2308
    %v2327 = vadd.f32 %v2150, %v2321
    %v2328 = vxor.u32 %v2324, 2147483648
    %v2329 = vxor.u32 %v2325, 2147483648
    %v2330 = vxor.u32 %v2326, 2147483648
    %v2331 = vmul.f32 %v2328, 1.442695
    %v2332 = vpow.pop %v2331
    %v2333 = vmul.f32 %v2329, 1.442695
    %v2334 = vpow.pop %v2333
    %v2335 = vmul.f32 %v2330, 1.442695
    %v2336 = vpow.pop %v2335
    %v2337 = vadd.f32 %v2332, 1.0
    %v2338 = vadd.f32 %v2334, 1.0
    %v2339 = vadd.f32 %v2336, 1.0
    %v2340 = vrcp.pop %v2337
    %v2341 = vmul.f32 %v2337, %v2340
    %v2342 = vsub.f32 1.0, %v2341
    %v2343 = vmul.f32 %v2340, %v2342
    %v2344 = vadd.f32 %v2340, %v2343
    %vm2345 = vweird.f32 %v2337
    %vm2346 = vweird.f32 %v2340
    %vm2347 = vmor %vm2345, %vm2346
    %v2348 = vsel %vm2347, %v2340, %v2344
    %v2349 = vand.u32 2147483647, %v2337
    %vm2350 = vcmp.eq.f32.partialorder %v2349, 8.507059e+37
    %v2351 = vand.u32 %v2337, 2147483648
    %v2352 = vor.u32 1.1754944e-38, %v2351
    %v2353 = vsel %vm2350, %v2352, %v2348
    %v2354 = vmul.f32 1.0, %v2353
    %v2355 = vrcp.pop %v2338
    %v2356 = vmul.f32 %v2338, %v2355
    %v2357 = vsub.f32 1.0, %v2356
    %v2358 = vmul.f32 %v2355, %v2357
    %v2359 = vadd.f32 %v2355, %v2358
    %vm2360 = vweird.f32 %v2338
    %vm2361 = vweird.f32 %v2355
    %vm2362 = vmor %vm2360, %vm2361
    %v2363 = vsel %vm2362, %v2355, %v2359
    %v2364 = vand.u32 2147483647, %v2338
    %vm2365 = vcmp.eq.f32.partialorder %v2364, 8.507059e+37
    %v2366 = vand.u32 %v2338, 2147483648
    %v2367 = vor.u32 1.1754944e-38, %v2366
    %v2368 = vsel %vm2365, %v2367, %v2363
    %v2369 = vmul.f32 1.0, %v2368
    %v2370 = vrcp.pop %v2339
    %v2371 = vmul.f32 %v2339, %v2370
    %v2372 = vsub.f32 1.0, %v2371
    %v2373 = vmul.f32 %v2370, %v2372
    %v2374 = vadd.f32 %v2370, %v2373
    %vm2375 = vweird.f32 %v2339
    %vm2376 = vweird.f32 %v2370
    %vm2377 = vmor %vm2375, %vm2376
    %v2378 = vsel %vm2377, %v2370, %v2374
    %v2379 = vand.u32 2147483647, %v2339
    %vm2380 = vcmp.eq.f32.partialorder %v2379, 8.507059e+37
    %v2381 = vand.u32 %v2339, 2147483648
    %v2382 = vor.u32 1.1754944e-38, %v2381
    %v2383 = vsel %vm2380, %v2382, %v2378
    %v2384 = vmul.f32 1.0, %v2383
    %v2385 = vtanh.pop %v2327
    %v2386 = vmul.f32 %v2369, %v2138
    %v2387 = vmul.f32 %v2354, %v2385
    %v2388 = vadd.f32 %v2386, %v2387
    %v2389 = vtanh.pop %v2388
    %v2390 = vmul.f32 %v2384, %v2389
    %v2391 = vadd.f32 %v2141, %v2270
    %v2392 = vadd.f32 %v2142, %v2390
    %v2393 = vld [vmem:[#allocation2 + $0x180] sm:$0xff]
    %v2394 = vld [vmem:[#allocation2 + $0x188] sm:$0xff]
    %v2395 = vld [vmem:[#allocation2 + $0x190] sm:$0xff]
    %v2396 = vld [vmem:[#allocation2 + $0x198] sm:$0xff]
    %v2397 = vld [vmem:[#allocation2 + $0x60] sm:$0xff]
    %v2398 = vld [vmem:[#allocation2 + $0x68] sm:$0xff]
    %v2399 = vld [vmem:[#allocation2 + $0x70] sm:$0xff]
    %v2400 = vld [vmem:[#allocation2 + $0x78] sm:$0xff]
    %v2401 = vpack.c.bf16 %v2270, %v2270
    %2402 = vmatpush.bf16.msra.mxu0 %v675
    %2403 = vmatpush.bf16.msra.mxu0 %v671
    %2404 = vmatpush.bf16.msra.mxu0 %v667
    %2405 = vmatpush.bf16.msra.mxu0 %v663
    %2406 = vmatpush.bf16.msra.mxu0 %v659
    %2407 = vmatpush.bf16.msra.mxu0 %v655
    %2408 = vmatpush.bf16.msra.mxu0 %v651
    %2409 = vmatpush.bf16.msra.mxu0 %v647
    %2410 = vmatmul.bf16.gmra.mxu0 %v2401
    %v2411 = vpop.f32.mrf.mxu0
    %v2412 = vadd.f32 0.0, %v2411
    %v2413 = vpop.f32.mrf.mxu0
    %2414 = vdwg.mxu0
    %2415 = vmatpush.bf16.msra.mxu0 %v676
    %2416 = vmatpush.bf16.msra.mxu0 %v672
    %2417 = vmatpush.bf16.msra.mxu0 %v668
    %2418 = vmatpush.bf16.msra.mxu0 %v664
    %2419 = vmatpush.bf16.msra.mxu0 %v660
    %2420 = vmatpush.bf16.msra.mxu0 %v656
    %2421 = vmatpush.bf16.msra.mxu0 %v652
    %2422 = vmatpush.bf16.msra.mxu0 %v648
    %2423 = vmatmul.bf16.gmra.mxu0 %v2401
    %v2424 = vpop.f32.mrf.mxu0
    %v2425 = vadd.f32 0.0, %v2424
    %v2426 = vpop.f32.mrf.mxu0
    %2427 = vdwg.mxu0
    %2428 = vmatpush.bf16.msra.mxu0 %v677
    %2429 = vmatpush.bf16.msra.mxu0 %v673
    %2430 = vmatpush.bf16.msra.mxu0 %v669
    %2431 = vmatpush.bf16.msra.mxu0 %v665
    %2432 = vmatpush.bf16.msra.mxu0 %v661
    %2433 = vmatpush.bf16.msra.mxu0 %v657
    %2434 = vmatpush.bf16.msra.mxu0 %v653
    %2435 = vmatpush.bf16.msra.mxu0 %v649
    %2436 = vmatmul.bf16.gmra.mxu0 %v2401
    %v2437 = vpop.f32.mrf.mxu0
    %v2438 = vadd.f32 0.0, %v2437
    %v2439 = vpop.f32.mrf.mxu0
    %2440 = vdwg.mxu0
    %2441 = vmatpush.bf16.msra.mxu0 %v678
    %2442 = vmatpush.bf16.msra.mxu0 %v674
    %2443 = vmatpush.bf16.msra.mxu0 %v670
    %2444 = vmatpush.bf16.msra.mxu0 %v666
    %2445 = vmatpush.bf16.msra.mxu0 %v662
    %2446 = vmatpush.bf16.msra.mxu0 %v658
    %2447 = vmatpush.bf16.msra.mxu0 %v654
    %2448 = vmatpush.bf16.msra.mxu0 %v650
    %2449 = vmatmul.bf16.gmra.mxu0 %v2401
    %v2450 = vpop.f32.mrf.mxu0
    %v2451 = vadd.f32 0.0, %v2450
    %v2452 = vpop.f32.mrf.mxu0
    %2453 = vdwg.mxu0
    %v2454 = vadd.f32 %v2393, %v2412
    %v2455 = vadd.f32 %v2394, %v2425
    %v2456 = vadd.f32 %v2395, %v2438
    %v2457 = vadd.f32 %v2396, %v2451
    %v2458 = vxor.u32 %v2454, 2147483648
    %v2459 = vxor.u32 %v2455, 2147483648
    %v2460 = vxor.u32 %v2456, 2147483648
    %v2461 = vmul.f32 %v2458, 1.442695
    %v2462 = vpow.pop %v2461
    %v2463 = vmul.f32 %v2459, 1.442695
    %v2464 = vpow.pop %v2463
    %v2465 = vmul.f32 %v2460, 1.442695
    %v2466 = vpow.pop %v2465
    %v2467 = vadd.f32 %v2462, 1.0
    %v2468 = vadd.f32 %v2464, 1.0
    %v2469 = vadd.f32 %v2466, 1.0
    %v2470 = vrcp.pop %v2467
    %v2471 = vmul.f32 %v2467, %v2470
    %v2472 = vsub.f32 1.0, %v2471
    %v2473 = vmul.f32 %v2470, %v2472
    %v2474 = vadd.f32 %v2470, %v2473
    %vm2475 = vweird.f32 %v2467
    %vm2476 = vweird.f32 %v2470
    %vm2477 = vmor %vm2475, %vm2476
    %v2478 = vsel %vm2477, %v2470, %v2474
    %v2479 = vand.u32 2147483647, %v2467
    %vm2480 = vcmp.eq.f32.partialorder %v2479, 8.507059e+37
    %v2481 = vand.u32 %v2467, 2147483648
    %v2482 = vor.u32 1.1754944e-38, %v2481
    %v2483 = vsel %vm2480, %v2482, %v2478
    %v2484 = vmul.f32 1.0, %v2483
    %v2485 = vrcp.pop %v2468
    %v2486 = vmul.f32 %v2468, %v2485
    %v2487 = vsub.f32 1.0, %v2486
    %v2488 = vmul.f32 %v2485, %v2487
    %v2489 = vadd.f32 %v2485, %v2488
    %vm2490 = vweird.f32 %v2468
    %vm2491 = vweird.f32 %v2485
    %vm2492 = vmor %vm2490, %vm2491
    %v2493 = vsel %vm2492, %v2485, %v2489
    %v2494 = vand.u32 2147483647, %v2468
    %vm2495 = vcmp.eq.f32.partialorder %v2494, 8.507059e+37
    %v2496 = vand.u32 %v2468, 2147483648
    %v2497 = vor.u32 1.1754944e-38, %v2496
    %v2498 = vsel %vm2495, %v2497, %v2493
    %v2499 = vmul.f32 1.0, %v2498
    %v2500 = vrcp.pop %v2469
    %v2501 = vmul.f32 %v2469, %v2500
    %v2502 = vsub.f32 1.0, %v2501
    %v2503 = vmul.f32 %v2500, %v2502
    %v2504 = vadd.f32 %v2500, %v2503
    %vm2505 = vweird.f32 %v2469
    %vm2506 = vweird.f32 %v2500
    %vm2507 = vmor %vm2505, %vm2506
    %v2508 = vsel %vm2507, %v2500, %v2504
    %v2509 = vand.u32 2147483647, %v2469
    %vm2510 = vcmp.eq.f32.partialorder %v2509, 8.507059e+37
    %v2511 = vand.u32 %v2469, 2147483648
    %v2512 = vor.u32 1.1754944e-38, %v2511
    %v2513 = vsel %vm2510, %v2512, %v2508
    %v2514 = vmul.f32 1.0, %v2513
    %v2515 = vtanh.pop %v2457
    %v2516 = vmul.f32 %v2499, %v2268
    %v2517 = vmul.f32 %v2484, %v2515
    %v2518 = vadd.f32 %v2516, %v2517
    %v2519 = vtanh.pop %v2518
    %v2520 = vmul.f32 %v2514, %v2519
    %v2521 = vpack.c.bf16 %v2390, %v2390
    %2522 = vmatpush.bf16.msra.mxu0 %v986
    %2523 = vmatpush.bf16.msra.mxu0 %v982
    %2524 = vmatpush.bf16.msra.mxu0 %v978
    %2525 = vmatpush.bf16.msra.mxu0 %v974
    %2526 = vmatpush.bf16.msra.mxu0 %v970
    %2527 = vmatpush.bf16.msra.mxu0 %v966
    %2528 = vmatpush.bf16.msra.mxu0 %v962
    %2529 = vmatpush.bf16.msra.mxu0 %v958
    %2530 = vmatmul.bf16.gmra.mxu0 %v2521
    %v2531 = vpop.f32.mrf.mxu0
    %v2532 = vadd.f32 0.0, %v2531
    %v2533 = vpop.f32.mrf.mxu0
    %2534 = vdwg.mxu0
    %2535 = vmatpush.bf16.msra.mxu0 %v987
    %2536 = vmatpush.bf16.msra.mxu0 %v983
    %2537 = vmatpush.bf16.msra.mxu0 %v979
    %2538 = vmatpush.bf16.msra.mxu0 %v975
    %2539 = vmatpush.bf16.msra.mxu0 %v971
    %2540 = vmatpush.bf16.msra.mxu0 %v967
    %2541 = vmatpush.bf16.msra.mxu0 %v963
    %2542 = vmatpush.bf16.msra.mxu0 %v959
    %2543 = vmatmul.bf16.gmra.mxu0 %v2521
    %v2544 = vpop.f32.mrf.mxu0
    %v2545 = vadd.f32 0.0, %v2544
    %v2546 = vpop.f32.mrf.mxu0
    %2547 = vdwg.mxu0
    %2548 = vmatpush.bf16.msra.mxu0 %v988
    %2549 = vmatpush.bf16.msra.mxu0 %v984
    %2550 = vmatpush.bf16.msra.mxu0 %v980
    %2551 = vmatpush.bf16.msra.mxu0 %v976
    %2552 = vmatpush.bf16.msra.mxu0 %v972
    %2553 = vmatpush.bf16.msra.mxu0 %v968
    %2554 = vmatpush.bf16.msra.mxu0 %v964
    %2555 = vmatpush.bf16.msra.mxu0 %v960
    %2556 = vmatmul.bf16.gmra.mxu0 %v2521
    %v2557 = vpop.f32.mrf.mxu0
    %v2558 = vadd.f32 0.0, %v2557
    %v2559 = vpop.f32.mrf.mxu0
    %2560 = vdwg.mxu0
    %2561 = vmatpush.bf16.msra.mxu0 %v989
    %2562 = vmatpush.bf16.msra.mxu0 %v985
    %2563 = vmatpush.bf16.msra.mxu0 %v981
    %2564 = vmatpush.bf16.msra.mxu0 %v977
    %2565 = vmatpush.bf16.msra.mxu0 %v973
    %2566 = vmatpush.bf16.msra.mxu0 %v969
    %2567 = vmatpush.bf16.msra.mxu0 %v965
    %2568 = vmatpush.bf16.msra.mxu0 %v961
    %2569 = vmatmul.bf16.gmra.mxu0 %v2521
    %v2570 = vpop.f32.mrf.mxu0
    %v2571 = vadd.f32 0.0, %v2570
    %v2572 = vpop.f32.mrf.mxu0
    %2573 = vdwg.mxu0
    %v2574 = vadd.f32 %v2397, %v2532
    %v2575 = vadd.f32 %v2398, %v2545
    %v2576 = vadd.f32 %v2399, %v2558
    %v2577 = vadd.f32 %v2400, %v2571
    %v2578 = vxor.u32 %v2574, 2147483648
    %v2579 = vxor.u32 %v2575, 2147483648
    %v2580 = vxor.u32 %v2576, 2147483648
    %v2581 = vmul.f32 %v2578, 1.442695
    %v2582 = vpow.pop %v2581
    %v2583 = vmul.f32 %v2579, 1.442695
    %v2584 = vpow.pop %v2583
    %v2585 = vmul.f32 %v2580, 1.442695
    %v2586 = vpow.pop %v2585
    %v2587 = vadd.f32 %v2582, 1.0
    %v2588 = vadd.f32 %v2584, 1.0
    %v2589 = vadd.f32 %v2586, 1.0
    %v2590 = vrcp.pop %v2587
    %v2591 = vmul.f32 %v2587, %v2590
    %v2592 = vsub.f32 1.0, %v2591
    %v2593 = vmul.f32 %v2590, %v2592
    %v2594 = vadd.f32 %v2590, %v2593
    %vm2595 = vweird.f32 %v2587
    %vm2596 = vweird.f32 %v2590
    %vm2597 = vmor %vm2595, %vm2596
    %v2598 = vsel %vm2597, %v2590, %v2594
    %v2599 = vand.u32 2147483647, %v2587
    %vm2600 = vcmp.eq.f32.partialorder %v2599, 8.507059e+37
    %v2601 = vand.u32 %v2587, 2147483648
    %v2602 = vor.u32 1.1754944e-38, %v2601
    %v2603 = vsel %vm2600, %v2602, %v2598
    %v2604 = vmul.f32 1.0, %v2603
    %v2605 = vrcp.pop %v2588
    %v2606 = vmul.f32 %v2588, %v2605
    %v2607 = vsub.f32 1.0, %v2606
    %v2608 = vmul.f32 %v2605, %v2607
    %v2609 = vadd.f32 %v2605, %v2608
    %vm2610 = vweird.f32 %v2588
    %vm2611 = vweird.f32 %v2605
    %vm2612 = vmor %vm2610, %vm2611
    %v2613 = vsel %vm2612, %v2605, %v2609
    %v2614 = vand.u32 2147483647, %v2588
    %vm2615 = vcmp.eq.f32.partialorder %v2614, 8.507059e+37
    %v2616 = vand.u32 %v2588, 2147483648
    %v2617 = vor.u32 1.1754944e-38, %v2616
    %v2618 = vsel %vm2615, %v2617, %v2613
    %v2619 = vmul.f32 1.0, %v2618
    %v2620 = vrcp.pop %v2589
    %v2621 = vmul.f32 %v2589, %v2620
    %v2622 = vsub.f32 1.0, %v2621
    %v2623 = vmul.f32 %v2620, %v2622
    %v2624 = vadd.f32 %v2620, %v2623
    %vm2625 = vweird.f32 %v2589
    %vm2626 = vweird.f32 %v2620
    %vm2627 = vmor %vm2625, %vm2626
    %v2628 = vsel %vm2627, %v2620, %v2624
    %v2629 = vand.u32 2147483647, %v2589
    %vm2630 = vcmp.eq.f32.partialorder %v2629, 8.507059e+37
    %v2631 = vand.u32 %v2589, 2147483648
    %v2632 = vor.u32 1.1754944e-38, %v2631
    %v2633 = vsel %vm2630, %v2632, %v2628
    %v2634 = vmul.f32 1.0, %v2633
    %v2635 = vtanh.pop %v2577
    %v2636 = vmul.f32 %v2619, %v2388
    %v2637 = vmul.f32 %v2604, %v2635
    %v2638 = vadd.f32 %v2636, %v2637
    %v2639 = vtanh.pop %v2638
    %v2640 = vmul.f32 %v2634, %v2639
    %v2641 = vadd.f32 %v2391, %v2520
    %v2642 = vadd.f32 %v2392, %v2640
    %v2643 = vld [vmem:[#allocation2 + $0x1c0] sm:$0xff]
    %v2644 = vld [vmem:[#allocation2 + $0x1c8] sm:$0xff]
    %v2645 = vld [vmem:[#allocation2 + $0x1d0] sm:$0xff]
    %v2646 = vld [vmem:[#allocation2 + $0x1d8] sm:$0xff]
    %v2647 = vld [vmem:[#allocation2 + $0x20] sm:$0xff]
    %v2648 = vld [vmem:[#allocation2 + $0x28] sm:$0xff]
    %v2649 = vld [vmem:[#allocation2 + $0x30] sm:$0xff]
    %v2650 = vld [vmem:[#allocation2 + $0x38] sm:$0xff]
    %v2651 = vpack.c.bf16 %v2520, %v2520
    %2652 = vmatpush.bf16.msra.mxu0 %v675
    %2653 = vmatpush.bf16.msra.mxu0 %v671
    %2654 = vmatpush.bf16.msra.mxu0 %v667
    %2655 = vmatpush.bf16.msra.mxu0 %v663
    %2656 = vmatpush.bf16.msra.mxu0 %v659
    %2657 = vmatpush.bf16.msra.mxu0 %v655
    %2658 = vmatpush.bf16.msra.mxu0 %v651
    %2659 = vmatpush.bf16.msra.mxu0 %v647
    %2660 = vmatmul.bf16.gmra.mxu0 %v2651
    %v2661 = vpop.f32.mrf.mxu0
    %v2662 = vadd.f32 0.0, %v2661
    %v2663 = vpop.f32.mrf.mxu0
    %2664 = vdwg.mxu0
    %2665 = vmatpush.bf16.msra.mxu0 %v676
    %2666 = vmatpush.bf16.msra.mxu0 %v672
    %2667 = vmatpush.bf16.msra.mxu0 %v668
    %2668 = vmatpush.bf16.msra.mxu0 %v664
    %2669 = vmatpush.bf16.msra.mxu0 %v660
    %2670 = vmatpush.bf16.msra.mxu0 %v656
    %2671 = vmatpush.bf16.msra.mxu0 %v652
    %2672 = vmatpush.bf16.msra.mxu0 %v648
    %2673 = vmatmul.bf16.gmra.mxu0 %v2651
    %v2674 = vpop.f32.mrf.mxu0
    %v2675 = vadd.f32 0.0, %v2674
    %v2676 = vpop.f32.mrf.mxu0
    %2677 = vdwg.mxu0
    %2678 = vmatpush.bf16.msra.mxu0 %v677
    %2679 = vmatpush.bf16.msra.mxu0 %v673
    %2680 = vmatpush.bf16.msra.mxu0 %v669
    %2681 = vmatpush.bf16.msra.mxu0 %v665
    %2682 = vmatpush.bf16.msra.mxu0 %v661
    %2683 = vmatpush.bf16.msra.mxu0 %v657
    %2684 = vmatpush.bf16.msra.mxu0 %v653
    %2685 = vmatpush.bf16.msra.mxu0 %v649
    %2686 = vmatmul.bf16.gmra.mxu0 %v2651
    %v2687 = vpop.f32.mrf.mxu0
    %v2688 = vadd.f32 0.0, %v2687
    %v2689 = vpop.f32.mrf.mxu0
    %2690 = vdwg.mxu0
    %2691 = vmatpush.bf16.msra.mxu0 %v678
    %2692 = vmatpush.bf16.msra.mxu0 %v674
    %2693 = vmatpush.bf16.msra.mxu0 %v670
    %2694 = vmatpush.bf16.msra.mxu0 %v666
    %2695 = vmatpush.bf16.msra.mxu0 %v662
    %2696 = vmatpush.bf16.msra.mxu0 %v658
    %2697 = vmatpush.bf16.msra.mxu0 %v654
    %2698 = vmatpush.bf16.msra.mxu0 %v650
    %2699 = vmatmul.bf16.gmra.mxu0 %v2651
    %v2700 = vpop.f32.mrf.mxu0
    %v2701 = vadd.f32 0.0, %v2700
    %v2702 = vpop.f32.mrf.mxu0
    %2703 = vdwg.mxu0
    %v2704 = vadd.f32 %v2643, %v2662
    %v2705 = vadd.f32 %v2644, %v2675
    %v2706 = vadd.f32 %v2645, %v2688
    %v2707 = vadd.f32 %v2646, %v2701
    %v2708 = vxor.u32 %v2704, 2147483648
    %v2709 = vxor.u32 %v2705, 2147483648
    %v2710 = vxor.u32 %v2706, 2147483648
    %v2711 = vmul.f32 %v2708, 1.442695
    %v2712 = vpow.pop %v2711
    %v2713 = vmul.f32 %v2709, 1.442695
    %v2714 = vpow.pop %v2713
    %v2715 = vmul.f32 %v2710, 1.442695
    %v2716 = vpow.pop %v2715
    %v2717 = vadd.f32 %v2712, 1.0
    %v2718 = vadd.f32 %v2714, 1.0
    %v2719 = vadd.f32 %v2716, 1.0
    %v2720 = vrcp.pop %v2717
    %v2721 = vmul.f32 %v2717, %v2720
    %v2722 = vsub.f32 1.0, %v2721
    %v2723 = vmul.f32 %v2720, %v2722
    %v2724 = vadd.f32 %v2720, %v2723
    %vm2725 = vweird.f32 %v2717
    %vm2726 = vweird.f32 %v2720
    %vm2727 = vmor %vm2725, %vm2726
    %v2728 = vsel %vm2727, %v2720, %v2724
    %v2729 = vand.u32 2147483647, %v2717
    %vm2730 = vcmp.eq.f32.partialorder %v2729, 8.507059e+37
    %v2731 = vand.u32 %v2717, 2147483648
    %v2732 = vor.u32 1.1754944e-38, %v2731
    %v2733 = vsel %vm2730, %v2732, %v2728
    %v2734 = vmul.f32 1.0, %v2733
    %v2735 = vrcp.pop %v2718
    %v2736 = vmul.f32 %v2718, %v2735
    %v2737 = vsub.f32 1.0, %v2736
    %v2738 = vmul.f32 %v2735, %v2737
    %v2739 = vadd.f32 %v2735, %v2738
    %vm2740 = vweird.f32 %v2718
    %vm2741 = vweird.f32 %v2735
    %vm2742 = vmor %vm2740, %vm2741
    %v2743 = vsel %vm2742, %v2735, %v2739
    %v2744 = vand.u32 2147483647, %v2718
    %vm2745 = vcmp.eq.f32.partialorder %v2744, 8.507059e+37
    %v2746 = vand.u32 %v2718, 2147483648
    %v2747 = vor.u32 1.1754944e-38, %v2746
    %v2748 = vsel %vm2745, %v2747, %v2743
    %v2749 = vmul.f32 1.0, %v2748
    %v2750 = vrcp.pop %v2719
    %v2751 = vmul.f32 %v2719, %v2750
    %v2752 = vsub.f32 1.0, %v2751
    %v2753 = vmul.f32 %v2750, %v2752
    %v2754 = vadd.f32 %v2750, %v2753
    %vm2755 = vweird.f32 %v2719
    %vm2756 = vweird.f32 %v2750
    %vm2757 = vmor %vm2755, %vm2756
    %v2758 = vsel %vm2757, %v2750, %v2754
    %v2759 = vand.u32 2147483647, %v2719
    %vm2760 = vcmp.eq.f32.partialorder %v2759, 8.507059e+37
    %v2761 = vand.u32 %v2719, 2147483648
    %v2762 = vor.u32 1.1754944e-38, %v2761
    %v2763 = vsel %vm2760, %v2762, %v2758
    %v2764 = vmul.f32 1.0, %v2763
    %v2765 = vtanh.pop %v2707
    %v2766 = vmul.f32 %v2749, %v2518
    %v2767 = vmul.f32 %v2734, %v2765
    %v2768 = vadd.f32 %v2766, %v2767
    %v2769 = vtanh.pop %v2768
    %v2770 = vmul.f32 %v2764, %v2769
    %v2771 = vpack.c.bf16 %v2640, %v2640
    %2772 = vmatpush.bf16.msra.mxu0 %v986
    %2773 = vmatpush.bf16.msra.mxu0 %v982
    %2774 = vmatpush.bf16.msra.mxu0 %v978
    %2775 = vmatpush.bf16.msra.mxu0 %v974
    %2776 = vmatpush.bf16.msra.mxu0 %v970
    %2777 = vmatpush.bf16.msra.mxu0 %v966
    %2778 = vmatpush.bf16.msra.mxu0 %v962
    %2779 = vmatpush.bf16.msra.mxu0 %v958
    %2780 = vmatmul.bf16.gmra.mxu0 %v2771
    %v2781 = vpop.f32.mrf.mxu0
    %v2782 = vadd.f32 0.0, %v2781
    %v2783 = vpop.f32.mrf.mxu0
    %2784 = vdwg.mxu0
    %2785 = vmatpush.bf16.msra.mxu0 %v987
    %2786 = vmatpush.bf16.msra.mxu0 %v983
    %2787 = vmatpush.bf16.msra.mxu0 %v979
    %2788 = vmatpush.bf16.msra.mxu0 %v975
    %2789 = vmatpush.bf16.msra.mxu0 %v971
    %2790 = vmatpush.bf16.msra.mxu0 %v967
    %2791 = vmatpush.bf16.msra.mxu0 %v963
    %2792 = vmatpush.bf16.msra.mxu0 %v959
    %2793 = vmatmul.bf16.gmra.mxu0 %v2771
    %v2794 = vpop.f32.mrf.mxu0
    %v2795 = vadd.f32 0.0, %v2794
    %v2796 = vpop.f32.mrf.mxu0
    %2797 = vdwg.mxu0
    %2798 = vmatpush.bf16.msra.mxu0 %v988
    %2799 = vmatpush.bf16.msra.mxu0 %v984
    %2800 = vmatpush.bf16.msra.mxu0 %v980
    %2801 = vmatpush.bf16.msra.mxu0 %v976
    %2802 = vmatpush.bf16.msra.mxu0 %v972
    %2803 = vmatpush.bf16.msra.mxu0 %v968
    %2804 = vmatpush.bf16.msra.mxu0 %v964
    %2805 = vmatpush.bf16.msra.mxu0 %v960
    %2806 = vmatmul.bf16.gmra.mxu0 %v2771
    %v2807 = vpop.f32.mrf.mxu0
    %v2808 = vadd.f32 0.0, %v2807
    %v2809 = vpop.f32.mrf.mxu0
    %2810 = vdwg.mxu0
    %2811 = vmatpush.bf16.msra.mxu0 %v989
    %2812 = vmatpush.bf16.msra.mxu0 %v985
    %2813 = vmatpush.bf16.msra.mxu0 %v981
    %2814 = vmatpush.bf16.msra.mxu0 %v977
    %2815 = vmatpush.bf16.msra.mxu0 %v973
    %2816 = vmatpush.bf16.msra.mxu0 %v969
    %2817 = vmatpush.bf16.msra.mxu0 %v965
    %2818 = vmatpush.bf16.msra.mxu0 %v961
    %2819 = vmatmul.bf16.gmra.mxu0 %v2771
    %v2820 = vpop.f32.mrf.mxu0
    %v2821 = vadd.f32 0.0, %v2820
    %v2822 = vpop.f32.mrf.mxu0
    %2823 = vdwg.mxu0
    %v2824 = vadd.f32 %v2647, %v2782
    %v2825 = vadd.f32 %v2648, %v2795
    %v2826 = vadd.f32 %v2649, %v2808
    %v2827 = vadd.f32 %v2650, %v2821
    %v2828 = vxor.u32 %v2824, 2147483648
    %v2829 = vxor.u32 %v2825, 2147483648
    %v2830 = vxor.u32 %v2826, 2147483648
    %v2831 = vmul.f32 %v2828, 1.442695
    %v2832 = vpow.pop %v2831
    %v2833 = vmul.f32 %v2829, 1.442695
    %v2834 = vpow.pop %v2833
    %v2835 = vmul.f32 %v2830, 1.442695
    %v2836 = vpow.pop %v2835
    %v2837 = vadd.f32 %v2832, 1.0
    %v2838 = vadd.f32 %v2834, 1.0
    %v2839 = vadd.f32 %v2836, 1.0
    %v2840 = vrcp.pop %v2837
    %v2841 = vmul.f32 %v2837, %v2840
    %v2842 = vsub.f32 1.0, %v2841
    %v2843 = vmul.f32 %v2840, %v2842
    %v2844 = vadd.f32 %v2840, %v2843
    %vm2845 = vweird.f32 %v2837
    %vm2846 = vweird.f32 %v2840
    %vm2847 = vmor %vm2845, %vm2846
    %v2848 = vsel %vm2847, %v2840, %v2844
    %v2849 = vand.u32 2147483647, %v2837
    %vm2850 = vcmp.eq.f32.partialorder %v2849, 8.507059e+37
    %v2851 = vand.u32 %v2837, 2147483648
    %v2852 = vor.u32 1.1754944e-38, %v2851
    %v2853 = vsel %vm2850, %v2852, %v2848
    %v2854 = vmul.f32 1.0, %v2853
    %v2855 = vrcp.pop %v2838
    %v2856 = vmul.f32 %v2838, %v2855
    %v2857 = vsub.f32 1.0, %v2856
    %v2858 = vmul.f32 %v2855, %v2857
    %v2859 = vadd.f32 %v2855, %v2858
    %vm2860 = vweird.f32 %v2838
    %vm2861 = vweird.f32 %v2855
    %vm2862 = vmor %vm2860, %vm2861
    %v2863 = vsel %vm2862, %v2855, %v2859
    %v2864 = vand.u32 2147483647, %v2838
    %vm2865 = vcmp.eq.f32.partialorder %v2864, 8.507059e+37
    %v2866 = vand.u32 %v2838, 2147483648
    %v2867 = vor.u32 1.1754944e-38, %v2866
    %v2868 = vsel %vm2865, %v2867, %v2863
    %v2869 = vmul.f32 1.0, %v2868
    %v2870 = vrcp.pop %v2839
    %v2871 = vmul.f32 %v2839, %v2870
    %v2872 = vsub.f32 1.0, %v2871
    %v2873 = vmul.f32 %v2870, %v2872
    %v2874 = vadd.f32 %v2870, %v2873
    %vm2875 = vweird.f32 %v2839
    %vm2876 = vweird.f32 %v2870
    %vm2877 = vmor %vm2875, %vm2876
    %v2878 = vsel %vm2877, %v2870, %v2874
    %v2879 = vand.u32 2147483647, %v2839
    %vm2880 = vcmp.eq.f32.partialorder %v2879, 8.507059e+37
    %v2881 = vand.u32 %v2839, 2147483648
    %v2882 = vor.u32 1.1754944e-38, %v2881
    %v2883 = vsel %vm2880, %v2882, %v2878
    %v2884 = vmul.f32 1.0, %v2883
    %v2885 = vtanh.pop %v2827
    %v2886 = vmul.f32 %v2869, %v2638
    %v2887 = vmul.f32 %v2854, %v2885
    %v2888 = vadd.f32 %v2886, %v2887
    %v2889 = vtanh.pop %v2888
    %v2890 = vmul.f32 %v2884, %v2889
    %v2891 = vadd.f32 %v2641, %v2770
    %v2892 = vadd.f32 %v2642, %v2890
    %v2893 = vmul.f32 %v2891, 0.125
    %v2894 = vmul.f32 %v2892, 0.125
    %v2895 = vld [vmem:[%s5] sm:$0xff]
    %v2896 = vld [vmem:[%s5 + $0x8] sm:$0xff]
    %v2897 = vld [vmem:[%s5 + $0x10] sm:$0xff]
    %v2898 = vld [vmem:[%s5 + $0x18] sm:$0xff]
    %v2899 = vld [vmem:[%s5 + $0x20] sm:$0xff]
    %v2900 = vld [vmem:[%s5 + $0x28] sm:$0xff]
    %v2901 = vld [vmem:[%s5 + $0x30] sm:$0xff]
    %v2902 = vld [vmem:[%s5 + $0x38] sm:$0xff]
    %v2903 = vld [vmem:[%s5 + $0x40] sm:$0xff]
    %v2904 = vld [vmem:[%s5 + $0x48] sm:$0xff]
    %v2905 = vld [vmem:[%s5 + $0x50] sm:$0xff]
    %v2906 = vld [vmem:[%s5 + $0x58] sm:$0xff]
    %v2907 = vld [vmem:[%s5 + $0x60] sm:$0xff]
    %v2908 = vld [vmem:[%s5 + $0x68] sm:$0xff]
    %v2909 = vld [vmem:[%s5 + $0x70] sm:$0xff]
    %v2910 = vld [vmem:[%s5 + $0x78] sm:$0xff]
    %v2911 = vld [vmem:[%s5 + $0x80] sm:$0xff]
    %v2912 = vld [vmem:[%s5 + $0x88] sm:$0xff]
    %v2913 = vld [vmem:[%s5 + $0x90] sm:$0xff]
    %v2914 = vld [vmem:[%s5 + $0x98] sm:$0xff]
    %v2915 = vld [vmem:[%s5 + $0xa0] sm:$0xff]
    %v2916 = vld [vmem:[%s5 + $0xa8] sm:$0xff]
    %v2917 = vld [vmem:[%s5 + $0xb0] sm:$0xff]
    %v2918 = vld [vmem:[%s5 + $0xb8] sm:$0xff]
    %v2919 = vld [vmem:[%s5 + $0xc0] sm:$0xff]
    %v2920 = vld [vmem:[%s5 + $0xc8] sm:$0xff]
    %v2921 = vld [vmem:[%s5 + $0xd0] sm:$0xff]
    %v2922 = vld [vmem:[%s5 + $0xd8] sm:$0xff]
    %v2923 = vld [vmem:[%s5 + $0xe0] sm:$0xff]
    %v2924 = vld [vmem:[%s5 + $0xe8] sm:$0xff]
    %v2925 = vld [vmem:[%s5 + $0xf0] sm:$0xff]
    %v2926 = vld [vmem:[%s5 + $0xf8] sm:$0xff]
    %2927 = vmatpush.msra.mxu0 %v2926
    %2928 = vmatpush.msra.mxu0 %v2925
    %2929 = vmatpush.msra.mxu0 %v2924
    %2930 = vmatpush.msra.mxu0 %v2923
    %2931 = vmatpush.msra.mxu0 %v2922
    %2932 = vmatpush.msra.mxu0 %v2921
    %2933 = vmatpush.msra.mxu0 %v2920
    %2934 = vmatpush.msra.mxu0 %v2919
    %2935 = vmatpush.msra.mxu0 %v2918
    %2936 = vmatpush.msra.mxu0 %v2917
    %2937 = vmatpush.msra.mxu0 %v2916
    %2938 = vmatpush.msra.mxu0 %v2915
    %2939 = vmatpush.msra.mxu0 %v2914
    %2940 = vmatpush.msra.mxu0 %v2913
    %2941 = vmatpush.msra.mxu0 %v2912
    %2942 = vmatpush.msra.mxu0 %v2911
    %2943 = vmatmul.f32.gmra.mxu0 %v2894
    %v2944 = vpop.f32.mrf.mxu0
    %v2945 = vadd.f32 0.0, %v2944
    %2946 = vdwg.mxu0
    %2947 = vmatpush.msra.mxu0 %v2910
    %2948 = vmatpush.msra.mxu0 %v2909
    %2949 = vmatpush.msra.mxu0 %v2908
    %2950 = vmatpush.msra.mxu0 %v2907
    %2951 = vmatpush.msra.mxu0 %v2906
    %2952 = vmatpush.msra.mxu0 %v2905
    %2953 = vmatpush.msra.mxu0 %v2904
    %2954 = vmatpush.msra.mxu0 %v2903
    %2955 = vmatpush.msra.mxu0 %v2902
    %2956 = vmatpush.msra.mxu0 %v2901
    %2957 = vmatpush.msra.mxu0 %v2900
    %2958 = vmatpush.msra.mxu0 %v2899
    %2959 = vmatpush.msra.mxu0 %v2898
    %2960 = vmatpush.msra.mxu0 %v2897
    %2961 = vmatpush.msra.mxu0 %v2896
    %2962 = vmatpush.msra.mxu0 %v2895
    %2963 = vmatmul.f32.gmra.mxu0 %v2893
    %v2964 = vpop.f32.mrf.mxu0
    %v2965 = vadd.f32 %v2945, %v2964
    %2966 = vdwg.mxu0
    %v2967 = vld [vmem:[%s6] sm:$0x1]
    %v2969 = vperm.slane %v2967, 0
    %v2971 = vadd.f32 %v2965, %v2969
    %vm2972 = vcmask 80896
    %2973 = vst.msk [vmem:[#allocation8] sm:$0xff] %vm2972, %v2971
    // Predicated region
    $region38: #{tpu_custom_call.1} parent=1 // pred_check
      _
    $region39: #{tpu_custom_call.1} parent=1 // pred_check_branch
      %2975 = sbr.rel (0) target = $region41
    $region40: #{tpu_custom_call.1} parent=1 // pred_region
      %2977 = vsyncadd [#allocation5], 0
      %s2979 = sshll.u32 [#allocation8], 4
      %s2980 = int_to_ptr.vmem [resolvable:$true] %s2979
      %s2981 = sshll.u32 %s7, 4
      %s2982 = int_to_ptr.hbm [resolvable:$true] %s2981
      %2984 = dma.vmem_to_hbm [thread:$0]  %s2980, 128, %s2982, [#allocation5]
    $region41: #{tpu_custom_call.1} parent=1 // pred_fallthru
      _
    // Predicated region
    $region42: #{tpu_custom_call.1} parent=1 // pred_check
      _
    $region43: #{tpu_custom_call.1} parent=1 // pred_check_branch
      %2986 = sbr.rel (0) target = $region45
    $region44: #{tpu_custom_call.1} parent=1 // pred_region
      %2988 = dma.done [#allocation5], 128
    $region45: #{tpu_custom_call.1} parent=1 // pred_fallthru
      _
    %2989 = vsyncpa [#allocation4], 1
    %2990 = vsyncpa [#allocation7], 1
    %2991 = vsyncpa [#allocation5], 1

</llo_original>
